<compile_context>
chip_gen: v7x
topology: tpu7x:2x2x1
jax: 0.10.0
libtpu: 0.0.40
codegen_flags: <defaults>
</compile_context>

<pallas_src>
import functools
import math

import jax
import jax.numpy as jnp
import numpy as np
from jax import lax
from jax.experimental import pallas as pl
from jax.experimental.pallas import tpu as pltpu


# ---------------------------------------------------------------------------
# Fully fused TCN kernel: for each level -> attention + en_res + conv stack +
# residual ReLU, all on a VMEM-resident (batch_tile*T, C) channels-last slab.
# Grid is over batch tiles only.
# ---------------------------------------------------------------------------
def _tcn_kernel(x_ref, wq_ref, bq_ref, wk_ref, bk_ref, wv_ref, bv_ref,
                cw_ref, cb_ref, y_ref, attn_scr, res_scr, *,
                ksize, n_levels, n_sub, seq_len, n_ch, batch_tile):
    t = seq_len
    c = n_ch
    mt = batch_tile * t
    neg_big = -1e30  # finite "-inf": exp(neg_big - m) underflows cleanly in f32

    # Hoisted constants (built once per grid step, reused across levels/samples).
    ri = lax.broadcasted_iota(jnp.int32, (t, t), 0)      # key index i   (rows)
    rj = lax.broadcasted_iota(jnp.int32, (t, t), 1)      # query index j (cols)
    causal_mask = ri > rj
    rows = lax.broadcasted_iota(jnp.int32, (mt, 1), 0)
    t_in_sample = rows % t                               # within-sample time idx
    ones_col = jnp.ones((t, 1), jnp.float32)

    x_slab = x_ref[...]                                  # (MT, C) f32, channels-last

    for lev in range(n_levels):                          # static level loop (fused)
        dilation = 2 ** lev
        xb = x_slab.astype(jnp.bfloat16)

        # Batched q/k/v projections across all batch_tile*T rows (fills MXU
        # sublanes; one bias broadcast per level instead of per sample).
        # 1/sqrt(key_size) is folded into wq/bq in the wrapper.
        q = jnp.dot(xb, wq_ref[lev], preferred_element_type=jnp.float32) + bq_ref[lev]
        k = jnp.dot(xb, wk_ref[lev], preferred_element_type=jnp.float32) + bk_ref[lev]
        v = jnp.dot(xb, wv_ref[lev], preferred_element_type=jnp.float32) + bv_ref[lev]
        qb = q.astype(jnp.bfloat16)
        kb = k.astype(jnp.bfloat16)
        vb = v.astype(jnp.bfloat16)

        # Only the per-sample (T, T) score/softmax lives in the per-b loop.
        for b in range(batch_tile):                      # static, small
            r0 = b * t
            q_b = qb[r0:r0 + t, :]
            k_b = kb[r0:r0 + t, :]
            v_b = vb[r0:r0 + t, :]
            x_b = x_slab[r0:r0 + t, :]

            # st[i, j] = <k_i, q_j>/sqrt(key_size) == torch temp[j, i]/sqrt.
            st = lax.dot_general(k_b, q_b, (((1,), (1,)), ((), ())),
                                 preferred_element_type=jnp.float32)
            st = jnp.where(causal_mask, neg_big, st)

            # F.softmax(temp/sqrt, dim=1): normalize over queries j == the lane
            # (last) axis of the transposed score tile.
            m = jnp.max(st, axis=-1, keepdims=True)
            e = jnp.exp(st - m)
            w_t = e * pl.reciprocal(jnp.sum(e, axis=-1, keepdims=True), approx=True)

            # out_attn[j, c] = sum_i w_t[i, j] v[i, c]: transposed-lhs contraction
            # on the MXU -- no (T, T) XLU transpose is materialized.
            out_attn = lax.dot_general(w_t.astype(jnp.bfloat16), v_b,
                                       (((0,), (0,)), ((), ())),
                                       preferred_element_type=jnp.float32)

            # srow[j] = sum_i weight_temp[j, i], produced directly as a (T, 1)
            # column by a tiny exact f32 matvec (avoids a (1,T)->(T,1) relayout).
            srow = lax.dot_general(w_t, ones_col, (((0,), (0,)), ((), ())),
                                   preferred_element_type=jnp.float32)
            ms = jnp.max(srow, axis=0, keepdims=True)
            es = jnp.exp(srow - ms)
            weight_x = es / jnp.sum(es, axis=0, keepdims=True)  # exact recip (tiny)

            attn_scr[pl.ds(r0, t), :] = out_attn
            res_scr[pl.ds(r0, t), :] = x_b + weight_x * x_b     # res + en_res_x

        # Causal dilated conv stack (Conv1d + Chomp1d + ReLU, dropout=identity),
        # batched over all batch_tile*T rows.  Tap m reads h[t - m*dilation]: a
        # sublane roll + row mask replaces the pad buffer / im2col scratch (no
        # lane-offset partial stores).  Rows with t_in_sample < m*dilation are
        # exactly the causal zero-pad and also absorb any cross-sample wrap of
        # the roll.  Wrapper flips the K axis so tap m picks the right weight.
        h = attn_scr[...]                                 # (MT, C) f32
        for sblk in range(n_sub):                         # static
            base = (lev * n_sub + sblk) * ksize
            acc = jnp.dot(h.astype(jnp.bfloat16), cw_ref[base],
                          preferred_element_type=jnp.float32) \
                  + cb_ref[lev * n_sub + sblk]
            for kk in range(1, ksize):                    # static taps
                lo = kk * dilation
                if lo >= t:
                    continue                              # tap reads only zero pad
                sh = jnp.where(t_in_sample >= lo, pltpu.roll(h, lo, axis=0), 0.0)
                acc = acc + jnp.dot(sh.astype(jnp.bfloat16), cw_ref[base + kk],
                                    preferred_element_type=jnp.float32)
            h = jnp.maximum(acc, 0.0)

        # relu(out + res + en_res_x); the next level's input never leaves VMEM.
        x_slab = jnp.maximum(h + res_scr[...], 0.0)

    y_ref[...] = x_slab


# ---------------------------------------------------------------------------
# Wrapper
# ---------------------------------------------------------------------------
def _vmem_limit_bytes():
    # v5e/v6e have 128 MiB VMEM per TensorCore, v7x only 64 MiB: never claim the
    # full physical capacity -- leave room for double-buffered blocks + temps.
    try:
        cap = pltpu.get_tpu_info().vmem_capacity_bytes
    except Exception:  # older jax / query unavailable: safe conservative default
        cap = 128 * 1024 * 1024
    return int(min(64 * 1024 * 1024, (cap * 3) // 4))


def _pick_batch_tile(batch, seq_len, target_rows=256):
    """Largest divisor of `batch` with batch_tile*T <= target_rows (fill MXU
    rows, 256 targets v7x's 256x256 MXU) while keeping the grid length >= 2 so
    the "parallel" batch axis can still split across v7x's two TensorCores."""
    best = 1
    for cand in range(1, batch + 1):
        if batch % cand:
            continue
        if cand != 1 and batch // cand < 2:
            continue
        if cand * seq_len <= max(target_rows, seq_len):
            best = cand
    return best


def temporal_conv_net_fused(x, params, *, kernel_size, num_sub_blocks, key_size,
                            batch_tile=None):
    """All TCN levels fused into a single pallas_call."""
    bsz, t, c = x.shape
    n_levels = len(params)
    for p in params:
        assert p["wv"].shape == (c, c), "all levels must share the channel count"
    if batch_tile is None:
        batch_tile = _pick_batch_tile(bsz, t)
    assert bsz % batch_tile == 0
    mt = batch_tile * t
    inv_sqrt = 1.0 / math.sqrt(key_size)

    # Fold 1/sqrt(key_size) into the query projection; cast MXU operands to bf16
    # once here (biases stay f32 -- added to the f32 accumulators).
    wq = (jnp.stack([p["wq"] for p in params]) * inv_sqrt).astype(jnp.bfloat16)
    bq = jnp.stack([p["bq"] for p in params]) * inv_sqrt
    wk = jnp.stack([p["wk"] for p in params]).astype(jnp.bfloat16)
    bk = jnp.stack([p["bk"] for p in params])
    wv = jnp.stack([p["wv"] for p in params]).astype(jnp.bfloat16)
    bv = jnp.stack([p["bv"] for p in params])
    # Kernel tap m multiplies h[t - m*dilation]; the matching PyTorch/ref kernel
    # index is K-1-m, so flip the K axis here.  Flattened to 3-D for simple
    # static leading-index loads in the kernel.
    cw = jnp.stack([w[::-1] for p in params for w in p["conv_w"]])
    cw = cw.reshape(n_levels * num_sub_blocks * kernel_size, c, c).astype(jnp.bfloat16)
    cb = jnp.stack([bb for p in params for bb in p["conv_b"]])    # (L*S, 1, C)

    kernel = functools.partial(
        _tcn_kernel, ksize=kernel_size, n_levels=n_levels, n_sub=num_sub_blocks,
        seq_len=t, n_ch=c, batch_tile=batch_tile)

    def full_spec(arr):
        nd = arr.ndim
        return pl.BlockSpec(arr.shape, lambda i, _nd=nd: (0,) * _nd)

    x2 = x.reshape(bsz * t, c)          # free wrapper-side flatten (row = (b, t))

    y2 = pl.pallas_call(
        kernel,
        out_shape=jax.ShapeDtypeStruct((bsz * t, c), jnp.float32),
        grid=(bsz // batch_tile,),
        in_specs=[
            pl.BlockSpec((mt, c), lambda i: (i, 0)),
            full_spec(wq), full_spec(bq),
            full_spec(wk), full_spec(bk),
            full_spec(wv), full_spec(bv),
            full_spec(cw), full_spec(cb),
        ],
        out_specs=pl.BlockSpec((mt, c), lambda i: (i, 0)),
        scratch_shapes=[
            pltpu.VMEM((mt, c), jnp.float32),     # out_attn slab (conv input)
            pltpu.VMEM((mt, c), jnp.float32),     # res + en_res slab
        ],
        compiler_params=pltpu.CompilerParams(
            dimension_semantics=("parallel",),
            vmem_limit_bytes=_vmem_limit_bytes()),
    )(x2, wq, bq, wk, bk, wv, bv, cw, cb)

    return y2.reshape(bsz, t, c)


def temporal_conv_net_forward(x, params, kernel_size, num_sub_blocks, key_size,
                              batch_tile=None):
    out = temporal_conv_net_fused(
        x, params, kernel_size=kernel_size, num_sub_blocks=num_sub_blocks,
        key_size=key_size, batch_tile=batch_tile)
    # visual=False path of the PyTorch module: attn_weight_cpu = [0]*10 per block,
    # and TemporalConvNet keeps [first, last] per level.
    attn_weight_list = [[0, 0] for _ in params]
    return out, attn_weight_list


# ---------------------------------------------------------------------------
# Parameters (weight_norm folded into effective conv weights; synthetic init)
# ---------------------------------------------------------------------------
def init_params(key, emb_size, num_channels, key_size, kernel_size, num_sub_blocks):
    params = []
    in_c = emb_size
    for out_c in num_channels:
        assert in_c == out_c, "keep downsample=None (well-defined PyTorch path)"
        key, *ks = jax.random.split(key, 8)
        blk = {
            "wq": 0.1 * jax.random.normal(ks[0], (in_c, key_size), jnp.float32),
            "bq": 0.1 * jax.random.normal(ks[1], (1, key_size), jnp.float32),
            "wk": 0.1 * jax.random.normal(ks[2], (in_c, key_size), jnp.float32),
            "bk": 0.1 * jax.random.normal(ks[3], (1, key_size), jnp.float32),
            "wv": 0.1 * jax.random.normal(ks[4], (in_c, in_c), jnp.float32),
            "bv": 0.1 * jax.random.normal(ks[5], (1, in_c), jnp.float32),
            "conv_w": [], "conv_b": [],
        }
        c_in = in_c
        for _ in range(num_sub_blocks):
            key, kw, kb = jax.random.split(key, 3)
            # effective (weight-norm folded) conv weight, layout (K, C_in, C_out)
            blk["conv_w"].append(
                0.01 * jax.random.normal(kw, (kernel_size, c_in, out_c), jnp.float32))
            blk["conv_b"].append(
                0.01 * jax.random.normal(kb, (1, out_c), jnp.float32))
            c_in = out_c
        params.append(blk)
        in_c = out_c
    return params


# ---------------------------------------------------------------------------
# Pure-JAX f32 reference (same math as the PyTorch module) for a sanity check
# ---------------------------------------------------------------------------
def ref_forward(x, params, kernel_size, num_sub_blocks, key_size):
    out = x
    for level, blk in enumerate(params):
        d = 2 ** level
        b, t, c = out.shape
        q = out @ blk["wq"] + blk["bq"]
        k = out @ blk["wk"] + blk["bk"]
        v = out @ blk["wv"] + blk["bv"]
        scores = jnp.einsum("bjc,bic->bji", q, k)
        mask = jnp.triu(jnp.ones((t, t), bool), k=1)
        scores = jnp.where(mask[None], -jnp.inf, scores)
        w = jax.nn.softmax(scores / math.sqrt(key_size), axis=1)
        out_attn = jnp.einsum("bji,bic->bjc", w, v)
        weight_x = jax.nn.softmax(jnp.sum(w, axis=2), axis=1)
        en_res_x = weight_x[:, :, None] * out
        h = out_attn
        pad = (kernel_size - 1) * d
        for s in range(num_sub_blocks):
            hp = jnp.pad(h, ((0, 0), (pad, 0), (0, 0)))
            acc = blk["conv_b"][s]
            for kk in range(kernel_size):
                acc = acc + hp[:, kk * d:kk * d + t, :] @ blk["conv_w"][s][kk]
            h = jnp.maximum(acc, 0.0)
        out = jnp.maximum(h + out + en_res_x, 0.0)
    return out


if __name__ == "__main__":
    B, T, EMB = 4, 16, 8
    NUM_CHANNELS = [8, 8]          # emb == channels -> downsample is None
    KEY_SIZE = 4
    KERNEL_SIZE = 3
    NUM_SUB_BLOCKS = 2

    root = jax.random.PRNGKey(0)
    kx, kp = jax.random.split(root)
    x = jax.random.normal(kx, (B, T, EMB), jnp.float32)
    params = init_params(kp, EMB, NUM_CHANNELS, KEY_SIZE, KERNEL_SIZE, NUM_SUB_BLOCKS)

    # batch_tile=2 -> 32 rows per batched matmul and a grid of length 2 (so the
    # parallel batch axis can still split across v7x's two TensorCores).
    out, attn_weight_list = temporal_conv_net_forward(
        x, params, KERNEL_SIZE, NUM_SUB_BLOCKS, KEY_SIZE, batch_tile=2)
    out = jax.block_until_ready(out)

    ref = jax.block_until_ready(
        ref_forward(x, params, KERNEL_SIZE, NUM_SUB_BLOCKS, KEY_SIZE))
    # Tolerance covers bf16 MXU inputs + the approx (EUP) reciprocal in the main
    # softmax vs the f32 reference.
    np.testing.assert_allclose(np.asarray(out), np.asarray(ref),
                               rtol=3e-2, atol=3e-2)
    assert out.shape == (B, T, NUM_CHANNELS[-1])
    assert attn_weight_list == [[0, 0]] * len(NUM_CHANNELS)
    print("KERNEL_OK")
</pallas_src>

<mosaic_0001>
module attributes {stable_mosaic.version = 11 : i64} {
  func.func @_tcn_kernel(%arg0: i32, %arg1: memref<32x8xf32, #tpu.memory_space<vmem>>, %arg2: memref<2x8x4xbf16, #tpu.memory_space<vmem>>, %arg3: memref<2x1x4xf32, #tpu.memory_space<vmem>>, %arg4: memref<2x8x4xbf16, #tpu.memory_space<vmem>>, %arg5: memref<2x1x4xf32, #tpu.memory_space<vmem>>, %arg6: memref<2x8x8xbf16, #tpu.memory_space<vmem>>, %arg7: memref<2x1x8xf32, #tpu.memory_space<vmem>>, %arg8: memref<12x8x8xbf16, #tpu.memory_space<vmem>>, %arg9: memref<4x1x8xf32, #tpu.memory_space<vmem>>, %arg10: memref<32x8xf32, #tpu.memory_space<vmem>>, %arg11: memref<32x8xf32, #tpu.memory_space<vmem>>, %arg12: memref<32x8xf32, #tpu.memory_space<vmem>>) attributes {dimension_semantics = [#tpu.dimension_semantics<parallel>], iteration_bounds = array<i64: 2>, scalar_prefetch = 0 : i64, scratch_operands = 2 : i64, tpu.core_type = #tpu.core_type<tc>, window_params = [{transform_indices = @transform_0, window_bounds = array<i64: 32, 8>}, {pipeline_mode = #tpu.pipeline_mode<synchronous>, transform_indices = @transform_1, window_bounds = array<i64: 2, 8, 4>}, {pipeline_mode = #tpu.pipeline_mode<synchronous>, transform_indices = @transform_2, window_bounds = array<i64: 2, 1, 4>}, {pipeline_mode = #tpu.pipeline_mode<synchronous>, transform_indices = @transform_3, window_bounds = array<i64: 2, 8, 4>}, {pipeline_mode = #tpu.pipeline_mode<synchronous>, transform_indices = @transform_4, window_bounds = array<i64: 2, 1, 4>}, {pipeline_mode = #tpu.pipeline_mode<synchronous>, transform_indices = @transform_5, window_bounds = array<i64: 2, 8, 8>}, {pipeline_mode = #tpu.pipeline_mode<synchronous>, transform_indices = @transform_6, window_bounds = array<i64: 2, 1, 8>}, {pipeline_mode = #tpu.pipeline_mode<synchronous>, transform_indices = @transform_7, window_bounds = array<i64: 12, 8, 8>}, {pipeline_mode = #tpu.pipeline_mode<synchronous>, transform_indices = @transform_8, window_bounds = array<i64: 4, 1, 8>}, {transform_indices = @transform_9, window_bounds = array<i64: 32, 8>}]} {
    %0 = tpu.iota {dimensions = array<i32: 0>} : vector<16x16xi32>
    %1 = tpu.iota {dimensions = array<i32: 1>} : vector<16x16xi32>
    %2 = arith.cmpi sgt, %0, %1 : vector<16x16xi32>
    %3 = tpu.iota {dimensions = array<i32: 0>} : vector<32x1xi32>
    %c16_i32 = arith.constant 16 : i32
    %c0_i32 = arith.constant 0 : i32
    %4 = arith.cmpi eq, %c16_i32, %c0_i32 : i32
    %c1_i32 = arith.constant 1 : i32
    %5 = arith.select %4, %c1_i32, %c16_i32 : i32
    %6 = vector.broadcast %5 : i32 to vector<32x1xi32>
    %7 = arith.remsi %3, %6 : vector<32x1xi32>
    %c0_i32_0 = arith.constant 0 : i32
    %8 = vector.broadcast %c0_i32_0 : i32 to vector<32x1xi32>
    %9 = arith.cmpi ne, %7, %8 : vector<32x1xi32>
    %c0_i32_1 = arith.constant 0 : i32
    %10 = vector.broadcast %c0_i32_1 : i32 to vector<32x1xi32>
    %11 = arith.cmpi slt, %7, %10 : vector<32x1xi32>
    %c0_i32_2 = arith.constant 0 : i32
    %12 = arith.cmpi slt, %5, %c0_i32_2 : i32
    %13 = vector.broadcast %12 : i1 to vector<32x1xi1>
    %14 = vector.broadcast %13 : vector<32x1xi1> to vector<32x1xi1>
    %15 = arith.xori %11, %14 : vector<32x1xi1>
    %16 = arith.andi %15, %9 : vector<32x1xi1>
    %17 = vector.broadcast %5 : i32 to vector<32x1xi32>
    %18 = arith.addi %7, %17 : vector<32x1xi32>
    %19 = arith.select %16, %18, %7 : vector<32x1xi1>, vector<32x1xi32>
    %cst = arith.constant 1.000000e+00 : f32
    %20 = vector.broadcast %cst : f32 to vector<16x1xf32>
    %c0 = arith.constant 0 : index
    %c0_3 = arith.constant 0 : index
    %21 = vector.load %arg1[%c0, %c0_3] : memref<32x8xf32, #tpu.memory_space<vmem>>, vector<32x8xf32>
    %22 = arith.truncf %21 : vector<32x8xf32> to vector<32x8xbf16>
    %c0_4 = arith.constant 0 : index
    %c0_5 = arith.constant 0 : index
    %c0_6 = arith.constant 0 : index
    %23 = vector.load %arg2[%c0_4, %c0_5, %c0_6] : memref<2x8x4xbf16, #tpu.memory_space<vmem>>, vector<1x8x4xbf16>
    %24 = vector.shape_cast %23 : vector<1x8x4xbf16> to vector<8x4xbf16>
    %cst_7 = arith.constant dense<0.000000e+00> : vector<32x4xf32>
    %25 = tpu.matmul %22, %24, %cst_7 {dimension_numbers = #tpu.dot_dimension_numbers<[1], [0], [0], [1], [0, 0, 1, 1], [], []>} : vector<32x8xbf16>, vector<8x4xbf16>, vector<32x4xf32> -> vector<32x4xf32>
    %c0_8 = arith.constant 0 : index
    %c0_9 = arith.constant 0 : index
    %c0_10 = arith.constant 0 : index
    %26 = vector.load %arg3[%c0_8, %c0_9, %c0_10] : memref<2x1x4xf32, #tpu.memory_space<vmem>>, vector<1x1x4xf32>
    %27 = vector.shape_cast %26 : vector<1x1x4xf32> to vector<1x4xf32>
    %28 = vector.broadcast %27 : vector<1x4xf32> to vector<32x4xf32>
    %29 = arith.addf %25, %28 : vector<32x4xf32>
    %c0_11 = arith.constant 0 : index
    %c0_12 = arith.constant 0 : index
    %c0_13 = arith.constant 0 : index
    %30 = vector.load %arg4[%c0_11, %c0_12, %c0_13] : memref<2x8x4xbf16, #tpu.memory_space<vmem>>, vector<1x8x4xbf16>
    %31 = vector.shape_cast %30 : vector<1x8x4xbf16> to vector<8x4xbf16>
    %cst_14 = arith.constant dense<0.000000e+00> : vector<32x4xf32>
    %32 = tpu.matmul %22, %31, %cst_14 {dimension_numbers = #tpu.dot_dimension_numbers<[1], [0], [0], [1], [0, 0, 1, 1], [], []>} : vector<32x8xbf16>, vector<8x4xbf16>, vector<32x4xf32> -> vector<32x4xf32>
    %c0_15 = arith.constant 0 : index
    %c0_16 = arith.constant 0 : index
    %c0_17 = arith.constant 0 : index
    %33 = vector.load %arg5[%c0_15, %c0_16, %c0_17] : memref<2x1x4xf32, #tpu.memory_space<vmem>>, vector<1x1x4xf32>
    %34 = vector.shape_cast %33 : vector<1x1x4xf32> to vector<1x4xf32>
    %35 = vector.broadcast %34 : vector<1x4xf32> to vector<32x4xf32>
    %36 = arith.addf %32, %35 : vector<32x4xf32>
    %c0_18 = arith.constant 0 : index
    %c0_19 = arith.constant 0 : index
    %c0_20 = arith.constant 0 : index
    %37 = vector.load %arg6[%c0_18, %c0_19, %c0_20] : memref<2x8x8xbf16, #tpu.memory_space<vmem>>, vector<1x8x8xbf16>
    %38 = vector.shape_cast %37 : vector<1x8x8xbf16> to vector<8x8xbf16>
    %cst_21 = arith.constant dense<0.000000e+00> : vector<32x8xf32>
    %39 = tpu.matmul %22, %38, %cst_21 {dimension_numbers = #tpu.dot_dimension_numbers<[1], [0], [0], [1], [0, 0, 1, 1], [], []>} : vector<32x8xbf16>, vector<8x8xbf16>, vector<32x8xf32> -> vector<32x8xf32>
    %c0_22 = arith.constant 0 : index
    %c0_23 = arith.constant 0 : index
    %c0_24 = arith.constant 0 : index
    %40 = vector.load %arg7[%c0_22, %c0_23, %c0_24] : memref<2x1x8xf32, #tpu.memory_space<vmem>>, vector<1x1x8xf32>
    %41 = vector.shape_cast %40 : vector<1x1x8xf32> to vector<1x8xf32>
    %42 = vector.broadcast %41 : vector<1x8xf32> to vector<32x8xf32>
    %43 = arith.addf %39, %42 : vector<32x8xf32>
    %44 = arith.truncf %29 : vector<32x4xf32> to vector<32x4xbf16>
    %45 = arith.truncf %36 : vector<32x4xf32> to vector<32x4xbf16>
    %46 = arith.truncf %43 : vector<32x8xf32> to vector<32x8xbf16>
    %47 = vector.extract_strided_slice %44 {offsets = [0, 0], sizes = [16, 4], strides = [1, 1]} : vector<32x4xbf16> to vector<16x4xbf16>
    %48 = vector.extract_strided_slice %45 {offsets = [0, 0], sizes = [16, 4], strides = [1, 1]} : vector<32x4xbf16> to vector<16x4xbf16>
    %49 = vector.extract_strided_slice %46 {offsets = [0, 0], sizes = [16, 8], strides = [1, 1]} : vector<32x8xbf16> to vector<16x8xbf16>
    %50 = vector.extract_strided_slice %21 {offsets = [0, 0], sizes = [16, 8], strides = [1, 1]} : vector<32x8xf32> to vector<16x8xf32>
    %cst_25 = arith.constant dense<0.000000e+00> : vector<16x16xf32>
    %51 = tpu.matmul %48, %47, %cst_25 {dimension_numbers = #tpu.dot_dimension_numbers<[1], [1], [0], [0], [0, 0, 1, 0], [], []>} : vector<16x4xbf16>, vector<16x4xbf16>, vector<16x16xf32> -> vector<16x16xf32>
    %cst_26 = arith.constant -1.000000e+30 : f32
    %52 = vector.broadcast %cst_26 : f32 to vector<16x16xf32>
    %53 = arith.select %2, %52, %51 : vector<16x16xi1>, vector<16x16xf32>
    %cst_27 = arith.constant dense<0xFF800000> : vector<16xf32>
    %54 = vector.multi_reduction <maximumf>, %53, %cst_27 [1] : vector<16x16xf32> to vector<16xf32>
    %55 = vector.shape_cast %54 : vector<16xf32> to vector<16x1xf32>
    %56 = vector.broadcast %55 : vector<16x1xf32> to vector<16x16xf32>
    %57 = arith.subf %53, %56 : vector<16x16xf32>
    %58 = math.exp %57 : vector<16x16xf32>
    %cst_28 = arith.constant dense<0.000000e+00> : vector<16xf32>
    %59 = vector.multi_reduction <add>, %58, %cst_28 [1] : vector<16x16xf32> to vector<16xf32>
    %60 = vector.shape_cast %59 : vector<16xf32> to vector<16x1xf32>
    %61 = tpu.reciprocal %60 {approx = true} : vector<16x1xf32> -> vector<16x1xf32>
    %62 = vector.broadcast %61 : vector<16x1xf32> to vector<16x16xf32>
    %63 = arith.mulf %58, %62 : vector<16x16xf32>
    %64 = arith.truncf %63 : vector<16x16xf32> to vector<16x16xbf16>
    %cst_29 = arith.constant dense<0.000000e+00> : vector<16x8xf32>
    %65 = tpu.matmul %64, %49, %cst_29 {dimension_numbers = #tpu.dot_dimension_numbers<[0], [0], [1], [1], [0, 1, 1, 1], [], []>} : vector<16x16xbf16>, vector<16x8xbf16>, vector<16x8xf32> -> vector<16x8xf32>
    %cst_30 = arith.constant dense<0.000000e+00> : vector<16x1xf32>
    %66 = tpu.matmul %63, %20, %cst_30 {dimension_numbers = #tpu.dot_dimension_numbers<[0], [0], [1], [1], [0, 1, 1, 1], [], []>} : vector<16x16xf32>, vector<16x1xf32>, vector<16x1xf32> -> vector<16x1xf32>
    %cst_31 = arith.constant dense<0xFF800000> : vector<1xf32>
    %67 = vector.multi_reduction <maximumf>, %66, %cst_31 [0] : vector<16x1xf32> to vector<1xf32>
    %68 = vector.shape_cast %67 : vector<1xf32> to vector<1x1xf32>
    %69 = vector.broadcast %68 : vector<1x1xf32> to vector<16x1xf32>
    %70 = arith.subf %66, %69 : vector<16x1xf32>
    %71 = math.exp %70 : vector<16x1xf32>
    %cst_32 = arith.constant dense<0.000000e+00> : vector<1xf32>
    %72 = vector.multi_reduction <add>, %71, %cst_32 [0] : vector<16x1xf32> to vector<1xf32>
    %73 = vector.shape_cast %72 : vector<1xf32> to vector<1x1xf32>
    %74 = vector.broadcast %73 : vector<1x1xf32> to vector<16x1xf32>
    %75 = arith.divf %71, %74 : vector<16x1xf32>
    %c0_33 = arith.constant 0 : index
    %c0_34 = arith.constant 0 : index
    %76 = vector.load %arg11[%c0_33, %c0_34] : memref<32x8xf32, #tpu.memory_space<vmem>>, vector<16x8xf32>
    tpu.vector_store %arg11[%c0_33, %c0_34], %65 {strides = array<i32>} : memref<32x8xf32, #tpu.memory_space<vmem>>, vector<16x8xf32>,
    %77 = vector.broadcast %75 : vector<16x1xf32> to vector<16x8xf32>
    %78 = arith.mulf %77, %50 : vector<16x8xf32>
    %79 = arith.addf %50, %78 : vector<16x8xf32>
    %c0_35 = arith.constant 0 : index
    %c0_36 = arith.constant 0 : index
    %80 = vector.load %arg12[%c0_35, %c0_36] : memref<32x8xf32, #tpu.memory_space<vmem>>, vector<16x8xf32>
    tpu.vector_store %arg12[%c0_35, %c0_36], %79 {strides = array<i32>} : memref<32x8xf32, #tpu.memory_space<vmem>>, vector<16x8xf32>,
    %81 = vector.extract_strided_slice %44 {offsets = [16, 0], sizes = [16, 4], strides = [1, 1]} : vector<32x4xbf16> to vector<16x4xbf16>
    %82 = vector.extract_strided_slice %45 {offsets = [16, 0], sizes = [16, 4], strides = [1, 1]} : vector<32x4xbf16> to vector<16x4xbf16>
    %83 = vector.extract_strided_slice %46 {offsets = [16, 0], sizes = [16, 8], strides = [1, 1]} : vector<32x8xbf16> to vector<16x8xbf16>
    %84 = vector.extract_strided_slice %21 {offsets = [16, 0], sizes = [16, 8], strides = [1, 1]} : vector<32x8xf32> to vector<16x8xf32>
    %cst_37 = arith.constant dense<0.000000e+00> : vector<16x16xf32>
    %85 = tpu.matmul %82, %81, %cst_37 {dimension_numbers = #tpu.dot_dimension_numbers<[1], [1], [0], [0], [0, 0, 1, 0], [], []>} : vector<16x4xbf16>, vector<16x4xbf16>, vector<16x16xf32> -> vector<16x16xf32>
    %cst_38 = arith.constant -1.000000e+30 : f32
    %86 = vector.broadcast %cst_38 : f32 to vector<16x16xf32>
    %87 = arith.select %2, %86, %85 : vector<16x16xi1>, vector<16x16xf32>
    %cst_39 = arith.constant dense<0xFF800000> : vector<16xf32>
    %88 = vector.multi_reduction <maximumf>, %87, %cst_39 [1] : vector<16x16xf32> to vector<16xf32>
    %89 = vector.shape_cast %88 : vector<16xf32> to vector<16x1xf32>
    %90 = vector.broadcast %89 : vector<16x1xf32> to vector<16x16xf32>
    %91 = arith.subf %87, %90 : vector<16x16xf32>
    %92 = math.exp %91 : vector<16x16xf32>
    %cst_40 = arith.constant dense<0.000000e+00> : vector<16xf32>
    %93 = vector.multi_reduction <add>, %92, %cst_40 [1] : vector<16x16xf32> to vector<16xf32>
    %94 = vector.shape_cast %93 : vector<16xf32> to vector<16x1xf32>
    %95 = tpu.reciprocal %94 {approx = true} : vector<16x1xf32> -> vector<16x1xf32>
    %96 = vector.broadcast %95 : vector<16x1xf32> to vector<16x16xf32>
    %97 = arith.mulf %92, %96 : vector<16x16xf32>
    %98 = arith.truncf %97 : vector<16x16xf32> to vector<16x16xbf16>
    %cst_41 = arith.constant dense<0.000000e+00> : vector<16x8xf32>
    %99 = tpu.matmul %98, %83, %cst_41 {dimension_numbers = #tpu.dot_dimension_numbers<[0], [0], [1], [1], [0, 1, 1, 1], [], []>} : vector<16x16xbf16>, vector<16x8xbf16>, vector<16x8xf32> -> vector<16x8xf32>
    %cst_42 = arith.constant dense<0.000000e+00> : vector<16x1xf32>
    %100 = tpu.matmul %97, %20, %cst_42 {dimension_numbers = #tpu.dot_dimension_numbers<[0], [0], [1], [1], [0, 1, 1, 1], [], []>} : vector<16x16xf32>, vector<16x1xf32>, vector<16x1xf32> -> vector<16x1xf32>
    %cst_43 = arith.constant dense<0xFF800000> : vector<1xf32>
    %101 = vector.multi_reduction <maximumf>, %100, %cst_43 [0] : vector<16x1xf32> to vector<1xf32>
    %102 = vector.shape_cast %101 : vector<1xf32> to vector<1x1xf32>
    %103 = vector.broadcast %102 : vector<1x1xf32> to vector<16x1xf32>
    %104 = arith.subf %100, %103 : vector<16x1xf32>
    %105 = math.exp %104 : vector<16x1xf32>
    %cst_44 = arith.constant dense<0.000000e+00> : vector<1xf32>
    %106 = vector.multi_reduction <add>, %105, %cst_44 [0] : vector<16x1xf32> to vector<1xf32>
    %107 = vector.shape_cast %106 : vector<1xf32> to vector<1x1xf32>
    %108 = vector.broadcast %107 : vector<1x1xf32> to vector<16x1xf32>
    %109 = arith.divf %105, %108 : vector<16x1xf32>
    %c16 = arith.constant 16 : index
    %c0_45 = arith.constant 0 : index
    %110 = vector.load %arg11[%c16, %c0_45] : memref<32x8xf32, #tpu.memory_space<vmem>>, vector<16x8xf32>
    tpu.vector_store %arg11[%c16, %c0_45], %99 {strides = array<i32>} : memref<32x8xf32, #tpu.memory_space<vmem>>, vector<16x8xf32>,
    %111 = vector.broadcast %109 : vector<16x1xf32> to vector<16x8xf32>
    %112 = arith.mulf %111, %84 : vector<16x8xf32>
    %113 = arith.addf %84, %112 : vector<16x8xf32>
    %c16_46 = arith.constant 16 : index
    %c0_47 = arith.constant 0 : index
    %114 = vector.load %arg12[%c16_46, %c0_47] : memref<32x8xf32, #tpu.memory_space<vmem>>, vector<16x8xf32>
    tpu.vector_store %arg12[%c16_46, %c0_47], %113 {strides = array<i32>} : memref<32x8xf32, #tpu.memory_space<vmem>>, vector<16x8xf32>,
    %c0_48 = arith.constant 0 : index
    %c0_49 = arith.constant 0 : index
    %115 = vector.load %arg11[%c0_48, %c0_49] : memref<32x8xf32, #tpu.memory_space<vmem>>, vector<32x8xf32>
    %116 = arith.truncf %115 : vector<32x8xf32> to vector<32x8xbf16>
    %c0_50 = arith.constant 0 : index
    %c0_51 = arith.constant 0 : index
    %c0_52 = arith.constant 0 : index
    %117 = vector.load %arg8[%c0_50, %c0_51, %c0_52] : memref<12x8x8xbf16, #tpu.memory_space<vmem>>, vector<1x8x8xbf16>
    %118 = vector.shape_cast %117 : vector<1x8x8xbf16> to vector<8x8xbf16>
    %cst_53 = arith.constant dense<0.000000e+00> : vector<32x8xf32>
    %119 = tpu.matmul %116, %118, %cst_53 {dimension_numbers = #tpu.dot_dimension_numbers<[1], [0], [0], [1], [0, 0, 1, 1], [], []>} : vector<32x8xbf16>, vector<8x8xbf16>, vector<32x8xf32> -> vector<32x8xf32>
    %c0_54 = arith.constant 0 : index
    %c0_55 = arith.constant 0 : index
    %c0_56 = arith.constant 0 : index
    %120 = vector.load %arg9[%c0_54, %c0_55, %c0_56] : memref<4x1x8xf32, #tpu.memory_space<vmem>>, vector<1x1x8xf32>
    %121 = vector.shape_cast %120 : vector<1x1x8xf32> to vector<1x8xf32>
    %122 = vector.broadcast %121 : vector<1x8xf32> to vector<32x8xf32>
    %123 = arith.addf %119, %122 : vector<32x8xf32>
    %c1_i32_57 = arith.constant 1 : i32
    %124 = vector.broadcast %c1_i32_57 : i32 to vector<32x1xi32>
    %125 = arith.cmpi sge, %19, %124 : vector<32x1xi32>
    %c1_i32_58 = arith.constant 1 : i32
    %126 = tpu.dynamic_rotate %115 by %c1_i32_58 dim 0 : vector<32x8xf32>, i32 -> vector<32x8xf32>
    %cst_59 = arith.constant 0.000000e+00 : f32
    %127 = vector.shape_cast %125 : vector<32x1xi1> to vector<32x1xi1>
    %128 = vector.broadcast %127 : vector<32x1xi1> to vector<32x8xi1>
    %129 = vector.broadcast %cst_59 : f32 to vector<32x8xf32>
    %130 = arith.select %128, %126, %129 : vector<32x8xi1>, vector<32x8xf32>
    %131 = arith.truncf %130 : vector<32x8xf32> to vector<32x8xbf16>
    %c1 = arith.constant 1 : index
    %c0_60 = arith.constant 0 : index
    %c0_61 = arith.constant 0 : index
    %132 = vector.load %arg8[%c1, %c0_60, %c0_61] : memref<12x8x8xbf16, #tpu.memory_space<vmem>>, vector<1x8x8xbf16>
    %133 = vector.shape_cast %132 : vector<1x8x8xbf16> to vector<8x8xbf16>
    %cst_62 = arith.constant dense<0.000000e+00> : vector<32x8xf32>
    %134 = tpu.matmul %131, %133, %cst_62 {dimension_numbers = #tpu.dot_dimension_numbers<[1], [0], [0], [1], [0, 0, 1, 1], [], []>} : vector<32x8xbf16>, vector<8x8xbf16>, vector<32x8xf32> -> vector<32x8xf32>
    %135 = arith.addf %123, %134 : vector<32x8xf32>
    %c2_i32 = arith.constant 2 : i32
    %136 = vector.broadcast %c2_i32 : i32 to vector<32x1xi32>
    %137 = arith.cmpi sge, %19, %136 : vector<32x1xi32>
    %c2_i32_63 = arith.constant 2 : i32
    %138 = tpu.dynamic_rotate %115 by %c2_i32_63 dim 0 : vector<32x8xf32>, i32 -> vector<32x8xf32>
    %cst_64 = arith.constant 0.000000e+00 : f32
    %139 = vector.shape_cast %137 : vector<32x1xi1> to vector<32x1xi1>
    %140 = vector.broadcast %139 : vector<32x1xi1> to vector<32x8xi1>
    %141 = vector.broadcast %cst_64 : f32 to vector<32x8xf32>
    %142 = arith.select %140, %138, %141 : vector<32x8xi1>, vector<32x8xf32>
    %143 = arith.truncf %142 : vector<32x8xf32> to vector<32x8xbf16>
    %c2 = arith.constant 2 : index
    %c0_65 = arith.constant 0 : index
    %c0_66 = arith.constant 0 : index
    %144 = vector.load %arg8[%c2, %c0_65, %c0_66] : memref<12x8x8xbf16, #tpu.memory_space<vmem>>, vector<1x8x8xbf16>
    %145 = vector.shape_cast %144 : vector<1x8x8xbf16> to vector<8x8xbf16>
    %cst_67 = arith.constant dense<0.000000e+00> : vector<32x8xf32>
    %146 = tpu.matmul %143, %145, %cst_67 {dimension_numbers = #tpu.dot_dimension_numbers<[1], [0], [0], [1], [0, 0, 1, 1], [], []>} : vector<32x8xbf16>, vector<8x8xbf16>, vector<32x8xf32> -> vector<32x8xf32>
    %147 = arith.addf %135, %146 : vector<32x8xf32>
    %cst_68 = arith.constant 0.000000e+00 : f32
    %148 = vector.broadcast %cst_68 : f32 to vector<32x8xf32>
    %149 = arith.maximumf %147, %148 : vector<32x8xf32>
    %150 = arith.truncf %149 : vector<32x8xf32> to vector<32x8xbf16>
    %c3 = arith.constant 3 : index
    %c0_69 = arith.constant 0 : index
    %c0_70 = arith.constant 0 : index
    %151 = vector.load %arg8[%c3, %c0_69, %c0_70] : memref<12x8x8xbf16, #tpu.memory_space<vmem>>, vector<1x8x8xbf16>
    %152 = vector.shape_cast %151 : vector<1x8x8xbf16> to vector<8x8xbf16>
    %cst_71 = arith.constant dense<0.000000e+00> : vector<32x8xf32>
    %153 = tpu.matmul %150, %152, %cst_71 {dimension_numbers = #tpu.dot_dimension_numbers<[1], [0], [0], [1], [0, 0, 1, 1], [], []>} : vector<32x8xbf16>, vector<8x8xbf16>, vector<32x8xf32> -> vector<32x8xf32>
    %c1_72 = arith.constant 1 : index
    %c0_73 = arith.constant 0 : index
    %c0_74 = arith.constant 0 : index
    %154 = vector.load %arg9[%c1_72, %c0_73, %c0_74] : memref<4x1x8xf32, #tpu.memory_space<vmem>>, vector<1x1x8xf32>
    %155 = vector.shape_cast %154 : vector<1x1x8xf32> to vector<1x8xf32>
    %156 = vector.broadcast %155 : vector<1x8xf32> to vector<32x8xf32>
    %157 = arith.addf %153, %156 : vector<32x8xf32>
    %c1_i32_75 = arith.constant 1 : i32
    %158 = vector.broadcast %c1_i32_75 : i32 to vector<32x1xi32>
    %159 = arith.cmpi sge, %19, %158 : vector<32x1xi32>
    %c1_i32_76 = arith.constant 1 : i32
    %160 = tpu.dynamic_rotate %149 by %c1_i32_76 dim 0 : vector<32x8xf32>, i32 -> vector<32x8xf32>
    %cst_77 = arith.constant 0.000000e+00 : f32
    %161 = vector.shape_cast %159 : vector<32x1xi1> to vector<32x1xi1>
    %162 = vector.broadcast %161 : vector<32x1xi1> to vector<32x8xi1>
    %163 = vector.broadcast %cst_77 : f32 to vector<32x8xf32>
    %164 = arith.select %162, %160, %163 : vector<32x8xi1>, vector<32x8xf32>
    %165 = arith.truncf %164 : vector<32x8xf32> to vector<32x8xbf16>
    %c4 = arith.constant 4 : index
    %c0_78 = arith.constant 0 : index
    %c0_79 = arith.constant 0 : index
    %166 = vector.load %arg8[%c4, %c0_78, %c0_79] : memref<12x8x8xbf16, #tpu.memory_space<vmem>>, vector<1x8x8xbf16>
    %167 = vector.shape_cast %166 : vector<1x8x8xbf16> to vector<8x8xbf16>
    %cst_80 = arith.constant dense<0.000000e+00> : vector<32x8xf32>
    %168 = tpu.matmul %165, %167, %cst_80 {dimension_numbers = #tpu.dot_dimension_numbers<[1], [0], [0], [1], [0, 0, 1, 1], [], []>} : vector<32x8xbf16>, vector<8x8xbf16>, vector<32x8xf32> -> vector<32x8xf32>
    %169 = arith.addf %157, %168 : vector<32x8xf32>
    %c2_i32_81 = arith.constant 2 : i32
    %170 = vector.broadcast %c2_i32_81 : i32 to vector<32x1xi32>
    %171 = arith.cmpi sge, %19, %170 : vector<32x1xi32>
    %c2_i32_82 = arith.constant 2 : i32
    %172 = tpu.dynamic_rotate %149 by %c2_i32_82 dim 0 : vector<32x8xf32>, i32 -> vector<32x8xf32>
    %cst_83 = arith.constant 0.000000e+00 : f32
    %173 = vector.shape_cast %171 : vector<32x1xi1> to vector<32x1xi1>
    %174 = vector.broadcast %173 : vector<32x1xi1> to vector<32x8xi1>
    %175 = vector.broadcast %cst_83 : f32 to vector<32x8xf32>
    %176 = arith.select %174, %172, %175 : vector<32x8xi1>, vector<32x8xf32>
    %177 = arith.truncf %176 : vector<32x8xf32> to vector<32x8xbf16>
    %c5 = arith.constant 5 : index
    %c0_84 = arith.constant 0 : index
    %c0_85 = arith.constant 0 : index
    %178 = vector.load %arg8[%c5, %c0_84, %c0_85] : memref<12x8x8xbf16, #tpu.memory_space<vmem>>, vector<1x8x8xbf16>
    %179 = vector.shape_cast %178 : vector<1x8x8xbf16> to vector<8x8xbf16>
    %cst_86 = arith.constant dense<0.000000e+00> : vector<32x8xf32>
    %180 = tpu.matmul %177, %179, %cst_86 {dimension_numbers = #tpu.dot_dimension_numbers<[1], [0], [0], [1], [0, 0, 1, 1], [], []>} : vector<32x8xbf16>, vector<8x8xbf16>, vector<32x8xf32> -> vector<32x8xf32>
    %181 = arith.addf %169, %180 : vector<32x8xf32>
    %cst_87 = arith.constant 0.000000e+00 : f32
    %182 = vector.broadcast %cst_87 : f32 to vector<32x8xf32>
    %183 = arith.maximumf %181, %182 : vector<32x8xf32>
    %c0_88 = arith.constant 0 : index
    %c0_89 = arith.constant 0 : index
    %184 = vector.load %arg12[%c0_88, %c0_89] : memref<32x8xf32, #tpu.memory_space<vmem>>, vector<32x8xf32>
    %185 = arith.addf %183, %184 : vector<32x8xf32>
    %cst_90 = arith.constant 0.000000e+00 : f32
    %186 = vector.broadcast %cst_90 : f32 to vector<32x8xf32>
    %187 = arith.maximumf %185, %186 : vector<32x8xf32>
    %188 = arith.truncf %187 : vector<32x8xf32> to vector<32x8xbf16>
    %c1_91 = arith.constant 1 : index
    %c0_92 = arith.constant 0 : index
    %c0_93 = arith.constant 0 : index
    %189 = vector.load %arg2[%c1_91, %c0_92, %c0_93] : memref<2x8x4xbf16, #tpu.memory_space<vmem>>, vector<1x8x4xbf16>
    %190 = vector.shape_cast %189 : vector<1x8x4xbf16> to vector<8x4xbf16>
    %cst_94 = arith.constant dense<0.000000e+00> : vector<32x4xf32>
    %191 = tpu.matmul %188, %190, %cst_94 {dimension_numbers = #tpu.dot_dimension_numbers<[1], [0], [0], [1], [0, 0, 1, 1], [], []>} : vector<32x8xbf16>, vector<8x4xbf16>, vector<32x4xf32> -> vector<32x4xf32>
    %c1_95 = arith.constant 1 : index
    %c0_96 = arith.constant 0 : index
    %c0_97 = arith.constant 0 : index
    %192 = vector.load %arg3[%c1_95, %c0_96, %c0_97] : memref<2x1x4xf32, #tpu.memory_space<vmem>>, vector<1x1x4xf32>
    %193 = vector.shape_cast %192 : vector<1x1x4xf32> to vector<1x4xf32>
    %194 = vector.broadcast %193 : vector<1x4xf32> to vector<32x4xf32>
    %195 = arith.addf %191, %194 : vector<32x4xf32>
    %c1_98 = arith.constant 1 : index
    %c0_99 = arith.constant 0 : index
    %c0_100 = arith.constant 0 : index
    %196 = vector.load %arg4[%c1_98, %c0_99, %c0_100] : memref<2x8x4xbf16, #tpu.memory_space<vmem>>, vector<1x8x4xbf16>
    %197 = vector.shape_cast %196 : vector<1x8x4xbf16> to vector<8x4xbf16>
    %cst_101 = arith.constant dense<0.000000e+00> : vector<32x4xf32>
    %198 = tpu.matmul %188, %197, %cst_101 {dimension_numbers = #tpu.dot_dimension_numbers<[1], [0], [0], [1], [0, 0, 1, 1], [], []>} : vector<32x8xbf16>, vector<8x4xbf16>, vector<32x4xf32> -> vector<32x4xf32>
    %c1_102 = arith.constant 1 : index
    %c0_103 = arith.constant 0 : index
    %c0_104 = arith.constant 0 : index
    %199 = vector.load %arg5[%c1_102, %c0_103, %c0_104] : memref<2x1x4xf32, #tpu.memory_space<vmem>>, vector<1x1x4xf32>
    %200 = vector.shape_cast %199 : vector<1x1x4xf32> to vector<1x4xf32>
    %201 = vector.broadcast %200 : vector<1x4xf32> to vector<32x4xf32>
    %202 = arith.addf %198, %201 : vector<32x4xf32>
    %c1_105 = arith.constant 1 : index
    %c0_106 = arith.constant 0 : index
    %c0_107 = arith.constant 0 : index
    %203 = vector.load %arg6[%c1_105, %c0_106, %c0_107] : memref<2x8x8xbf16, #tpu.memory_space<vmem>>, vector<1x8x8xbf16>
    %204 = vector.shape_cast %203 : vector<1x8x8xbf16> to vector<8x8xbf16>
    %cst_108 = arith.constant dense<0.000000e+00> : vector<32x8xf32>
    %205 = tpu.matmul %188, %204, %cst_108 {dimension_numbers = #tpu.dot_dimension_numbers<[1], [0], [0], [1], [0, 0, 1, 1], [], []>} : vector<32x8xbf16>, vector<8x8xbf16>, vector<32x8xf32> -> vector<32x8xf32>
    %c1_109 = arith.constant 1 : index
    %c0_110 = arith.constant 0 : index
    %c0_111 = arith.constant 0 : index
    %206 = vector.load %arg7[%c1_109, %c0_110, %c0_111] : memref<2x1x8xf32, #tpu.memory_space<vmem>>, vector<1x1x8xf32>
    %207 = vector.shape_cast %206 : vector<1x1x8xf32> to vector<1x8xf32>
    %208 = vector.broadcast %207 : vector<1x8xf32> to vector<32x8xf32>
    %209 = arith.addf %205, %208 : vector<32x8xf32>
    %210 = arith.truncf %195 : vector<32x4xf32> to vector<32x4xbf16>
    %211 = arith.truncf %202 : vector<32x4xf32> to vector<32x4xbf16>
    %212 = arith.truncf %209 : vector<32x8xf32> to vector<32x8xbf16>
    %213 = vector.extract_strided_slice %210 {offsets = [0, 0], sizes = [16, 4], strides = [1, 1]} : vector<32x4xbf16> to vector<16x4xbf16>
    %214 = vector.extract_strided_slice %211 {offsets = [0, 0], sizes = [16, 4], strides = [1, 1]} : vector<32x4xbf16> to vector<16x4xbf16>
    %215 = vector.extract_strided_slice %212 {offsets = [0, 0], sizes = [16, 8], strides = [1, 1]} : vector<32x8xbf16> to vector<16x8xbf16>
    %216 = vector.extract_strided_slice %187 {offsets = [0, 0], sizes = [16, 8], strides = [1, 1]} : vector<32x8xf32> to vector<16x8xf32>
    %cst_112 = arith.constant dense<0.000000e+00> : vector<16x16xf32>
    %217 = tpu.matmul %214, %213, %cst_112 {dimension_numbers = #tpu.dot_dimension_numbers<[1], [1], [0], [0], [0, 0, 1, 0], [], []>} : vector<16x4xbf16>, vector<16x4xbf16>, vector<16x16xf32> -> vector<16x16xf32>
    %cst_113 = arith.constant -1.000000e+30 : f32
    %218 = vector.broadcast %cst_113 : f32 to vector<16x16xf32>
    %219 = arith.select %2, %218, %217 : vector<16x16xi1>, vector<16x16xf32>
    %cst_114 = arith.constant dense<0xFF800000> : vector<16xf32>
    %220 = vector.multi_reduction <maximumf>, %219, %cst_114 [1] : vector<16x16xf32> to vector<16xf32>
    %221 = vector.shape_cast %220 : vector<16xf32> to vector<16x1xf32>
    %222 = vector.broadcast %221 : vector<16x1xf32> to vector<16x16xf32>
    %223 = arith.subf %219, %222 : vector<16x16xf32>
    %224 = math.exp %223 : vector<16x16xf32>
    %cst_115 = arith.constant dense<0.000000e+00> : vector<16xf32>
    %225 = vector.multi_reduction <add>, %224, %cst_115 [1] : vector<16x16xf32> to vector<16xf32>
    %226 = vector.shape_cast %225 : vector<16xf32> to vector<16x1xf32>
    %227 = tpu.reciprocal %226 {approx = true} : vector<16x1xf32> -> vector<16x1xf32>
    %228 = vector.broadcast %227 : vector<16x1xf32> to vector<16x16xf32>
    %229 = arith.mulf %224, %228 : vector<16x16xf32>
    %230 = arith.truncf %229 : vector<16x16xf32> to vector<16x16xbf16>
    %cst_116 = arith.constant dense<0.000000e+00> : vector<16x8xf32>
    %231 = tpu.matmul %230, %215, %cst_116 {dimension_numbers = #tpu.dot_dimension_numbers<[0], [0], [1], [1], [0, 1, 1, 1], [], []>} : vector<16x16xbf16>, vector<16x8xbf16>, vector<16x8xf32> -> vector<16x8xf32>
    %cst_117 = arith.constant dense<0.000000e+00> : vector<16x1xf32>
    %232 = tpu.matmul %229, %20, %cst_117 {dimension_numbers = #tpu.dot_dimension_numbers<[0], [0], [1], [1], [0, 1, 1, 1], [], []>} : vector<16x16xf32>, vector<16x1xf32>, vector<16x1xf32> -> vector<16x1xf32>
    %cst_118 = arith.constant dense<0xFF800000> : vector<1xf32>
    %233 = vector.multi_reduction <maximumf>, %232, %cst_118 [0] : vector<16x1xf32> to vector<1xf32>
    %234 = vector.shape_cast %233 : vector<1xf32> to vector<1x1xf32>
    %235 = vector.broadcast %234 : vector<1x1xf32> to vector<16x1xf32>
    %236 = arith.subf %232, %235 : vector<16x1xf32>
    %237 = math.exp %236 : vector<16x1xf32>
    %cst_119 = arith.constant dense<0.000000e+00> : vector<1xf32>
    %238 = vector.multi_reduction <add>, %237, %cst_119 [0] : vector<16x1xf32> to vector<1xf32>
    %239 = vector.shape_cast %238 : vector<1xf32> to vector<1x1xf32>
    %240 = vector.broadcast %239 : vector<1x1xf32> to vector<16x1xf32>
    %241 = arith.divf %237, %240 : vector<16x1xf32>
    %c0_120 = arith.constant 0 : index
    %c0_121 = arith.constant 0 : index
    %242 = vector.load %arg11[%c0_120, %c0_121] : memref<32x8xf32, #tpu.memory_space<vmem>>, vector<16x8xf32>
    tpu.vector_store %arg11[%c0_120, %c0_121], %231 {strides = array<i32>} : memref<32x8xf32, #tpu.memory_space<vmem>>, vector<16x8xf32>,
    %243 = vector.broadcast %241 : vector<16x1xf32> to vector<16x8xf32>
    %244 = arith.mulf %243, %216 : vector<16x8xf32>
    %245 = arith.addf %216, %244 : vector<16x8xf32>
    %c0_122 = arith.constant 0 : index
    %c0_123 = arith.constant 0 : index
    %246 = vector.load %arg12[%c0_122, %c0_123] : memref<32x8xf32, #tpu.memory_space<vmem>>, vector<16x8xf32>
    tpu.vector_store %arg12[%c0_122, %c0_123], %245 {strides = array<i32>} : memref<32x8xf32, #tpu.memory_space<vmem>>, vector<16x8xf32>,
    %247 = vector.extract_strided_slice %210 {offsets = [16, 0], sizes = [16, 4], strides = [1, 1]} : vector<32x4xbf16> to vector<16x4xbf16>
    %248 = vector.extract_strided_slice %211 {offsets = [16, 0], sizes = [16, 4], strides = [1, 1]} : vector<32x4xbf16> to vector<16x4xbf16>
    %249 = vector.extract_strided_slice %212 {offsets = [16, 0], sizes = [16, 8], strides = [1, 1]} : vector<32x8xbf16> to vector<16x8xbf16>
    %250 = vector.extract_strided_slice %187 {offsets = [16, 0], sizes = [16, 8], strides = [1, 1]} : vector<32x8xf32> to vector<16x8xf32>
    %cst_124 = arith.constant dense<0.000000e+00> : vector<16x16xf32>
    %251 = tpu.matmul %248, %247, %cst_124 {dimension_numbers = #tpu.dot_dimension_numbers<[1], [1], [0], [0], [0, 0, 1, 0], [], []>} : vector<16x4xbf16>, vector<16x4xbf16>, vector<16x16xf32> -> vector<16x16xf32>
    %cst_125 = arith.constant -1.000000e+30 : f32
    %252 = vector.broadcast %cst_125 : f32 to vector<16x16xf32>
    %253 = arith.select %2, %252, %251 : vector<16x16xi1>, vector<16x16xf32>
    %cst_126 = arith.constant dense<0xFF800000> : vector<16xf32>
    %254 = vector.multi_reduction <maximumf>, %253, %cst_126 [1] : vector<16x16xf32> to vector<16xf32>
    %255 = vector.shape_cast %254 : vector<16xf32> to vector<16x1xf32>
    %256 = vector.broadcast %255 : vector<16x1xf32> to vector<16x16xf32>
    %257 = arith.subf %253, %256 : vector<16x16xf32>
    %258 = math.exp %257 : vector<16x16xf32>
    %cst_127 = arith.constant dense<0.000000e+00> : vector<16xf32>
    %259 = vector.multi_reduction <add>, %258, %cst_127 [1] : vector<16x16xf32> to vector<16xf32>
    %260 = vector.shape_cast %259 : vector<16xf32> to vector<16x1xf32>
    %261 = tpu.reciprocal %260 {approx = true} : vector<16x1xf32> -> vector<16x1xf32>
    %262 = vector.broadcast %261 : vector<16x1xf32> to vector<16x16xf32>
    %263 = arith.mulf %258, %262 : vector<16x16xf32>
    %264 = arith.truncf %263 : vector<16x16xf32> to vector<16x16xbf16>
    %cst_128 = arith.constant dense<0.000000e+00> : vector<16x8xf32>
    %265 = tpu.matmul %264, %249, %cst_128 {dimension_numbers = #tpu.dot_dimension_numbers<[0], [0], [1], [1], [0, 1, 1, 1], [], []>} : vector<16x16xbf16>, vector<16x8xbf16>, vector<16x8xf32> -> vector<16x8xf32>
    %cst_129 = arith.constant dense<0.000000e+00> : vector<16x1xf32>
    %266 = tpu.matmul %263, %20, %cst_129 {dimension_numbers = #tpu.dot_dimension_numbers<[0], [0], [1], [1], [0, 1, 1, 1], [], []>} : vector<16x16xf32>, vector<16x1xf32>, vector<16x1xf32> -> vector<16x1xf32>
    %cst_130 = arith.constant dense<0xFF800000> : vector<1xf32>
    %267 = vector.multi_reduction <maximumf>, %266, %cst_130 [0] : vector<16x1xf32> to vector<1xf32>
    %268 = vector.shape_cast %267 : vector<1xf32> to vector<1x1xf32>
    %269 = vector.broadcast %268 : vector<1x1xf32> to vector<16x1xf32>
    %270 = arith.subf %266, %269 : vector<16x1xf32>
    %271 = math.exp %270 : vector<16x1xf32>
    %cst_131 = arith.constant dense<0.000000e+00> : vector<1xf32>
    %272 = vector.multi_reduction <add>, %271, %cst_131 [0] : vector<16x1xf32> to vector<1xf32>
    %273 = vector.shape_cast %272 : vector<1xf32> to vector<1x1xf32>
    %274 = vector.broadcast %273 : vector<1x1xf32> to vector<16x1xf32>
    %275 = arith.divf %271, %274 : vector<16x1xf32>
    %c16_132 = arith.constant 16 : index
    %c0_133 = arith.constant 0 : index
    %276 = vector.load %arg11[%c16_132, %c0_133] : memref<32x8xf32, #tpu.memory_space<vmem>>, vector<16x8xf32>
    tpu.vector_store %arg11[%c16_132, %c0_133], %265 {strides = array<i32>} : memref<32x8xf32, #tpu.memory_space<vmem>>, vector<16x8xf32>,
    %277 = vector.broadcast %275 : vector<16x1xf32> to vector<16x8xf32>
    %278 = arith.mulf %277, %250 : vector<16x8xf32>
    %279 = arith.addf %250, %278 : vector<16x8xf32>
    %c16_134 = arith.constant 16 : index
    %c0_135 = arith.constant 0 : index
    %280 = vector.load %arg12[%c16_134, %c0_135] : memref<32x8xf32, #tpu.memory_space<vmem>>, vector<16x8xf32>
    tpu.vector_store %arg12[%c16_134, %c0_135], %279 {strides = array<i32>} : memref<32x8xf32, #tpu.memory_space<vmem>>, vector<16x8xf32>,
    %c0_136 = arith.constant 0 : index
    %c0_137 = arith.constant 0 : index
    %281 = vector.load %arg11[%c0_136, %c0_137] : memref<32x8xf32, #tpu.memory_space<vmem>>, vector<32x8xf32>
    %282 = arith.truncf %281 : vector<32x8xf32> to vector<32x8xbf16>
    %c6 = arith.constant 6 : index
    %c0_138 = arith.constant 0 : index
    %c0_139 = arith.constant 0 : index
    %283 = vector.load %arg8[%c6, %c0_138, %c0_139] : memref<12x8x8xbf16, #tpu.memory_space<vmem>>, vector<1x8x8xbf16>
    %284 = vector.shape_cast %283 : vector<1x8x8xbf16> to vector<8x8xbf16>
    %cst_140 = arith.constant dense<0.000000e+00> : vector<32x8xf32>
    %285 = tpu.matmul %282, %284, %cst_140 {dimension_numbers = #tpu.dot_dimension_numbers<[1], [0], [0], [1], [0, 0, 1, 1], [], []>} : vector<32x8xbf16>, vector<8x8xbf16>, vector<32x8xf32> -> vector<32x8xf32>
    %c2_141 = arith.constant 2 : index
    %c0_142 = arith.constant 0 : index
    %c0_143 = arith.constant 0 : index
    %286 = vector.load %arg9[%c2_141, %c0_142, %c0_143] : memref<4x1x8xf32, #tpu.memory_space<vmem>>, vector<1x1x8xf32>
    %287 = vector.shape_cast %286 : vector<1x1x8xf32> to vector<1x8xf32>
    %288 = vector.broadcast %287 : vector<1x8xf32> to vector<32x8xf32>
    %289 = arith.addf %285, %288 : vector<32x8xf32>
    %c2_i32_144 = arith.constant 2 : i32
    %290 = vector.broadcast %c2_i32_144 : i32 to vector<32x1xi32>
    %291 = arith.cmpi sge, %19, %290 : vector<32x1xi32>
    %c2_i32_145 = arith.constant 2 : i32
    %292 = tpu.dynamic_rotate %281 by %c2_i32_145 dim 0 : vector<32x8xf32>, i32 -> vector<32x8xf32>
    %cst_146 = arith.constant 0.000000e+00 : f32
    %293 = vector.shape_cast %291 : vector<32x1xi1> to vector<32x1xi1>
    %294 = vector.broadcast %293 : vector<32x1xi1> to vector<32x8xi1>
    %295 = vector.broadcast %cst_146 : f32 to vector<32x8xf32>
    %296 = arith.select %294, %292, %295 : vector<32x8xi1>, vector<32x8xf32>
    %297 = arith.truncf %296 : vector<32x8xf32> to vector<32x8xbf16>
    %c7 = arith.constant 7 : index
    %c0_147 = arith.constant 0 : index
    %c0_148 = arith.constant 0 : index
    %298 = vector.load %arg8[%c7, %c0_147, %c0_148] : memref<12x8x8xbf16, #tpu.memory_space<vmem>>, vector<1x8x8xbf16>
    %299 = vector.shape_cast %298 : vector<1x8x8xbf16> to vector<8x8xbf16>
    %cst_149 = arith.constant dense<0.000000e+00> : vector<32x8xf32>
    %300 = tpu.matmul %297, %299, %cst_149 {dimension_numbers = #tpu.dot_dimension_numbers<[1], [0], [0], [1], [0, 0, 1, 1], [], []>} : vector<32x8xbf16>, vector<8x8xbf16>, vector<32x8xf32> -> vector<32x8xf32>
    %301 = arith.addf %289, %300 : vector<32x8xf32>
    %c4_i32 = arith.constant 4 : i32
    %302 = vector.broadcast %c4_i32 : i32 to vector<32x1xi32>
    %303 = arith.cmpi sge, %19, %302 : vector<32x1xi32>
    %c4_i32_150 = arith.constant 4 : i32
    %304 = tpu.dynamic_rotate %281 by %c4_i32_150 dim 0 : vector<32x8xf32>, i32 -> vector<32x8xf32>
    %cst_151 = arith.constant 0.000000e+00 : f32
    %305 = vector.shape_cast %303 : vector<32x1xi1> to vector<32x1xi1>
    %306 = vector.broadcast %305 : vector<32x1xi1> to vector<32x8xi1>
    %307 = vector.broadcast %cst_151 : f32 to vector<32x8xf32>
    %308 = arith.select %306, %304, %307 : vector<32x8xi1>, vector<32x8xf32>
    %309 = arith.truncf %308 : vector<32x8xf32> to vector<32x8xbf16>
    %c8 = arith.constant 8 : index
    %c0_152 = arith.constant 0 : index
    %c0_153 = arith.constant 0 : index
    %310 = vector.load %arg8[%c8, %c0_152, %c0_153] : memref<12x8x8xbf16, #tpu.memory_space<vmem>>, vector<1x8x8xbf16>
    %311 = vector.shape_cast %310 : vector<1x8x8xbf16> to vector<8x8xbf16>
    %cst_154 = arith.constant dense<0.000000e+00> : vector<32x8xf32>
    %312 = tpu.matmul %309, %311, %cst_154 {dimension_numbers = #tpu.dot_dimension_numbers<[1], [0], [0], [1], [0, 0, 1, 1], [], []>} : vector<32x8xbf16>, vector<8x8xbf16>, vector<32x8xf32> -> vector<32x8xf32>
    %313 = arith.addf %301, %312 : vector<32x8xf32>
    %cst_155 = arith.constant 0.000000e+00 : f32
    %314 = vector.broadcast %cst_155 : f32 to vector<32x8xf32>
    %315 = arith.maximumf %313, %314 : vector<32x8xf32>
    %316 = arith.truncf %315 : vector<32x8xf32> to vector<32x8xbf16>
    %c9 = arith.constant 9 : index
    %c0_156 = arith.constant 0 : index
    %c0_157 = arith.constant 0 : index
    %317 = vector.load %arg8[%c9, %c0_156, %c0_157] : memref<12x8x8xbf16, #tpu.memory_space<vmem>>, vector<1x8x8xbf16>
    %318 = vector.shape_cast %317 : vector<1x8x8xbf16> to vector<8x8xbf16>
    %cst_158 = arith.constant dense<0.000000e+00> : vector<32x8xf32>
    %319 = tpu.matmul %316, %318, %cst_158 {dimension_numbers = #tpu.dot_dimension_numbers<[1], [0], [0], [1], [0, 0, 1, 1], [], []>} : vector<32x8xbf16>, vector<8x8xbf16>, vector<32x8xf32> -> vector<32x8xf32>
    %c3_159 = arith.constant 3 : index
    %c0_160 = arith.constant 0 : index
    %c0_161 = arith.constant 0 : index
    %320 = vector.load %arg9[%c3_159, %c0_160, %c0_161] : memref<4x1x8xf32, #tpu.memory_space<vmem>>, vector<1x1x8xf32>
    %321 = vector.shape_cast %320 : vector<1x1x8xf32> to vector<1x8xf32>
    %322 = vector.broadcast %321 : vector<1x8xf32> to vector<32x8xf32>
    %323 = arith.addf %319, %322 : vector<32x8xf32>
    %c2_i32_162 = arith.constant 2 : i32
    %324 = vector.broadcast %c2_i32_162 : i32 to vector<32x1xi32>
    %325 = arith.cmpi sge, %19, %324 : vector<32x1xi32>
    %c2_i32_163 = arith.constant 2 : i32
    %326 = tpu.dynamic_rotate %315 by %c2_i32_163 dim 0 : vector<32x8xf32>, i32 -> vector<32x8xf32>
    %cst_164 = arith.constant 0.000000e+00 : f32
    %327 = vector.shape_cast %325 : vector<32x1xi1> to vector<32x1xi1>
    %328 = vector.broadcast %327 : vector<32x1xi1> to vector<32x8xi1>
    %329 = vector.broadcast %cst_164 : f32 to vector<32x8xf32>
    %330 = arith.select %328, %326, %329 : vector<32x8xi1>, vector<32x8xf32>
    %331 = arith.truncf %330 : vector<32x8xf32> to vector<32x8xbf16>
    %c10 = arith.constant 10 : index
    %c0_165 = arith.constant 0 : index
    %c0_166 = arith.constant 0 : index
    %332 = vector.load %arg8[%c10, %c0_165, %c0_166] : memref<12x8x8xbf16, #tpu.memory_space<vmem>>, vector<1x8x8xbf16>
    %333 = vector.shape_cast %332 : vector<1x8x8xbf16> to vector<8x8xbf16>
    %cst_167 = arith.constant dense<0.000000e+00> : vector<32x8xf32>
    %334 = tpu.matmul %331, %333, %cst_167 {dimension_numbers = #tpu.dot_dimension_numbers<[1], [0], [0], [1], [0, 0, 1, 1], [], []>} : vector<32x8xbf16>, vector<8x8xbf16>, vector<32x8xf32> -> vector<32x8xf32>
    %335 = arith.addf %323, %334 : vector<32x8xf32>
    %c4_i32_168 = arith.constant 4 : i32
    %336 = vector.broadcast %c4_i32_168 : i32 to vector<32x1xi32>
    %337 = arith.cmpi sge, %19, %336 : vector<32x1xi32>
    %c4_i32_169 = arith.constant 4 : i32
    %338 = tpu.dynamic_rotate %315 by %c4_i32_169 dim 0 : vector<32x8xf32>, i32 -> vector<32x8xf32>
    %cst_170 = arith.constant 0.000000e+00 : f32
    %339 = vector.shape_cast %337 : vector<32x1xi1> to vector<32x1xi1>
    %340 = vector.broadcast %339 : vector<32x1xi1> to vector<32x8xi1>
    %341 = vector.broadcast %cst_170 : f32 to vector<32x8xf32>
    %342 = arith.select %340, %338, %341 : vector<32x8xi1>, vector<32x8xf32>
    %343 = arith.truncf %342 : vector<32x8xf32> to vector<32x8xbf16>
    %c11 = arith.constant 11 : index
    %c0_171 = arith.constant 0 : index
    %c0_172 = arith.constant 0 : index
    %344 = vector.load %arg8[%c11, %c0_171, %c0_172] : memref<12x8x8xbf16, #tpu.memory_space<vmem>>, vector<1x8x8xbf16>
    %345 = vector.shape_cast %344 : vector<1x8x8xbf16> to vector<8x8xbf16>
    %cst_173 = arith.constant dense<0.000000e+00> : vector<32x8xf32>
    %346 = tpu.matmul %343, %345, %cst_173 {dimension_numbers = #tpu.dot_dimension_numbers<[1], [0], [0], [1], [0, 0, 1, 1], [], []>} : vector<32x8xbf16>, vector<8x8xbf16>, vector<32x8xf32> -> vector<32x8xf32>
    %347 = arith.addf %335, %346 : vector<32x8xf32>
    %cst_174 = arith.constant 0.000000e+00 : f32
    %348 = vector.broadcast %cst_174 : f32 to vector<32x8xf32>
    %349 = arith.maximumf %347, %348 : vector<32x8xf32>
    %c0_175 = arith.constant 0 : index
    %c0_176 = arith.constant 0 : index
    %350 = vector.load %arg12[%c0_175, %c0_176] : memref<32x8xf32, #tpu.memory_space<vmem>>, vector<32x8xf32>
    %351 = arith.addf %349, %350 : vector<32x8xf32>
    %cst_177 = arith.constant 0.000000e+00 : f32
    %352 = vector.broadcast %cst_177 : f32 to vector<32x8xf32>
    %353 = arith.maximumf %351, %352 : vector<32x8xf32>
    %c0_178 = arith.constant 0 : index
    %c0_179 = arith.constant 0 : index
    %354 = vector.load %arg10[%c0_178, %c0_179] : memref<32x8xf32, #tpu.memory_space<vmem>>, vector<32x8xf32>
    tpu.vector_store %arg10[%c0_178, %c0_179], %353 {strides = array<i32>} : memref<32x8xf32, #tpu.memory_space<vmem>>, vector<32x8xf32>,
    return
  }
  func.func @transform_0(%arg0: i32) -> (i32, i32) {
    %c0_i32 = arith.constant 0 : i32
    %c0_i32_0 = arith.constant 0 : i32
    return %arg0, %c0_i32 : i32, i32
  }
  func.func @transform_1(%arg0: i32) -> (i32, i32, i32) {
    %c0_i32 = arith.constant 0 : i32
    %c0_i32_0 = arith.constant 0 : i32
    %c0_i32_1 = arith.constant 0 : i32
    %c0_i32_2 = arith.constant 0 : i32
    return %c0_i32, %c0_i32_0, %c0_i32_1 : i32, i32, i32
  }
  func.func @transform_2(%arg0: i32) -> (i32, i32, i32) {
    %c0_i32 = arith.constant 0 : i32
    %c0_i32_0 = arith.constant 0 : i32
    %c0_i32_1 = arith.constant 0 : i32
    %c0_i32_2 = arith.constant 0 : i32
    return %c0_i32, %c0_i32_0, %c0_i32_1 : i32, i32, i32
  }
  func.func @transform_3(%arg0: i32) -> (i32, i32, i32) {
    %c0_i32 = arith.constant 0 : i32
    %c0_i32_0 = arith.constant 0 : i32
    %c0_i32_1 = arith.constant 0 : i32
    %c0_i32_2 = arith.constant 0 : i32
    return %c0_i32, %c0_i32_0, %c0_i32_1 : i32, i32, i32
  }
  func.func @transform_4(%arg0: i32) -> (i32, i32, i32) {
    %c0_i32 = arith.constant 0 : i32
    %c0_i32_0 = arith.constant 0 : i32
    %c0_i32_1 = arith.constant 0 : i32
    %c0_i32_2 = arith.constant 0 : i32
    return %c0_i32, %c0_i32_0, %c0_i32_1 : i32, i32, i32
  }
  func.func @transform_5(%arg0: i32) -> (i32, i32, i32) {
    %c0_i32 = arith.constant 0 : i32
    %c0_i32_0 = arith.constant 0 : i32
    %c0_i32_1 = arith.constant 0 : i32
    %c0_i32_2 = arith.constant 0 : i32
    return %c0_i32, %c0_i32_0, %c0_i32_1 : i32, i32, i32
  }
  func.func @transform_6(%arg0: i32) -> (i32, i32, i32) {
    %c0_i32 = arith.constant 0 : i32
    %c0_i32_0 = arith.constant 0 : i32
    %c0_i32_1 = arith.constant 0 : i32
    %c0_i32_2 = arith.constant 0 : i32
    return %c0_i32, %c0_i32_0, %c0_i32_1 : i32, i32, i32
  }
  func.func @transform_7(%arg0: i32) -> (i32, i32, i32) {
    %c0_i32 = arith.constant 0 : i32
    %c0_i32_0 = arith.constant 0 : i32
    %c0_i32_1 = arith.constant 0 : i32
    %c0_i32_2 = arith.constant 0 : i32
    return %c0_i32, %c0_i32_0, %c0_i32_1 : i32, i32, i32
  }
  func.func @transform_8(%arg0: i32) -> (i32, i32, i32) {
    %c0_i32 = arith.constant 0 : i32
    %c0_i32_0 = arith.constant 0 : i32
    %c0_i32_1 = arith.constant 0 : i32
    %c0_i32_2 = arith.constant 0 : i32
    return %c0_i32, %c0_i32_0, %c0_i32_1 : i32, i32, i32
  }
  func.func @transform_9(%arg0: i32) -> (i32, i32) {
    %c0_i32 = arith.constant 0 : i32
    %c0_i32_0 = arith.constant 0 : i32
    return %arg0, %c0_i32 : i32, i32
  }
}

</mosaic_0001>

<llo_original>
// kernel: tpu_custom_call.1
$region0: #{tpu_custom_call.1}
  #allocation0 [shape = 'u32[]', space=smem, size = 0x4, offset = 0x4, fixed_abs, tag = 'smem constant byte address 0x4 - core index']
  #allocation1 [shape = 'u32[144,128]{1,0:T(1,128)}', space=vmem, size = 0x12000, scoped, tag = 'internal scratch']
  #allocation2 [shape = 'f32[32,8]{1,0:T(8,128)}', space=vmem, size = 0x4000, scoped, tag = 'scratch operand']
  #allocation3 [shape = 'f32[32,8]{1,0:T(8,128)}', space=vmem, size = 0x4000, scoped, tag = 'scratch operand']
  %s0 = inlined_call_operand.hbm [shape: f32[64,8], index: 0, kind: input, shape index: {}]
  %s1 = inlined_call_operand.hbm [shape: bf16[2,8,4], index: 1, kind: input, shape index: {}]
  %s2 = inlined_call_operand.hbm [shape: f32[2,1,4], index: 2, kind: input, shape index: {}]
  %s3 = inlined_call_operand.hbm [shape: bf16[2,8,4], index: 3, kind: input, shape index: {}]
  %s4 = inlined_call_operand.hbm [shape: f32[2,1,4], index: 4, kind: input, shape index: {}]
  %s5 = inlined_call_operand.hbm [shape: bf16[2,8,8], index: 5, kind: input, shape index: {}]
  %s6 = inlined_call_operand.hbm [shape: f32[2,1,8], index: 6, kind: input, shape index: {}]
  %s7 = inlined_call_operand.hbm [shape: bf16[12,8,8], index: 7, kind: input, shape index: {}]
  %s8 = inlined_call_operand.hbm [shape: f32[4,1,8], index: 8, kind: input, shape index: {}]
  %s9 = inlined_call_operand.hbm [shape: f32[64,8], index: 9, kind: output, shape index: {}]
  %s10 = sld [smem:[#allocation0]]
  $region105: #{tpu_custom_call.1} parent=0
    _
  %s12 = ssub.s32 1, %s10
  %s13 = scalar_select 0, %s12, %s10
  $region1: #{tpu_custom_call.1} parent=0
    #allocation4 [shape = 'u8[32768]{0}', space=vmem, size = 0x8000, scoped, tag = 'input window, operand 0']
    #allocation5 [shape = 's32[2]{0}', space=sflag, size = 0x8, scoped, tag = 'scoped memory for tpu_custom_call.1']
    #allocation6 [shape = 's32[2]{0}', space=sflag, size = 0x8, scoped, tag = 'scoped memory for tpu_custom_call.1']
    #allocation7 [shape = 'u8[4096]{0}', space=vmem, size = 0x1000, scoped, tag = 'input window, operand 1, single buffered']
    #allocation8 [shape = 's32[1]{0}', space=sflag, size = 0x4, scoped, tag = 'scoped memory for tpu_custom_call.1']
    #allocation9 [shape = 'u8[1024]{0}', space=vmem, size = 0x400, scoped, tag = 'input window, operand 2, single buffered']
    #allocation10 [shape = 'u8[4096]{0}', space=vmem, size = 0x1000, scoped, tag = 'input window, operand 3, single buffered']
    #allocation11 [shape = 's32[1]{0}', space=sflag, size = 0x4, scoped, tag = 'scoped memory for tpu_custom_call.1']
    #allocation12 [shape = 'u8[1024]{0}', space=vmem, size = 0x400, scoped, tag = 'input window, operand 4, single buffered']
    #allocation13 [shape = 'u8[4096]{0}', space=vmem, size = 0x1000, scoped, tag = 'input window, operand 5, single buffered']
    #allocation14 [shape = 's32[1]{0}', space=sflag, size = 0x4, scoped, tag = 'scoped memory for tpu_custom_call.1']
    #allocation15 [shape = 'u8[1024]{0}', space=vmem, size = 0x400, scoped, tag = 'input window, operand 6, single buffered']
    #allocation16 [shape = 'u8[24576]{0}', space=vmem, size = 0x6000, scoped, tag = 'input window, operand 7, single buffered']
    #allocation17 [shape = 's32[1]{0}', space=sflag, size = 0x4, scoped, tag = 'scoped memory for tpu_custom_call.1']
    #allocation18 [shape = 'u8[2048]{0}', space=vmem, size = 0x800, scoped, tag = 'input window, operand 8, single buffered']
    #allocation19 [shape = 'u8[32768]{0}', space=vmem, size = 0x8000, scoped, tag = 'output window, operand 0']
    %14 = vsyncpa [#allocation5], 0
    %s15 = scalar_lea.sflag [#allocation5], 1
    %16 = vsyncpa %s15, 0
    %17 = vsyncpa [#allocation8], 0
    %18 = vsyncpa [#allocation11], 0
    %19 = vsyncpa [#allocation14], 0
    %20 = vsyncpa [#allocation17], 0
    %21 = vsyncpa [#allocation6], 0
    %s22 = scalar_lea.sflag [#allocation6], 1
    %23 = vsyncpa %s22, 0
    loop: start=0, step=1, limit=4
    $region2: #{tpu_custom_call.1} parent=1 // loop_pre_header
      _
    $region3: #{tpu_custom_call.1} parent=1 // loop_header
      %s25 = sphi 0, %s29
      %p26 = scmp.ge.s32.totalorder %s25, 4
      %s35 = sphi 0, %s37
      %s38 = sphi 0, %s35
      %s39 = sphi 0, %s38
      %s55 = sphi 0, %s39
      %s59 = sphi 0, %s59
      %s61 = sphi 0, %s59
      %s62 = sphi 0, %s61
      %s76 = sphi 0, %s62
      %s80 = sphi 0, %s80
      %s82 = sphi 0, %s80
      %s83 = sphi 0, %s82
      %s97 = sphi 0, %s83
      %s101 = sphi 0, %s101
      %s103 = sphi 0, %s101
      %s104 = sphi 0, %s103
      %s118 = sphi 0, %s104
      %s122 = sphi 0, %s122
      %s124 = sphi 0, %s122
      %s125 = sphi 0, %s124
      %s139 = sphi 0, %s125
      %s143 = sphi 0, %s143
      %s145 = sphi 0, %s143
      %s146 = sphi 0, %s145
      %s160 = sphi 0, %s146
      %s164 = sphi 0, %s164
      %s166 = sphi 0, %s164
      %s167 = sphi 0, %s166
      %s181 = sphi 0, %s167
      %s185 = sphi 0, %s185
      %s187 = sphi 0, %s185
      %s188 = sphi 0, %s187
      %s202 = sphi 0, %s188
      %s206 = sphi 0, %s206
      %s208 = sphi 0, %s206
      %s209 = sphi 0, %s208
      %s223 = sphi 0, %s209
      %s229 = sphi 0, %s231
      %s232 = sphi 0, %s229
      %s233 = sphi 0, %s232
      %s249 = sphi 0, %s233
    $region4: #{tpu_custom_call.1} parent=1 // loop_header_branch
      %28 = sbr.rel (%p26) target = $region8
    $region5: #{tpu_custom_call.1} parent=1 // loop_body
      %s30 = ssub.s32 %s25, 1
      %s31 = ssub.s32 %s25, 2
      %s32 = sadd.s32 %s25, 1
      %s33 = ssub.s32 %s25, %s32
      %p34 = scmp.eq.s32.totalorder %s33, 0
      %s36 = sadd.s32 %s35, 1
      %s37 = scalar_select %p34, %s35, %s36
      %p40 = pneg %p34
      %p41 = scmp.eq.s32.totalorder %s25, 1
      %p42 = por %p40, %p41
      %p43 = scmp.ne.s32.totalorder %s35, %s38
      %p44 = scmp.eq.s32.totalorder %s25, 0
      %p45 = por %p43, %p44
      %p46 = scmp.ne.s32.totalorder %s35, %s38
      %p47 = scmp.eq.s32.totalorder %s30, 1
      %p48 = por %p46, %p47
      %p49 = scmp.ne.s32.totalorder %s38, %s39
      %p50 = scmp.eq.s32.totalorder %s30, 0
      %p51 = por %p49, %p50
      %p52 = scmp.ne.s32.totalorder %s38, %s39
      %p53 = scmp.eq.s32.totalorder %s31, 1
      %p54 = por %p52, %p53
      %p56 = scmp.ne.s32.totalorder %s39, %s55
      %p57 = scmp.eq.s32.totalorder %s31, 0
      %p58 = por %p56, %p57
      %s60 = sadd.s32 %s59, 1
      %p63 = scmp.eq.s32.totalorder %s25, 1
      %p64 = scmp.ne.s32.totalorder %s59, %s61
      %p65 = scmp.eq.s32.totalorder %s25, 0
      %p66 = por %p64, %p65
      %p67 = scmp.ne.s32.totalorder %s59, %s61
      %p68 = scmp.eq.s32.totalorder %s30, 1
      %p69 = por %p67, %p68
      %p70 = scmp.ne.s32.totalorder %s61, %s62
      %p71 = scmp.eq.s32.totalorder %s30, 0
      %p72 = por %p70, %p71
      %p73 = scmp.ne.s32.totalorder %s61, %s62
      %p74 = scmp.eq.s32.totalorder %s31, 1
      %p75 = por %p73, %p74
      %p77 = scmp.ne.s32.totalorder %s62, %s76
      %p78 = scmp.eq.s32.totalorder %s31, 0
      %p79 = por %p77, %p78
      %s81 = sadd.s32 %s80, 1
      %p84 = scmp.eq.s32.totalorder %s25, 1
      %p85 = scmp.ne.s32.totalorder %s80, %s82
      %p86 = scmp.eq.s32.totalorder %s25, 0
      %p87 = por %p85, %p86
      %p88 = scmp.ne.s32.totalorder %s80, %s82
      %p89 = scmp.eq.s32.totalorder %s30, 1
      %p90 = por %p88, %p89
      %p91 = scmp.ne.s32.totalorder %s82, %s83
      %p92 = scmp.eq.s32.totalorder %s30, 0
      %p93 = por %p91, %p92
      %p94 = scmp.ne.s32.totalorder %s82, %s83
      %p95 = scmp.eq.s32.totalorder %s31, 1
      %p96 = por %p94, %p95
      %p98 = scmp.ne.s32.totalorder %s83, %s97
      %p99 = scmp.eq.s32.totalorder %s31, 0
      %p100 = por %p98, %p99
      %s102 = sadd.s32 %s101, 1
      %p105 = scmp.eq.s32.totalorder %s25, 1
      %p106 = scmp.ne.s32.totalorder %s101, %s103
      %p107 = scmp.eq.s32.totalorder %s25, 0
      %p108 = por %p106, %p107
      %p109 = scmp.ne.s32.totalorder %s101, %s103
      %p110 = scmp.eq.s32.totalorder %s30, 1
      %p111 = por %p109, %p110
      %p112 = scmp.ne.s32.totalorder %s103, %s104
      %p113 = scmp.eq.s32.totalorder %s30, 0
      %p114 = por %p112, %p113
      %p115 = scmp.ne.s32.totalorder %s103, %s104
      %p116 = scmp.eq.s32.totalorder %s31, 1
      %p117 = por %p115, %p116
      %p119 = scmp.ne.s32.totalorder %s104, %s118
      %p120 = scmp.eq.s32.totalorder %s31, 0
      %p121 = por %p119, %p120
      %s123 = sadd.s32 %s122, 1
      %p126 = scmp.eq.s32.totalorder %s25, 1
      %p127 = scmp.ne.s32.totalorder %s122, %s124
      %p128 = scmp.eq.s32.totalorder %s25, 0
      %p129 = por %p127, %p128
      %p130 = scmp.ne.s32.totalorder %s122, %s124
      %p131 = scmp.eq.s32.totalorder %s30, 1
      %p132 = por %p130, %p131
      %p133 = scmp.ne.s32.totalorder %s124, %s125
      %p134 = scmp.eq.s32.totalorder %s30, 0
      %p135 = por %p133, %p134
      %p136 = scmp.ne.s32.totalorder %s124, %s125
      %p137 = scmp.eq.s32.totalorder %s31, 1
      %p138 = por %p136, %p137
      %p140 = scmp.ne.s32.totalorder %s125, %s139
      %p141 = scmp.eq.s32.totalorder %s31, 0
      %p142 = por %p140, %p141
      %s144 = sadd.s32 %s143, 1
      %p147 = scmp.eq.s32.totalorder %s25, 1
      %p148 = scmp.ne.s32.totalorder %s143, %s145
      %p149 = scmp.eq.s32.totalorder %s25, 0
      %p150 = por %p148, %p149
      %p151 = scmp.ne.s32.totalorder %s143, %s145
      %p152 = scmp.eq.s32.totalorder %s30, 1
      %p153 = por %p151, %p152
      %p154 = scmp.ne.s32.totalorder %s145, %s146
      %p155 = scmp.eq.s32.totalorder %s30, 0
      %p156 = por %p154, %p155
      %p157 = scmp.ne.s32.totalorder %s145, %s146
      %p158 = scmp.eq.s32.totalorder %s31, 1
      %p159 = por %p157, %p158
      %p161 = scmp.ne.s32.totalorder %s146, %s160
      %p162 = scmp.eq.s32.totalorder %s31, 0
      %p163 = por %p161, %p162
      %s165 = sadd.s32 %s164, 1
      %p168 = scmp.eq.s32.totalorder %s25, 1
      %p169 = scmp.ne.s32.totalorder %s164, %s166
      %p170 = scmp.eq.s32.totalorder %s25, 0
      %p171 = por %p169, %p170
      %p172 = scmp.ne.s32.totalorder %s164, %s166
      %p173 = scmp.eq.s32.totalorder %s30, 1
      %p174 = por %p172, %p173
      %p175 = scmp.ne.s32.totalorder %s166, %s167
      %p176 = scmp.eq.s32.totalorder %s30, 0
      %p177 = por %p175, %p176
      %p178 = scmp.ne.s32.totalorder %s166, %s167
      %p179 = scmp.eq.s32.totalorder %s31, 1
      %p180 = por %p178, %p179
      %p182 = scmp.ne.s32.totalorder %s167, %s181
      %p183 = scmp.eq.s32.totalorder %s31, 0
      %p184 = por %p182, %p183
      %s186 = sadd.s32 %s185, 1
      %p189 = scmp.eq.s32.totalorder %s25, 1
      %p190 = scmp.ne.s32.totalorder %s185, %s187
      %p191 = scmp.eq.s32.totalorder %s25, 0
      %p192 = por %p190, %p191
      %p193 = scmp.ne.s32.totalorder %s185, %s187
      %p194 = scmp.eq.s32.totalorder %s30, 1
      %p195 = por %p193, %p194
      %p196 = scmp.ne.s32.totalorder %s187, %s188
      %p197 = scmp.eq.s32.totalorder %s30, 0
      %p198 = por %p196, %p197
      %p199 = scmp.ne.s32.totalorder %s187, %s188
      %p200 = scmp.eq.s32.totalorder %s31, 1
      %p201 = por %p199, %p200
      %p203 = scmp.ne.s32.totalorder %s188, %s202
      %p204 = scmp.eq.s32.totalorder %s31, 0
      %p205 = por %p203, %p204
      %s207 = sadd.s32 %s206, 1
      %p210 = scmp.eq.s32.totalorder %s25, 1
      %p211 = scmp.ne.s32.totalorder %s206, %s208
      %p212 = scmp.eq.s32.totalorder %s25, 0
      %p213 = por %p211, %p212
      %p214 = scmp.ne.s32.totalorder %s206, %s208
      %p215 = scmp.eq.s32.totalorder %s30, 1
      %p216 = por %p214, %p215
      %p217 = scmp.ne.s32.totalorder %s208, %s209
      %p218 = scmp.eq.s32.totalorder %s30, 0
      %p219 = por %p217, %p218
      %p220 = scmp.ne.s32.totalorder %s208, %s209
      %p221 = scmp.eq.s32.totalorder %s31, 1
      %p222 = por %p220, %p221
      %p224 = scmp.ne.s32.totalorder %s209, %s223
      %p225 = scmp.eq.s32.totalorder %s31, 0
      %p226 = por %p224, %p225
      %s227 = ssub.s32 %s25, %s32
      %p228 = scmp.eq.s32.totalorder %s227, 0
      %s230 = sadd.s32 %s229, 1
      %s231 = scalar_select %p228, %s229, %s230
      %p234 = pneg %p228
      %p235 = scmp.eq.s32.totalorder %s25, 1
      %p236 = por %p234, %p235
      %p237 = scmp.ne.s32.totalorder %s229, %s232
      %p238 = scmp.eq.s32.totalorder %s25, 0
      %p239 = por %p237, %p238
      %p240 = scmp.ne.s32.totalorder %s229, %s232
      %p241 = scmp.eq.s32.totalorder %s30, 1
      %p242 = por %p240, %p241
      %p243 = scmp.ne.s32.totalorder %s232, %s233
      %p244 = scmp.eq.s32.totalorder %s30, 0
      %p245 = por %p243, %p244
      %p246 = scmp.ne.s32.totalorder %s232, %s233
      %p247 = scmp.eq.s32.totalorder %s31, 1
      %p248 = por %p246, %p247
      %p250 = scmp.ne.s32.totalorder %s233, %s249
      %p251 = scmp.eq.s32.totalorder %s31, 0
      %p252 = por %p250, %p251
      %p253 = scmp.le.s32.totalorder 1, %s25
      %p254 = scmp.lt.s32.totalorder %s25, 3
      %p255 = pnand %p253, %p254
      %p256 = pneg %p255
      // Predicated region
      $region9: #{tpu_custom_call.1} parent=5 // pred_check
        _
      $region10: #{tpu_custom_call.1} parent=5 // pred_check_branch
        %258 = sbr.rel (%p255) target = $region12
      $region11: #{tpu_custom_call.1} parent=5 // pred_region
        %s259 = ssub.s32 %s25, 1
        // Predicated region
        $region13: #{tpu_custom_call.1} parent=11 // pred_check
          %p260 = pneg %p72
        $region14: #{tpu_custom_call.1} parent=11 // pred_check_branch
          %262 = sbr.rel (%p260) target = $region16
        $region15: #{tpu_custom_call.1} parent=11 // pred_region
          %s264 = ssub.s32 128, 128
          %265 = vsyncadd [#allocation8], %s264
          %s266 = sshll.u32 [#allocation7], 4
          %s267 = int_to_ptr.vmem [resolvable:$true] %s266
          %272 = dma.hbm_to_vmem [thread:$0]  %s1, 128, %s267, [#allocation8], 64, 64, 4
        $region16: #{tpu_custom_call.1} parent=11 // pred_fallthru
          _
        // Predicated region
        $region17: #{tpu_custom_call.1} parent=11 // pred_check
          %p273 = pneg %p93
        $region18: #{tpu_custom_call.1} parent=11 // pred_check_branch
          %275 = sbr.rel (%p273) target = $region20
        $region19: #{tpu_custom_call.1} parent=11 // pred_region
          %s277 = ssub.s32 32, 32
          %278 = vsyncadd [#allocation8], %s277
          %s279 = sshll.u32 [#allocation9], 4
          %s280 = int_to_ptr.vmem [resolvable:$true] %s279
          %285 = dma.hbm_to_vmem [thread:$0]  %s2, 32, %s280, [#allocation8], 16, 16, 1
        $region20: #{tpu_custom_call.1} parent=11 // pred_fallthru
          _
        // Predicated region
        $region21: #{tpu_custom_call.1} parent=11 // pred_check
          %p286 = pneg %p114
        $region22: #{tpu_custom_call.1} parent=11 // pred_check_branch
          %288 = sbr.rel (%p286) target = $region24
        $region23: #{tpu_custom_call.1} parent=11 // pred_region
          %s290 = ssub.s32 128, 128
          %291 = vsyncadd [#allocation11], %s290
          %s292 = sshll.u32 [#allocation10], 4
          %s293 = int_to_ptr.vmem [resolvable:$true] %s292
          %298 = dma.hbm_to_vmem [thread:$0]  %s3, 128, %s293, [#allocation11], 64, 64, 4
        $region24: #{tpu_custom_call.1} parent=11 // pred_fallthru
          _
        // Predicated region
        $region25: #{tpu_custom_call.1} parent=11 // pred_check
          %p299 = pneg %p135
        $region26: #{tpu_custom_call.1} parent=11 // pred_check_branch
          %301 = sbr.rel (%p299) target = $region28
        $region27: #{tpu_custom_call.1} parent=11 // pred_region
          %s303 = ssub.s32 32, 32
          %304 = vsyncadd [#allocation11], %s303
          %s305 = sshll.u32 [#allocation12], 4
          %s306 = int_to_ptr.vmem [resolvable:$true] %s305
          %311 = dma.hbm_to_vmem [thread:$0]  %s4, 32, %s306, [#allocation11], 16, 16, 1
        $region28: #{tpu_custom_call.1} parent=11 // pred_fallthru
          _
        // Predicated region
        $region29: #{tpu_custom_call.1} parent=11 // pred_check
          %p312 = pneg %p156
        $region30: #{tpu_custom_call.1} parent=11 // pred_check_branch
          %314 = sbr.rel (%p312) target = $region32
        $region31: #{tpu_custom_call.1} parent=11 // pred_region
          %s316 = ssub.s32 128, 128
          %317 = vsyncadd [#allocation14], %s316
          %s318 = sshll.u32 [#allocation13], 4
          %s319 = int_to_ptr.vmem [resolvable:$true] %s318
          %324 = dma.hbm_to_vmem [thread:$0]  %s5, 128, %s319, [#allocation14], 64, 64, 4
        $region32: #{tpu_custom_call.1} parent=11 // pred_fallthru
          _
        // Predicated region
        $region33: #{tpu_custom_call.1} parent=11 // pred_check
          %p325 = pneg %p177
        $region34: #{tpu_custom_call.1} parent=11 // pred_check_branch
          %327 = sbr.rel (%p325) target = $region36
        $region35: #{tpu_custom_call.1} parent=11 // pred_region
          %s329 = ssub.s32 32, 32
          %330 = vsyncadd [#allocation14], %s329
          %s331 = sshll.u32 [#allocation15], 4
          %s332 = int_to_ptr.vmem [resolvable:$true] %s331
          %337 = dma.hbm_to_vmem [thread:$0]  %s6, 32, %s332, [#allocation14], 16, 16, 1
        $region36: #{tpu_custom_call.1} parent=11 // pred_fallthru
          _
        // Predicated region
        $region37: #{tpu_custom_call.1} parent=11 // pred_check
          %p338 = pneg %p198
        $region38: #{tpu_custom_call.1} parent=11 // pred_check_branch
          %340 = sbr.rel (%p338) target = $region40
        $region39: #{tpu_custom_call.1} parent=11 // pred_region
          %s342 = ssub.s32 768, 768
          %343 = vsyncadd [#allocation17], %s342
          %s344 = sshll.u32 [#allocation16], 4
          %s345 = int_to_ptr.vmem [resolvable:$true] %s344
          %350 = dma.hbm_to_vmem [thread:$0]  %s7, 768, %s345, [#allocation17], 64, 64, 4
        $region40: #{tpu_custom_call.1} parent=11 // pred_fallthru
          _
        // Predicated region
        $region41: #{tpu_custom_call.1} parent=11 // pred_check
          %p351 = pneg %p219
        $region42: #{tpu_custom_call.1} parent=11 // pred_check_branch
          %353 = sbr.rel (%p351) target = $region44
        $region43: #{tpu_custom_call.1} parent=11 // pred_region
          %s355 = ssub.s32 64, 64
          %356 = vsyncadd [#allocation17], %s355
          %s357 = sshll.u32 [#allocation18], 4
          %s358 = int_to_ptr.vmem [resolvable:$true] %s357
          %363 = dma.hbm_to_vmem [thread:$0]  %s8, 64, %s358, [#allocation17], 16, 16, 1
        $region44: #{tpu_custom_call.1} parent=11 // pred_fallthru
          _
      $region12: #{tpu_custom_call.1} parent=5 // pred_fallthru
        _
      %p364 = scmp.lt.s32.totalorder %s25, 2
      // Predicated region
      $region45: #{tpu_custom_call.1} parent=5 // pred_check
        %p365 = pneg %p364
      $region46: #{tpu_custom_call.1} parent=5 // pred_check_branch
        %367 = sbr.rel (%p365) target = $region48
      $region47: #{tpu_custom_call.1} parent=5 // pred_region
        // Predicated region
        $region49: #{tpu_custom_call.1} parent=47 // pred_check
          %p368 = pneg %p45
        $region50: #{tpu_custom_call.1} parent=47 // pred_check_branch
          %370 = sbr.rel (%p368) target = $region52
        $region51: #{tpu_custom_call.1} parent=47 // pred_region
          %s371 = sand.u32 %s35, 1
          %s372 = scalar_lea.sflag [#allocation5], %s371
          %s373 = sand.u32 %s35, 1
          %s374 = smul.addr %s373, 32
          %s375 = scalar_lea.vmem [#allocation4], %s374
          %s376 = smul.u32 4, %s25
          %s378 = ssub.s32 512, 512
          %379 = vsyncadd %s372, %s378
          %s380 = smul.addr %s376, 128
          %s381 = scalar_lea.hbm %s0, %s380
          %s382 = sshll.u32 %s375, 4
          %s383 = int_to_ptr.vmem [resolvable:$true] %s382
          %388 = dma.hbm_to_vmem [thread:$0]  %s381, 512, %s383, %s372, 128, 128, 8
        $region52: #{tpu_custom_call.1} parent=47 // pred_fallthru
          _
      $region48: #{tpu_custom_call.1} parent=5 // pred_fallthru
        _
      %p389 = scmp.le.s32.totalorder 1, %s25
      %p390 = scmp.lt.s32.totalorder %s25, 3
      %p391 = pnand %p389, %p390
      %p392 = pneg %p391
      // Predicated region
      $region53: #{tpu_custom_call.1} parent=5 // pred_check
        _
      $region54: #{tpu_custom_call.1} parent=5 // pred_check_branch
        %394 = sbr.rel (%p391) target = $region56
      $region55: #{tpu_custom_call.1} parent=5 // pred_region
        %s395 = ssub.s32 %s25, 1
        %s396 = sand.u32 %s38, 1
        %s397 = scalar_lea.sflag [#allocation5], %s396
        %s398 = sand.u32 %s38, 1
        %s399 = smul.addr %s398, 32
        %s400 = scalar_lea.vmem [#allocation4], %s399
        // Predicated region
        $region57: #{tpu_custom_call.1} parent=55 // pred_check
          %p401 = pneg %p51
        $region58: #{tpu_custom_call.1} parent=55 // pred_check_branch
          %403 = sbr.rel (%p401) target = $region60
        $region59: #{tpu_custom_call.1} parent=55 // pred_region
          %404 = dma.done %s397, 512
        $region60: #{tpu_custom_call.1} parent=55 // pred_fallthru
          _
        // Predicated region
        $region61: #{tpu_custom_call.1} parent=55 // pred_check
          %p405 = pneg %p72
        $region62: #{tpu_custom_call.1} parent=55 // pred_check_branch
          %407 = sbr.rel (%p405) target = $region64
        $region63: #{tpu_custom_call.1} parent=55 // pred_region
          %408 = dma.done [#allocation8], 128
        $region64: #{tpu_custom_call.1} parent=55 // pred_fallthru
          _
        // Predicated region
        $region65: #{tpu_custom_call.1} parent=55 // pred_check
          %p409 = pneg %p93
        $region66: #{tpu_custom_call.1} parent=55 // pred_check_branch
          %411 = sbr.rel (%p409) target = $region68
        $region67: #{tpu_custom_call.1} parent=55 // pred_region
          %412 = dma.done [#allocation8], 32
        $region68: #{tpu_custom_call.1} parent=55 // pred_fallthru
          _
        // Predicated region
        $region69: #{tpu_custom_call.1} parent=55 // pred_check
          %p413 = pneg %p114
        $region70: #{tpu_custom_call.1} parent=55 // pred_check_branch
          %415 = sbr.rel (%p413) target = $region72
        $region71: #{tpu_custom_call.1} parent=55 // pred_region
          %416 = dma.done [#allocation11], 128
        $region72: #{tpu_custom_call.1} parent=55 // pred_fallthru
          _
        // Predicated region
        $region73: #{tpu_custom_call.1} parent=55 // pred_check
          %p417 = pneg %p135
        $region74: #{tpu_custom_call.1} parent=55 // pred_check_branch
          %419 = sbr.rel (%p417) target = $region76
        $region75: #{tpu_custom_call.1} parent=55 // pred_region
          %420 = dma.done [#allocation11], 32
        $region76: #{tpu_custom_call.1} parent=55 // pred_fallthru
          _
        // Predicated region
        $region77: #{tpu_custom_call.1} parent=55 // pred_check
          %p421 = pneg %p156
        $region78: #{tpu_custom_call.1} parent=55 // pred_check_branch
          %423 = sbr.rel (%p421) target = $region80
        $region79: #{tpu_custom_call.1} parent=55 // pred_region
          %424 = dma.done [#allocation14], 128
        $region80: #{tpu_custom_call.1} parent=55 // pred_fallthru
          _
        // Predicated region
        $region81: #{tpu_custom_call.1} parent=55 // pred_check
          %p425 = pneg %p177
        $region82: #{tpu_custom_call.1} parent=55 // pred_check_branch
          %427 = sbr.rel (%p425) target = $region84
        $region83: #{tpu_custom_call.1} parent=55 // pred_region
          %428 = dma.done [#allocation14], 32
        $region84: #{tpu_custom_call.1} parent=55 // pred_fallthru
          _
        // Predicated region
        $region85: #{tpu_custom_call.1} parent=55 // pred_check
          %p429 = pneg %p198
        $region86: #{tpu_custom_call.1} parent=55 // pred_check_branch
          %431 = sbr.rel (%p429) target = $region88
        $region87: #{tpu_custom_call.1} parent=55 // pred_region
          %432 = dma.done [#allocation17], 768
        $region88: #{tpu_custom_call.1} parent=55 // pred_fallthru
          _
        // Predicated region
        $region89: #{tpu_custom_call.1} parent=55 // pred_check
          %p433 = pneg %p219
        $region90: #{tpu_custom_call.1} parent=55 // pred_check_branch
          %435 = sbr.rel (%p433) target = $region92
        $region91: #{tpu_custom_call.1} parent=55 // pred_region
          %436 = dma.done [#allocation17], 64
        $region92: #{tpu_custom_call.1} parent=55 // pred_fallthru
          _
        %s437 = sand.u32 %s38, 1
        %s438 = scalar_lea.sflag [#allocation5], %s437
        %s439 = sand.u32 %s38, 1
        %s440 = smul.addr %s439, 32
        %s441 = scalar_lea.vmem [#allocation4], %s440
        %p442 = pneg %p51
        %p443 = pneg %p48
        %p444 = pneg %p72
        %p445 = pneg %p69
        %p446 = pneg %p93
        %p447 = pneg %p90
        %p448 = pneg %p114
        %p449 = pneg %p111
        %p450 = pneg %p135
        %p451 = pneg %p132
        %p452 = pneg %p156
        %p453 = pneg %p153
        %p454 = pneg %p177
        %p455 = pneg %p174
        %p456 = pneg %p198
        %p457 = pneg %p195
        %p458 = pneg %p219
        %p459 = pneg %p216
        %p460 = pneg %p245
        %p461 = pneg %p242
        %s462 = sand.u32 %s232, 1
        %s463 = scalar_lea.sflag [#allocation6], %s462
        %s464 = sand.u32 %s232, 1
        %s465 = smul.addr %s464, 32
        %s466 = scalar_lea.vmem [#allocation19], %s465
        %s467 = smul.u32 4, %s30
        %s468 = smul.u32 4, %s30
        %v470 = vlaneseq
        %v471 = vshrl.u32 %v470, 7
        %v472 = vadd.s32 %v471, 8
        %v473 = vlaneseq
        %v474 = vand.u32 %v473, 127
        %vm475 = vcmp.gt.s32.totalorder %v471, %v474
        %vm476 = vcmp.gt.s32.totalorder %v472, %v474
        %v477 = vadd.s32 %v471, 16
        %v478 = vadd.s32 %v471, 24
        %vm479 = vcmp.lt.s32.totalorder %v471, 0
        %v480 = vsub.s32 0, %v471
        %v481 = vsel %vm479, %v480, %v471
        %v482 = vshrl.u32 %v481, 4
        %v483 = vand.u32 %v481, 15
        %v484 = vsub.s32 0, %v483
        %v485 = vsel %vm479, %v484, %v483
        %vm486 = vcmp.lt.s32.totalorder %v472, 0
        %v487 = vsub.s32 0, %v472
        %v488 = vsel %vm486, %v487, %v472
        %v489 = vshrl.u32 %v488, 4
        %v490 = vand.u32 %v488, 15
        %v491 = vsub.s32 0, %v490
        %v492 = vsel %vm486, %v491, %v490
        %vm493 = vcmp.lt.s32.totalorder %v477, 0
        %v494 = vsub.s32 0, %v477
        %v495 = vsel %vm493, %v494, %v477
        %v496 = vshrl.u32 %v495, 4
        %v497 = vand.u32 %v495, 15
        %v498 = vsub.s32 0, %v497
        %v499 = vsel %vm493, %v498, %v497
        %vm500 = vcmp.lt.s32.totalorder %v478, 0
        %v501 = vsub.s32 0, %v478
        %v502 = vsel %vm500, %v501, %v478
        %v503 = vshrl.u32 %v502, 4
        %v504 = vand.u32 %v502, 15
        %v505 = vsub.s32 0, %v504
        %v506 = vsel %vm500, %v505, %v504
        %vm507 = vcmp.ne.s32.totalorder %v485, 0
        %vm508 = vcmp.ne.s32.totalorder %v492, 0
        %vm509 = vcmp.ne.s32.totalorder %v499, 0
        %vm510 = vcmp.ne.s32.totalorder %v506, 0
        %vm511 = vcmp.lt.s32.totalorder %v485, 0
        %vm512 = vcmp.lt.s32.totalorder %v492, 0
        %vm513 = vcmp.lt.s32.totalorder %v499, 0
        %vm514 = vcmp.lt.s32.totalorder %v506, 0
        %vm515 = vmand %vm511, %vm507
        %vm516 = vmand %vm512, %vm508
        %vm517 = vmand %vm513, %vm509
        %vm518 = vmand %vm514, %vm510
        %v519 = vadd.s32 %v485, 16
        %v520 = vadd.s32 %v492, 16
        %v521 = vadd.s32 %v499, 16
        %v522 = vadd.s32 %v506, 16
        %v523 = vsel %vm515, %v519, %v485
        %v524 = vsel %vm516, %v520, %v492
        %v525 = vsel %vm517, %v521, %v499
        %v526 = vsel %vm518, %v522, %v506
        %v527 = vld [vmem:[%s400] sm:$0xff]
        %v528 = vld [vmem:[%s400 + $0x8] sm:$0xff]
        %v529 = vld [vmem:[%s400 + $0x10] sm:$0xff]
        %v530 = vld [vmem:[%s400 + $0x18] sm:$0xff]
        %v531 = vpack.c.bf16 %v528, %v527
        %v532 = vpack.c.bf16 %v530, %v529
        %v533 = vld [vmem:[#allocation7] sm:$0xf]
        %v534 = vld [vmem:[#allocation9] sm:$0x1]
        %v536 = vlaneseq
        %v537 = vshrl.u32 %v536, 7
        %v538 = vsub.s32 0, %v537
        %v539 = vrot.slane %v534, %v538
        %vm541 = vcmask 64512
        %v543 = vsel %vm541, %v531, 0
        %v546 = vsel %vm541, %v532, 0
        %vm548 = vcmask 1043456
        %v550 = vsel %vm548, %v533, 0
        %552 = vmatprep.subr.bf16.mxu0 0
        %553 = vmatpush1.bf16.msra.mxu0 %v550
        %554 = vmatprep.subr.bf16.mxu0 0
        %555 = vmatpush1.bf16.msra.mxu0 0
        %556 = vmatprep.subr.bf16.mxu0 0
        %557 = vmatpush1.bf16.msra.mxu0 0
        %558 = vmatprep.subr.bf16.mxu0 0
        %559 = vmatpush1.bf16.msra.mxu0 0
        %560 = vmatprep.subr.bf16.mxu0 0
        %561 = vmatpush1.bf16.msra.mxu0 0
        %562 = vmatprep.subr.bf16.mxu0 0
        %563 = vmatpush1.bf16.msra.mxu0 0
        %564 = vmatprep.subr.bf16.mxu0 0
        %565 = vmatpush1.bf16.msra.mxu0 0
        %566 = vmatprep.subr.bf16.mxu0 0
        %567 = vmatpush1.bf16.msra.mxu0 0
        %568 = vmatprep.subr.bf16.mxu0 0
        %569 = vmatpush1.bf16.msra.mxu0 0
        %570 = vmatprep.subr.bf16.mxu0 0
        %571 = vmatpush1.bf16.msra.mxu0 0
        %572 = vmatprep.subr.bf16.mxu0 0
        %573 = vmatpush1.bf16.msra.mxu0 0
        %574 = vmatprep.subr.bf16.mxu0 0
        %575 = vmatpush1.bf16.msra.mxu0 0
        %576 = vmatprep.subr.bf16.mxu0 0
        %577 = vmatpush1.bf16.msra.mxu0 0
        %578 = vmatprep.subr.bf16.mxu0 0
        %579 = vmatpush1.bf16.msra.mxu0 0
        %580 = vmatprep.subr.bf16.mxu0 0
        %581 = vmatpush1.bf16.msra.mxu0 0
        %582 = vmatprep.subr.bf16.mxu0 0
        %583 = vmatpush1.bf16.msra.mxu0 0
        %584 = vmatprep.mubr.bf16.mxu0 0
        %585 = vmatmul.mubr.bf16.gmra.mrb[0].mxu0 %v543
        %v586 = vpop.f32.mrb[0].mxu0
        %v587 = vadd.f32 %v539, %v586
        %v588 = vpop.f32.mrb[0].mxu0
        %v589 = vpop.f32.mrb[0].mxu0
        %v590 = vadd.f32 %v539, %v589
        %v591 = vpop.f32.mrb[0].mxu0
        %592 = vmatprep.mubr.bf16.mxu0 0
        %593 = vmatmul.mubr.bf16.gmra.mrb[0].mxu0 %v546
        %v594 = vpop.f32.mrb[0].mxu0
        %v595 = vadd.f32 %v539, %v594
        %v596 = vpop.f32.mrb[0].mxu0
        %v597 = vpop.f32.mrb[0].mxu0
        %v598 = vadd.f32 %v539, %v597
        %v599 = vpop.f32.mrb[0].mxu0
        %600 = vdwg.mxu0
        %v601 = vld [vmem:[#allocation10] sm:$0xf]
        %v602 = vld [vmem:[#allocation12] sm:$0x1]
        %v604 = vlaneseq
        %v605 = vshrl.u32 %v604, 7
        %v606 = vsub.s32 0, %v605
        %v607 = vrot.slane %v602, %v606
        %v610 = vsel %vm548, %v601, 0
        %612 = vmatprep.subr.bf16.mxu0 0
        %613 = vmatpush1.bf16.msra.mxu0 %v610
        %614 = vmatprep.subr.bf16.mxu0 0
        %615 = vmatpush1.bf16.msra.mxu0 0
        %616 = vmatprep.subr.bf16.mxu0 0
        %617 = vmatpush1.bf16.msra.mxu0 0
        %618 = vmatprep.subr.bf16.mxu0 0
        %619 = vmatpush1.bf16.msra.mxu0 0
        %620 = vmatprep.subr.bf16.mxu0 0
        %621 = vmatpush1.bf16.msra.mxu0 0
        %622 = vmatprep.subr.bf16.mxu0 0
        %623 = vmatpush1.bf16.msra.mxu0 0
        %624 = vmatprep.subr.bf16.mxu0 0
        %625 = vmatpush1.bf16.msra.mxu0 0
        %626 = vmatprep.subr.bf16.mxu0 0
        %627 = vmatpush1.bf16.msra.mxu0 0
        %628 = vmatprep.subr.bf16.mxu0 0
        %629 = vmatpush1.bf16.msra.mxu0 0
        %630 = vmatprep.subr.bf16.mxu0 0
        %631 = vmatpush1.bf16.msra.mxu0 0
        %632 = vmatprep.subr.bf16.mxu0 0
        %633 = vmatpush1.bf16.msra.mxu0 0
        %634 = vmatprep.subr.bf16.mxu0 0
        %635 = vmatpush1.bf16.msra.mxu0 0
        %636 = vmatprep.subr.bf16.mxu0 0
        %637 = vmatpush1.bf16.msra.mxu0 0
        %638 = vmatprep.subr.bf16.mxu0 0
        %639 = vmatpush1.bf16.msra.mxu0 0
        %640 = vmatprep.subr.bf16.mxu0 0
        %641 = vmatpush1.bf16.msra.mxu0 0
        %642 = vmatprep.subr.bf16.mxu0 0
        %643 = vmatpush1.bf16.msra.mxu0 0
        %644 = vmatprep.mubr.bf16.mxu0 0
        %645 = vmatmul.mubr.bf16.gmra.mrb[0].mxu0 %v543
        %v646 = vpop.f32.mrb[0].mxu0
        %v647 = vadd.f32 %v607, %v646
        %v648 = vpop.f32.mrb[0].mxu0
        %v649 = vpop.f32.mrb[0].mxu0
        %v650 = vadd.f32 %v607, %v649
        %v651 = vpop.f32.mrb[0].mxu0
        %652 = vmatprep.mubr.bf16.mxu0 0
        %653 = vmatmul.mubr.bf16.gmra.mrb[0].mxu0 %v546
        %v654 = vpop.f32.mrb[0].mxu0
        %v655 = vadd.f32 %v607, %v654
        %v656 = vpop.f32.mrb[0].mxu0
        %v657 = vpop.f32.mrb[0].mxu0
        %v658 = vadd.f32 %v607, %v657
        %v659 = vpop.f32.mrb[0].mxu0
        %660 = vdwg.mxu0
        %v661 = vld [vmem:[#allocation13] sm:$0xf]
        %v662 = vld [vmem:[#allocation15] sm:$0x1]
        %v664 = vlaneseq
        %v665 = vshrl.u32 %v664, 7
        %v666 = vsub.s32 0, %v665
        %v667 = vrot.slane %v662, %v666
        %v670 = vsel %vm548, %v661, 0
        %672 = vmatprep.subr.bf16.mxu0 0
        %673 = vmatpush1.bf16.msra.mxu0 %v670
        %674 = vmatprep.subr.bf16.mxu0 0
        %675 = vmatpush1.bf16.msra.mxu0 0
        %676 = vmatprep.subr.bf16.mxu0 0
        %677 = vmatpush1.bf16.msra.mxu0 0
        %678 = vmatprep.subr.bf16.mxu0 0
        %679 = vmatpush1.bf16.msra.mxu0 0
        %680 = vmatprep.subr.bf16.mxu0 0
        %681 = vmatpush1.bf16.msra.mxu0 0
        %682 = vmatprep.subr.bf16.mxu0 0
        %683 = vmatpush1.bf16.msra.mxu0 0
        %684 = vmatprep.subr.bf16.mxu0 0
        %685 = vmatpush1.bf16.msra.mxu0 0
        %686 = vmatprep.subr.bf16.mxu0 0
        %687 = vmatpush1.bf16.msra.mxu0 0
        %688 = vmatprep.subr.bf16.mxu0 0
        %689 = vmatpush1.bf16.msra.mxu0 0
        %690 = vmatprep.subr.bf16.mxu0 0
        %691 = vmatpush1.bf16.msra.mxu0 0
        %692 = vmatprep.subr.bf16.mxu0 0
        %693 = vmatpush1.bf16.msra.mxu0 0
        %694 = vmatprep.subr.bf16.mxu0 0
        %695 = vmatpush1.bf16.msra.mxu0 0
        %696 = vmatprep.subr.bf16.mxu0 0
        %697 = vmatpush1.bf16.msra.mxu0 0
        %698 = vmatprep.subr.bf16.mxu0 0
        %699 = vmatpush1.bf16.msra.mxu0 0
        %700 = vmatprep.subr.bf16.mxu0 0
        %701 = vmatpush1.bf16.msra.mxu0 0
        %702 = vmatprep.subr.bf16.mxu0 0
        %703 = vmatpush1.bf16.msra.mxu0 0
        %704 = vmatprep.mubr.bf16.mxu0 0
        %705 = vmatmul.mubr.bf16.gmra.mrb[0].mxu0 %v543
        %v706 = vpop.f32.mrb[0].mxu0
        %v707 = vadd.f32 %v667, %v706
        %v708 = vpop.f32.mrb[0].mxu0
        %v709 = vpop.f32.mrb[0].mxu0
        %v710 = vadd.f32 %v667, %v709
        %v711 = vpop.f32.mrb[0].mxu0
        %712 = vmatprep.mubr.bf16.mxu0 0
        %713 = vmatmul.mubr.bf16.gmra.mrb[0].mxu0 %v546
        %v714 = vpop.f32.mrb[0].mxu0
        %v715 = vadd.f32 %v667, %v714
        %v716 = vpop.f32.mrb[0].mxu0
        %v717 = vpop.f32.mrb[0].mxu0
        %v718 = vadd.f32 %v667, %v717
        %v719 = vpop.f32.mrb[0].mxu0
        %720 = vdwg.mxu0
        %v721 = vpack.c.bf16 %v590, %v587
        %v722 = vpack.c.bf16 %v598, %v595
        %v723 = vpack.c.bf16 %v650, %v647
        %v724 = vpack.c.bf16 %v658, %v655
        %v725 = vpack.c.bf16 %v710, %v707
        %v726 = vpack.c.bf16 %v718, %v715
        %vm727 = vcmask 31744
        %v729 = vsel %vm727, %v723, 0
        %v732 = vsel %vm727, %v721, 0
        %734 = vmatprep.subr.bf16.mxu0 0
        %735 = vmatpush1.bf16.xpose.msra.mxu0 %v732
        %736 = vmatprep.subr.bf16.mxu0 0
        %737 = vmatpush1.bf16.xpose.msra.mxu0 0
        %738 = vmatprep.subr.bf16.mxu0 0
        %739 = vmatpush1.bf16.xpose.msra.mxu0 0
        %740 = vmatprep.subr.bf16.mxu0 0
        %741 = vmatpush1.bf16.xpose.msra.mxu0 0
        %742 = vmatprep.subr.bf16.mxu0 0
        %743 = vmatpush1.bf16.xpose.msra.mxu0 0
        %744 = vmatprep.subr.bf16.mxu0 0
        %745 = vmatpush1.bf16.xpose.msra.mxu0 0
        %746 = vmatprep.subr.bf16.mxu0 0
        %747 = vmatpush1.bf16.xpose.msra.mxu0 0
        %748 = vmatprep.subr.bf16.mxu0 0
        %749 = vmatpush1.bf16.xpose.msra.mxu0 0
        %750 = vmatprep.subr.bf16.mxu0 0
        %751 = vmatpush1.bf16.xpose.msra.mxu0 0
        %752 = vmatprep.subr.bf16.mxu0 0
        %753 = vmatpush1.bf16.xpose.msra.mxu0 0
        %754 = vmatprep.subr.bf16.mxu0 0
        %755 = vmatpush1.bf16.xpose.msra.mxu0 0
        %756 = vmatprep.subr.bf16.mxu0 0
        %757 = vmatpush1.bf16.xpose.msra.mxu0 0
        %758 = vmatprep.subr.bf16.mxu0 0
        %759 = vmatpush1.bf16.xpose.msra.mxu0 0
        %760 = vmatprep.subr.bf16.mxu0 0
        %761 = vmatpush1.bf16.xpose.msra.mxu0 0
        %762 = vmatprep.subr.bf16.mxu0 0
        %763 = vmatpush1.bf16.xpose.msra.mxu0 0
        %764 = vmatprep.subr.bf16.mxu0 0
        %765 = vmatpush1.bf16.xpose.msra.mxu0 0
        %766 = vmatprep.mubr.bf16.mxu0 0
        %767 = vmatmul.mubr.bf16.gmra.mrb[0].mxu0 %v729
        %v768 = vpop.f32.mrb[0].mxu0
        %v769 = vadd.f32 0.0, %v768
        %v770 = vpop.f32.mrb[0].mxu0
        %v771 = vpop.f32.mrb[0].mxu0
        %v772 = vadd.f32 0.0, %v771
        %v773 = vpop.f32.mrb[0].mxu0
        %774 = vdwg.mxu0
        %v775 = vsel %vm475, -1e+30, %v769
        %v776 = vsel %vm476, -1e+30, %v772
        %vm777 = vcmask 130048
        %v778 = vsel %vm777, %v775, -inf
        %779 = vmax.xlane.f32.xlu0 %v778
        %v780 = vpop.xlane.xlu0 %779
        %v781 = vsel %vm777, %v776, -inf
        %782 = vmax.xlane.f32.xlu0 %v781
        %v783 = vpop.xlane.xlu0 %782
        %v784 = vsub.f32 %v775, %v780
        %v785 = vsub.f32 %v776, %v783
        %v786 = vmul.f32 %v784, 1.442695
        %v787 = vpow.pop %v786
        %v788 = vmul.f32 %v785, 1.442695
        %v789 = vpow.pop %v788
        %v790 = vsel %vm777, %v787, 0.0
        %791 = vadd.xlane.f32.xlu0 %v790
        %v792 = vpop.xlane.xlu0 %791
        %v793 = vsel %vm777, %v789, 0.0
        %794 = vadd.xlane.f32.xlu0 %v793
        %v795 = vpop.xlane.xlu0 %794
        %v796 = vrcp.pop %v792
        %v797 = vrcp.pop %v795
        %v798 = vmul.f32 %v787, %v796
        %v799 = vmul.f32 %v789, %v797
        %v800 = vpack.c.bf16 %v799, %v798
        %801 = vxpose.xlu0.c.b16.start [1/8] %v800, 128
        %802 = vxpose.xlu0.c.b16.cont [2/8] 0, 128
        %803 = vxpose.xlu0.c.b16.cont [3/8] 0, 128
        %804 = vxpose.xlu0.c.b16.cont [4/8] 0, 128
        %805 = vxpose.xlu0.c.b16.cont [5/8] 0, 128
        %806 = vxpose.xlu0.c.b16.cont [6/8] 0, 128
        %807 = vxpose.xlu0.c.b16.cont [7/8] 0, 128
        %808 = vxpose.xlu0.c.b16.end [8/8] 0, 128
        %v809 = vpop.trf.xlu0
        %v810 = vpop.trf.xlu0
        %v811 = vpop.trf.xlu0
        %v812 = vpop.trf.xlu0
        %v813 = vpop.trf.xlu0
        %v814 = vpop.trf.xlu0
        %v815 = vpop.trf.xlu0
        %v816 = vpop.trf.xlu0
        %v818 = vsel %vm777, %v809, 0
        %820 = vmatprep.subr.bf16.mxu0 0
        %821 = vmatpush1.bf16.msra.mxu0 %v725
        %822 = vmatprep.subr.bf16.mxu0 0
        %823 = vmatpush1.bf16.msra.mxu0 0
        %824 = vmatprep.subr.bf16.mxu0 0
        %825 = vmatpush1.bf16.msra.mxu0 0
        %826 = vmatprep.subr.bf16.mxu0 0
        %827 = vmatpush1.bf16.msra.mxu0 0
        %828 = vmatprep.subr.bf16.mxu0 0
        %829 = vmatpush1.bf16.msra.mxu0 0
        %830 = vmatprep.subr.bf16.mxu0 0
        %831 = vmatpush1.bf16.msra.mxu0 0
        %832 = vmatprep.subr.bf16.mxu0 0
        %833 = vmatpush1.bf16.msra.mxu0 0
        %834 = vmatprep.subr.bf16.mxu0 0
        %835 = vmatpush1.bf16.msra.mxu0 0
        %836 = vmatprep.subr.bf16.mxu0 0
        %837 = vmatpush1.bf16.msra.mxu0 0
        %838 = vmatprep.subr.bf16.mxu0 0
        %839 = vmatpush1.bf16.msra.mxu0 0
        %840 = vmatprep.subr.bf16.mxu0 0
        %841 = vmatpush1.bf16.msra.mxu0 0
        %842 = vmatprep.subr.bf16.mxu0 0
        %843 = vmatpush1.bf16.msra.mxu0 0
        %844 = vmatprep.subr.bf16.mxu0 0
        %845 = vmatpush1.bf16.msra.mxu0 0
        %846 = vmatprep.subr.bf16.mxu0 0
        %847 = vmatpush1.bf16.msra.mxu0 0
        %848 = vmatprep.subr.bf16.mxu0 0
        %849 = vmatpush1.bf16.msra.mxu0 0
        %850 = vmatprep.subr.bf16.mxu0 0
        %851 = vmatpush1.bf16.msra.mxu0 0
        %852 = vmatprep.mubr.bf16.mxu0 0
        %853 = vmatmul.mubr.bf16.gmra.mrb[0].mxu0 %v818
        %v854 = vpop.f32.mrb[0].mxu0
        %v855 = vadd.f32 0.0, %v854
        %v856 = vpop.f32.mrb[0].mxu0
        %v857 = vpop.f32.mrb[0].mxu0
        %v858 = vadd.f32 0.0, %v857
        %v859 = vpop.f32.mrb[0].mxu0
        %860 = vdwg.mxu0
        %861 = vxpose.xlu0.b32.start [1/16] %v798, 128
        %862 = vxpose.xlu0.b32.cont [2/16] %v799, 128
        %863 = vxpose.xlu0.b32.cont [3/16] 0.0, 128
        %864 = vxpose.xlu0.b32.cont [4/16] 0.0, 128
        %865 = vxpose.xlu0.b32.cont [5/16] 0.0, 128
        %866 = vxpose.xlu0.b32.cont [6/16] 0.0, 128
        %867 = vxpose.xlu0.b32.cont [7/16] 0.0, 128
        %868 = vxpose.xlu0.b32.cont [8/16] 0.0, 128
        %869 = vxpose.xlu0.b32.cont [9/16] 0.0, 128
        %870 = vxpose.xlu0.b32.cont [10/16] 0.0, 128
        %871 = vxpose.xlu0.b32.cont [11/16] 0.0, 128
        %872 = vxpose.xlu0.b32.cont [12/16] 0.0, 128
        %873 = vxpose.xlu0.b32.cont [13/16] 0.0, 128
        %874 = vxpose.xlu0.b32.cont [14/16] 0.0, 128
        %875 = vxpose.xlu0.b32.cont [15/16] 0.0, 128
        %876 = vxpose.xlu0.b32.end [16/16] 0.0, 128
        %v877 = vpop.trf.xlu0
        %v878 = vpop.trf.xlu0
        %v879 = vpop.trf.xlu0
        %v880 = vpop.trf.xlu0
        %v881 = vpop.trf.xlu0
        %v882 = vpop.trf.xlu0
        %v883 = vpop.trf.xlu0
        %v884 = vpop.trf.xlu0
        %v885 = vpop.trf.xlu0
        %v886 = vpop.trf.xlu0
        %v887 = vpop.trf.xlu0
        %v888 = vpop.trf.xlu0
        %v889 = vpop.trf.xlu0
        %v890 = vpop.trf.xlu0
        %v891 = vpop.trf.xlu0
        %v892 = vpop.trf.xlu0
        %v894 = vsel %vm777, %v877, 0
        %v897 = vsel %vm777, %v878, 0
        %899 = vmatprep.subr.mxu0 0.0
        %900 = vmatpush1.msra.mxu0 1.0
        %901 = vmatprep.subr.mxu0 0.0
        %902 = vmatpush1.msra.mxu0 1.0
        %903 = vmatprep.subr.mxu0 0.0
        %904 = vmatpush1.msra.mxu0 0.0
        %905 = vmatprep.subr.mxu0 0.0
        %906 = vmatpush1.msra.mxu0 0.0
        %907 = vmatprep.subr.mxu0 0.0
        %908 = vmatpush1.msra.mxu0 0.0
        %909 = vmatprep.subr.mxu0 0.0
        %910 = vmatpush1.msra.mxu0 0.0
        %911 = vmatprep.subr.mxu0 0.0
        %912 = vmatpush1.msra.mxu0 0.0
        %913 = vmatprep.subr.mxu0 0.0
        %914 = vmatpush1.msra.mxu0 0.0
        %915 = vmatprep.subr.mxu0 0.0
        %916 = vmatpush1.msra.mxu0 0.0
        %917 = vmatprep.subr.mxu0 0.0
        %918 = vmatpush1.msra.mxu0 0.0
        %919 = vmatprep.subr.mxu0 0.0
        %920 = vmatpush1.msra.mxu0 0.0
        %921 = vmatprep.subr.mxu0 0.0
        %922 = vmatpush1.msra.mxu0 0.0
        %923 = vmatprep.subr.mxu0 0.0
        %924 = vmatpush1.msra.mxu0 0.0
        %925 = vmatprep.subr.mxu0 0.0
        %926 = vmatpush1.msra.mxu0 0.0
        %927 = vmatprep.subr.mxu0 0.0
        %928 = vmatpush1.msra.mxu0 0.0
        %929 = vmatprep.subr.mxu0 0.0
        %930 = vmatpush1.msra.mxu0 0.0
        %931 = vmatprep.subr.mxu0 0.0
        %932 = vmatpush1.msra.mxu0 0.0
        %933 = vmatprep.subr.mxu0 0.0
        %934 = vmatpush1.msra.mxu0 0.0
        %935 = vmatprep.subr.mxu0 0.0
        %936 = vmatpush1.msra.mxu0 0.0
        %937 = vmatprep.subr.mxu0 0.0
        %938 = vmatpush1.msra.mxu0 0.0
        %939 = vmatprep.subr.mxu0 0.0
        %940 = vmatpush1.msra.mxu0 0.0
        %941 = vmatprep.subr.mxu0 0.0
        %942 = vmatpush1.msra.mxu0 0.0
        %943 = vmatprep.subr.mxu0 0.0
        %944 = vmatpush1.msra.mxu0 0.0
        %945 = vmatprep.subr.mxu0 0.0
        %946 = vmatpush1.msra.mxu0 0.0
        %947 = vmatprep.subr.mxu0 0.0
        %948 = vmatpush1.msra.mxu0 0.0
        %949 = vmatprep.subr.mxu0 0.0
        %950 = vmatpush1.msra.mxu0 0.0
        %951 = vmatprep.subr.mxu0 0.0
        %952 = vmatpush1.msra.mxu0 0.0
        %953 = vmatprep.subr.mxu0 0.0
        %954 = vmatpush1.msra.mxu0 0.0
        %955 = vmatprep.subr.mxu0 0.0
        %956 = vmatpush1.msra.mxu0 0.0
        %957 = vmatprep.subr.mxu0 0.0
        %958 = vmatpush1.msra.mxu0 0.0
        %959 = vmatprep.subr.mxu0 0.0
        %960 = vmatpush1.msra.mxu0 0.0
        %961 = vmatprep.subr.mxu0 0.0
        %962 = vmatpush1.msra.mxu0 0.0
        %963 = vmatprep.mubr.f32.mxu0 0.0
        %964 = vmatmul.mubr.f32.gmra.mrb[0].mxu0 %v894
        %v965 = vpop.f32.mrb[0].mxu0
        %v966 = vadd.f32 0.0, %v965
        %v967 = vpop.f32.mrb[0].mxu0
        %968 = vmatprep.mubr.f32.mxu0 0.0
        %969 = vmatmul.mubr.f32.gmra.mrb[0].mxu0 %v897
        %v970 = vpop.f32.mrb[0].mxu0
        %v971 = vadd.f32 0.0, %v970
        %v972 = vpop.f32.mrb[0].mxu0
        %973 = vdwg.mxu0
        %vm974 = vcmask 7168
        %v975 = vsel %vm974, %v966, -inf
        %v976 = vsel %vm974, %v971, -inf
        %v977 = vmax.f32 %v975, %v976
        %v978 = vrot.slane %v977, 4
        %v979 = vmax.f32 %v977, %v978
        %v980 = vrot.slane %v979, 2
        %v981 = vmax.f32 %v979, %v980
        %v982 = vrot.slane %v981, 1
        %v983 = vmax.f32 %v981, %v982
        %v984 = vsub.f32 %v966, %v983
        %v985 = vsub.f32 %v971, %v983
        %v986 = vmul.f32 %v984, 1.442695
        %v987 = vpow.pop %v986
        %v988 = vmul.f32 %v985, 1.442695
        %v989 = vpow.pop %v988
        %v990 = vsel %vm974, %v987, 0.0
        %v991 = vsel %vm974, %v989, 0.0
        %v992 = vadd.f32 %v990, %v991
        %v993 = vrot.slane %v992, 4
        %v994 = vadd.f32 %v992, %v993
        %v995 = vrot.slane %v994, 2
        %v996 = vadd.f32 %v994, %v995
        %v997 = vrot.slane %v996, 1
        %v998 = vadd.f32 %v996, %v997
        %v999 = vrcp.pop %v998
        %v1000 = vmul.f32 %v987, %v999
        %v1001 = vmul.f32 %v989, %v999
        %1002 = vst.msk [vmem:[#allocation2] sm:$0xff] %vm541, %v855
        %1003 = vst.msk [vmem:[#allocation2 + $0x8] sm:$0xff] %vm541, %v858
        %1005 = vset.pattern.permute.xlu0 0
        %1006 = vperm.xlu0 %1005, %v1000
        %v1007 = vpop.permute.xlu0 %1006
        %1010 = vset.pattern.permute.xlu0 0
        %1011 = vperm.xlu0 %1010, %v1001
        %v1012 = vpop.permute.xlu0 %1011
        %v1014 = vmul.f32 %v1007, %v527
        %v1015 = vmul.f32 %v1012, %v528
        %v1016 = vadd.f32 %v527, %v1014
        %v1017 = vadd.f32 %v528, %v1015
        %1018 = vst.msk [vmem:[#allocation3] sm:$0xff] %vm541, %v1016
        %1019 = vst.msk [vmem:[#allocation3 + $0x8] sm:$0xff] %vm541, %v1017
        %v1021 = vsel %vm727, %v724, 0
        %v1024 = vsel %vm727, %v722, 0
        %1026 = vmatprep.subr.bf16.mxu0 0
        %1027 = vmatpush1.bf16.xpose.msra.mxu0 %v1024
        %1028 = vmatprep.subr.bf16.mxu0 0
        %1029 = vmatpush1.bf16.xpose.msra.mxu0 0
        %1030 = vmatprep.subr.bf16.mxu0 0
        %1031 = vmatpush1.bf16.xpose.msra.mxu0 0
        %1032 = vmatprep.subr.bf16.mxu0 0
        %1033 = vmatpush1.bf16.xpose.msra.mxu0 0
        %1034 = vmatprep.subr.bf16.mxu0 0
        %1035 = vmatpush1.bf16.xpose.msra.mxu0 0
        %1036 = vmatprep.subr.bf16.mxu0 0
        %1037 = vmatpush1.bf16.xpose.msra.mxu0 0
        %1038 = vmatprep.subr.bf16.mxu0 0
        %1039 = vmatpush1.bf16.xpose.msra.mxu0 0
        %1040 = vmatprep.subr.bf16.mxu0 0
        %1041 = vmatpush1.bf16.xpose.msra.mxu0 0
        %1042 = vmatprep.subr.bf16.mxu0 0
        %1043 = vmatpush1.bf16.xpose.msra.mxu0 0
        %1044 = vmatprep.subr.bf16.mxu0 0
        %1045 = vmatpush1.bf16.xpose.msra.mxu0 0
        %1046 = vmatprep.subr.bf16.mxu0 0
        %1047 = vmatpush1.bf16.xpose.msra.mxu0 0
        %1048 = vmatprep.subr.bf16.mxu0 0
        %1049 = vmatpush1.bf16.xpose.msra.mxu0 0
        %1050 = vmatprep.subr.bf16.mxu0 0
        %1051 = vmatpush1.bf16.xpose.msra.mxu0 0
        %1052 = vmatprep.subr.bf16.mxu0 0
        %1053 = vmatpush1.bf16.xpose.msra.mxu0 0
        %1054 = vmatprep.subr.bf16.mxu0 0
        %1055 = vmatpush1.bf16.xpose.msra.mxu0 0
        %1056 = vmatprep.subr.bf16.mxu0 0
        %1057 = vmatpush1.bf16.xpose.msra.mxu0 0
        %1058 = vmatprep.mubr.bf16.mxu0 0
        %1059 = vmatmul.mubr.bf16.gmra.mrb[0].mxu0 %v1021
        %v1060 = vpop.f32.mrb[0].mxu0
        %v1061 = vadd.f32 0.0, %v1060
        %v1062 = vpop.f32.mrb[0].mxu0
        %v1063 = vpop.f32.mrb[0].mxu0
        %v1064 = vadd.f32 0.0, %v1063
        %v1065 = vpop.f32.mrb[0].mxu0
        %1066 = vdwg.mxu0
        %v1067 = vsel %vm475, -1e+30, %v1061
        %v1068 = vsel %vm476, -1e+30, %v1064
        %v1069 = vsel %vm777, %v1067, -inf
        %1070 = vmax.xlane.f32.xlu0 %v1069
        %v1071 = vpop.xlane.xlu0 %1070
        %v1072 = vsel %vm777, %v1068, -inf
        %1073 = vmax.xlane.f32.xlu0 %v1072
        %v1074 = vpop.xlane.xlu0 %1073
        %v1075 = vsub.f32 %v1067, %v1071
        %v1076 = vsub.f32 %v1068, %v1074
        %v1077 = vmul.f32 %v1075, 1.442695
        %v1078 = vpow.pop %v1077
        %v1079 = vmul.f32 %v1076, 1.442695
        %v1080 = vpow.pop %v1079
        %v1081 = vsel %vm777, %v1078, 0.0
        %1082 = vadd.xlane.f32.xlu0 %v1081
        %v1083 = vpop.xlane.xlu0 %1082
        %v1084 = vsel %vm777, %v1080, 0.0
        %1085 = vadd.xlane.f32.xlu0 %v1084
        %v1086 = vpop.xlane.xlu0 %1085
        %v1087 = vrcp.pop %v1083
        %v1088 = vrcp.pop %v1086
        %v1089 = vmul.f32 %v1078, %v1087
        %v1090 = vmul.f32 %v1080, %v1088
        %v1091 = vpack.c.bf16 %v1090, %v1089
        %1092 = vxpose.xlu0.c.b16.start [1/8] %v1091, 128
        %1093 = vxpose.xlu0.c.b16.cont [2/8] 0, 128
        %1094 = vxpose.xlu0.c.b16.cont [3/8] 0, 128
        %1095 = vxpose.xlu0.c.b16.cont [4/8] 0, 128
        %1096 = vxpose.xlu0.c.b16.cont [5/8] 0, 128
        %1097 = vxpose.xlu0.c.b16.cont [6/8] 0, 128
        %1098 = vxpose.xlu0.c.b16.cont [7/8] 0, 128
        %1099 = vxpose.xlu0.c.b16.end [8/8] 0, 128
        %v1100 = vpop.trf.xlu0
        %v1101 = vpop.trf.xlu0
        %v1102 = vpop.trf.xlu0
        %v1103 = vpop.trf.xlu0
        %v1104 = vpop.trf.xlu0
        %v1105 = vpop.trf.xlu0
        %v1106 = vpop.trf.xlu0
        %v1107 = vpop.trf.xlu0
        %v1109 = vsel %vm777, %v1100, 0
        %1111 = vmatprep.subr.bf16.mxu0 0
        %1112 = vmatpush1.bf16.msra.mxu0 %v726
        %1113 = vmatprep.subr.bf16.mxu0 0
        %1114 = vmatpush1.bf16.msra.mxu0 0
        %1115 = vmatprep.subr.bf16.mxu0 0
        %1116 = vmatpush1.bf16.msra.mxu0 0
        %1117 = vmatprep.subr.bf16.mxu0 0
        %1118 = vmatpush1.bf16.msra.mxu0 0
        %1119 = vmatprep.subr.bf16.mxu0 0
        %1120 = vmatpush1.bf16.msra.mxu0 0
        %1121 = vmatprep.subr.bf16.mxu0 0
        %1122 = vmatpush1.bf16.msra.mxu0 0
        %1123 = vmatprep.subr.bf16.mxu0 0
        %1124 = vmatpush1.bf16.msra.mxu0 0
        %1125 = vmatprep.subr.bf16.mxu0 0
        %1126 = vmatpush1.bf16.msra.mxu0 0
        %1127 = vmatprep.subr.bf16.mxu0 0
        %1128 = vmatpush1.bf16.msra.mxu0 0
        %1129 = vmatprep.subr.bf16.mxu0 0
        %1130 = vmatpush1.bf16.msra.mxu0 0
        %1131 = vmatprep.subr.bf16.mxu0 0
        %1132 = vmatpush1.bf16.msra.mxu0 0
        %1133 = vmatprep.subr.bf16.mxu0 0
        %1134 = vmatpush1.bf16.msra.mxu0 0
        %1135 = vmatprep.subr.bf16.mxu0 0
        %1136 = vmatpush1.bf16.msra.mxu0 0
        %1137 = vmatprep.subr.bf16.mxu0 0
        %1138 = vmatpush1.bf16.msra.mxu0 0
        %1139 = vmatprep.subr.bf16.mxu0 0
        %1140 = vmatpush1.bf16.msra.mxu0 0
        %1141 = vmatprep.subr.bf16.mxu0 0
        %1142 = vmatpush1.bf16.msra.mxu0 0
        %1143 = vmatprep.mubr.bf16.mxu0 0
        %1144 = vmatmul.mubr.bf16.gmra.mrb[0].mxu0 %v1109
        %v1145 = vpop.f32.mrb[0].mxu0
        %v1146 = vadd.f32 0.0, %v1145
        %v1147 = vpop.f32.mrb[0].mxu0
        %v1148 = vpop.f32.mrb[0].mxu0
        %v1149 = vadd.f32 0.0, %v1148
        %v1150 = vpop.f32.mrb[0].mxu0
        %1151 = vdwg.mxu0
        %1152 = vxpose.xlu0.b32.start [1/16] %v1089, 128
        %1153 = vxpose.xlu0.b32.cont [2/16] %v1090, 128
        %1154 = vxpose.xlu0.b32.cont [3/16] 0.0, 128
        %1155 = vxpose.xlu0.b32.cont [4/16] 0.0, 128
        %1156 = vxpose.xlu0.b32.cont [5/16] 0.0, 128
        %1157 = vxpose.xlu0.b32.cont [6/16] 0.0, 128
        %1158 = vxpose.xlu0.b32.cont [7/16] 0.0, 128
        %1159 = vxpose.xlu0.b32.cont [8/16] 0.0, 128
        %1160 = vxpose.xlu0.b32.cont [9/16] 0.0, 128
        %1161 = vxpose.xlu0.b32.cont [10/16] 0.0, 128
        %1162 = vxpose.xlu0.b32.cont [11/16] 0.0, 128
        %1163 = vxpose.xlu0.b32.cont [12/16] 0.0, 128
        %1164 = vxpose.xlu0.b32.cont [13/16] 0.0, 128
        %1165 = vxpose.xlu0.b32.cont [14/16] 0.0, 128
        %1166 = vxpose.xlu0.b32.cont [15/16] 0.0, 128
        %1167 = vxpose.xlu0.b32.end [16/16] 0.0, 128
        %v1168 = vpop.trf.xlu0
        %v1169 = vpop.trf.xlu0
        %v1170 = vpop.trf.xlu0
        %v1171 = vpop.trf.xlu0
        %v1172 = vpop.trf.xlu0
        %v1173 = vpop.trf.xlu0
        %v1174 = vpop.trf.xlu0
        %v1175 = vpop.trf.xlu0
        %v1176 = vpop.trf.xlu0
        %v1177 = vpop.trf.xlu0
        %v1178 = vpop.trf.xlu0
        %v1179 = vpop.trf.xlu0
        %v1180 = vpop.trf.xlu0
        %v1181 = vpop.trf.xlu0
        %v1182 = vpop.trf.xlu0
        %v1183 = vpop.trf.xlu0
        %v1185 = vsel %vm777, %v1168, 0
        %v1188 = vsel %vm777, %v1169, 0
        %1190 = vmatprep.subr.mxu0 0.0
        %1191 = vmatpush1.msra.mxu0 1.0
        %1192 = vmatprep.subr.mxu0 0.0
        %1193 = vmatpush1.msra.mxu0 1.0
        %1194 = vmatprep.subr.mxu0 0.0
        %1195 = vmatpush1.msra.mxu0 0.0
        %1196 = vmatprep.subr.mxu0 0.0
        %1197 = vmatpush1.msra.mxu0 0.0
        %1198 = vmatprep.subr.mxu0 0.0
        %1199 = vmatpush1.msra.mxu0 0.0
        %1200 = vmatprep.subr.mxu0 0.0
        %1201 = vmatpush1.msra.mxu0 0.0
        %1202 = vmatprep.subr.mxu0 0.0
        %1203 = vmatpush1.msra.mxu0 0.0
        %1204 = vmatprep.subr.mxu0 0.0
        %1205 = vmatpush1.msra.mxu0 0.0
        %1206 = vmatprep.subr.mxu0 0.0
        %1207 = vmatpush1.msra.mxu0 0.0
        %1208 = vmatprep.subr.mxu0 0.0
        %1209 = vmatpush1.msra.mxu0 0.0
        %1210 = vmatprep.subr.mxu0 0.0
        %1211 = vmatpush1.msra.mxu0 0.0
        %1212 = vmatprep.subr.mxu0 0.0
        %1213 = vmatpush1.msra.mxu0 0.0
        %1214 = vmatprep.subr.mxu0 0.0
        %1215 = vmatpush1.msra.mxu0 0.0
        %1216 = vmatprep.subr.mxu0 0.0
        %1217 = vmatpush1.msra.mxu0 0.0
        %1218 = vmatprep.subr.mxu0 0.0
        %1219 = vmatpush1.msra.mxu0 0.0
        %1220 = vmatprep.subr.mxu0 0.0
        %1221 = vmatpush1.msra.mxu0 0.0
        %1222 = vmatprep.subr.mxu0 0.0
        %1223 = vmatpush1.msra.mxu0 0.0
        %1224 = vmatprep.subr.mxu0 0.0
        %1225 = vmatpush1.msra.mxu0 0.0
        %1226 = vmatprep.subr.mxu0 0.0
        %1227 = vmatpush1.msra.mxu0 0.0
        %1228 = vmatprep.subr.mxu0 0.0
        %1229 = vmatpush1.msra.mxu0 0.0
        %1230 = vmatprep.subr.mxu0 0.0
        %1231 = vmatpush1.msra.mxu0 0.0
        %1232 = vmatprep.subr.mxu0 0.0
        %1233 = vmatpush1.msra.mxu0 0.0
        %1234 = vmatprep.subr.mxu0 0.0
        %1235 = vmatpush1.msra.mxu0 0.0
        %1236 = vmatprep.subr.mxu0 0.0
        %1237 = vmatpush1.msra.mxu0 0.0
        %1238 = vmatprep.subr.mxu0 0.0
        %1239 = vmatpush1.msra.mxu0 0.0
        %1240 = vmatprep.subr.mxu0 0.0
        %1241 = vmatpush1.msra.mxu0 0.0
        %1242 = vmatprep.subr.mxu0 0.0
        %1243 = vmatpush1.msra.mxu0 0.0
        %1244 = vmatprep.subr.mxu0 0.0
        %1245 = vmatpush1.msra.mxu0 0.0
        %1246 = vmatprep.subr.mxu0 0.0
        %1247 = vmatpush1.msra.mxu0 0.0
        %1248 = vmatprep.subr.mxu0 0.0
        %1249 = vmatpush1.msra.mxu0 0.0
        %1250 = vmatprep.subr.mxu0 0.0
        %1251 = vmatpush1.msra.mxu0 0.0
        %1252 = vmatprep.subr.mxu0 0.0
        %1253 = vmatpush1.msra.mxu0 0.0
        %1254 = vmatprep.mubr.f32.mxu0 0.0
        %1255 = vmatmul.mubr.f32.gmra.mrb[0].mxu0 %v1185
        %v1256 = vpop.f32.mrb[0].mxu0
        %v1257 = vadd.f32 0.0, %v1256
        %v1258 = vpop.f32.mrb[0].mxu0
        %1259 = vmatprep.mubr.f32.mxu0 0.0
        %1260 = vmatmul.mubr.f32.gmra.mrb[0].mxu0 %v1188
        %v1261 = vpop.f32.mrb[0].mxu0
        %v1262 = vadd.f32 0.0, %v1261
        %v1263 = vpop.f32.mrb[0].mxu0
        %1264 = vdwg.mxu0
        %v1265 = vsel %vm974, %v1257, -inf
        %v1266 = vsel %vm974, %v1262, -inf
        %v1267 = vmax.f32 %v1265, %v1266
        %v1268 = vrot.slane %v1267, 4
        %v1269 = vmax.f32 %v1267, %v1268
        %v1270 = vrot.slane %v1269, 2
        %v1271 = vmax.f32 %v1269, %v1270
        %v1272 = vrot.slane %v1271, 1
        %v1273 = vmax.f32 %v1271, %v1272
        %v1274 = vsub.f32 %v1257, %v1273
        %v1275 = vsub.f32 %v1262, %v1273
        %v1276 = vmul.f32 %v1274, 1.442695
        %v1277 = vpow.pop %v1276
        %v1278 = vmul.f32 %v1275, 1.442695
        %v1279 = vpow.pop %v1278
        %v1280 = vsel %vm974, %v1277, 0.0
        %v1281 = vsel %vm974, %v1279, 0.0
        %v1282 = vadd.f32 %v1280, %v1281
        %v1283 = vrot.slane %v1282, 4
        %v1284 = vadd.f32 %v1282, %v1283
        %v1285 = vrot.slane %v1284, 2
        %v1286 = vadd.f32 %v1284, %v1285
        %v1287 = vrot.slane %v1286, 1
        %v1288 = vadd.f32 %v1286, %v1287
        %v1289 = vrcp.pop %v1288
        %v1290 = vmul.f32 %v1277, %v1289
        %v1291 = vmul.f32 %v1279, %v1289
        %1292 = vst.msk [vmem:[#allocation2 + $0x10] sm:$0xff] %vm541, %v1146
        %1293 = vst.msk [vmem:[#allocation2 + $0x18] sm:$0xff] %vm541, %v1149
        %1295 = vset.pattern.permute.xlu0 0
        %1296 = vperm.xlu0 %1295, %v1290
        %v1297 = vpop.permute.xlu0 %1296
        %1300 = vset.pattern.permute.xlu0 0
        %1301 = vperm.xlu0 %1300, %v1291
        %v1302 = vpop.permute.xlu0 %1301
        %v1304 = vmul.f32 %v1297, %v529
        %v1305 = vmul.f32 %v1302, %v530
        %v1306 = vadd.f32 %v529, %v1304
        %v1307 = vadd.f32 %v530, %v1305
        %1308 = vst.msk [vmem:[#allocation3 + $0x10] sm:$0xff] %vm541, %v1306
        %1309 = vst.msk [vmem:[#allocation3 + $0x18] sm:$0xff] %vm541, %v1307
        %v1310 = vld [vmem:[#allocation2] sm:$0xff]
        %v1311 = vld [vmem:[#allocation2 + $0x8] sm:$0xff]
        %v1312 = vld [vmem:[#allocation2 + $0x10] sm:$0xff]
        %v1313 = vld [vmem:[#allocation2 + $0x18] sm:$0xff]
        %v1314 = vpack.c.bf16 %v1311, %v1310
        %v1315 = vpack.c.bf16 %v1313, %v1312
        %v1316 = vld [vmem:[#allocation16] sm:$0xf]
        %v1317 = vld [vmem:[#allocation18] sm:$0x1]
        %v1319 = vlaneseq
        %v1320 = vshrl.u32 %v1319, 7
        %v1321 = vsub.s32 0, %v1320
        %v1322 = vrot.slane %v1317, %v1321
        %v1325 = vsel %vm541, %v1314, 0
        %v1328 = vsel %vm541, %v1315, 0
        %v1331 = vsel %vm548, %v1316, 0
        %1333 = vmatprep.subr.bf16.mxu0 0
        %1334 = vmatpush1.bf16.msra.mxu0 %v1331
        %1335 = vmatprep.subr.bf16.mxu0 0
        %1336 = vmatpush1.bf16.msra.mxu0 0
        %1337 = vmatprep.subr.bf16.mxu0 0
        %1338 = vmatpush1.bf16.msra.mxu0 0
        %1339 = vmatprep.subr.bf16.mxu0 0
        %1340 = vmatpush1.bf16.msra.mxu0 0
        %1341 = vmatprep.subr.bf16.mxu0 0
        %1342 = vmatpush1.bf16.msra.mxu0 0
        %1343 = vmatprep.subr.bf16.mxu0 0
        %1344 = vmatpush1.bf16.msra.mxu0 0
        %1345 = vmatprep.subr.bf16.mxu0 0
        %1346 = vmatpush1.bf16.msra.mxu0 0
        %1347 = vmatprep.subr.bf16.mxu0 0
        %1348 = vmatpush1.bf16.msra.mxu0 0
        %1349 = vmatprep.subr.bf16.mxu0 0
        %1350 = vmatpush1.bf16.msra.mxu0 0
        %1351 = vmatprep.subr.bf16.mxu0 0
        %1352 = vmatpush1.bf16.msra.mxu0 0
        %1353 = vmatprep.subr.bf16.mxu0 0
        %1354 = vmatpush1.bf16.msra.mxu0 0
        %1355 = vmatprep.subr.bf16.mxu0 0
        %1356 = vmatpush1.bf16.msra.mxu0 0
        %1357 = vmatprep.subr.bf16.mxu0 0
        %1358 = vmatpush1.bf16.msra.mxu0 0
        %1359 = vmatprep.subr.bf16.mxu0 0
        %1360 = vmatpush1.bf16.msra.mxu0 0
        %1361 = vmatprep.subr.bf16.mxu0 0
        %1362 = vmatpush1.bf16.msra.mxu0 0
        %1363 = vmatprep.subr.bf16.mxu0 0
        %1364 = vmatpush1.bf16.msra.mxu0 0
        %1365 = vmatprep.mubr.bf16.mxu0 0
        %1366 = vmatmul.mubr.bf16.gmra.mrb[0].mxu0 %v1325
        %v1367 = vpop.f32.mrb[0].mxu0
        %v1368 = vadd.f32 %v1322, %v1367
        %v1369 = vpop.f32.mrb[0].mxu0
        %v1370 = vpop.f32.mrb[0].mxu0
        %v1371 = vadd.f32 %v1322, %v1370
        %v1372 = vpop.f32.mrb[0].mxu0
        %1373 = vmatprep.mubr.bf16.mxu0 0
        %1374 = vmatmul.mubr.bf16.gmra.mrb[0].mxu0 %v1328
        %v1375 = vpop.f32.mrb[0].mxu0
        %v1376 = vadd.f32 %v1322, %v1375
        %v1377 = vpop.f32.mrb[0].mxu0
        %v1378 = vpop.f32.mrb[0].mxu0
        %v1379 = vadd.f32 %v1322, %v1378
        %v1380 = vpop.f32.mrb[0].mxu0
        %1381 = vdwg.mxu0
        %vm1382 = vcmp.ge.s32.totalorder %v523, 1
        %vm1383 = vcmp.ge.s32.totalorder %v524, 1
        %vm1384 = vcmp.ge.s32.totalorder %v525, 1
        %vm1385 = vcmp.ge.s32.totalorder %v526, 1
        %v1386 = vrot.slane %v1310, 7
        %v1387 = vrot.slane %v1311, 7
        %v1388 = vrot.slane %v1312, 7
        %v1389 = vrot.slane %v1313, 7
        %vm1390 = vcmp.lt.s32.totalorder %v471, 1
        %v1391 = vsel %vm1390, %v1388, %v1389
        %v1392 = vsel %vm1390, %v1387, %v1388
        %v1393 = vsel %vm1390, %v1386, %v1387
        %v1394 = vsel %vm1390, %v1389, %v1386
        %v1395 = vsel %vm1382, 1, 0
        %v1396 = vsel %vm1383, 1, 0
        %v1397 = vsel %vm1384, 1, 0
        %v1398 = vsel %vm1385, 1, 0
        %vm1399 = vcmp.eq.s32.totalorder %v1395, 1
        %vm1400 = vcmp.eq.s32.totalorder %v1396, 1
        %vm1401 = vcmp.eq.s32.totalorder %v1397, 1
        %vm1402 = vcmp.eq.s32.totalorder %v1398, 1
        %v1403 = vsel %vm1399, %v1394, 0.0
        %v1404 = vsel %vm1400, %v1393, 0.0
        %v1405 = vsel %vm1401, %v1392, 0.0
        %v1406 = vsel %vm1402, %v1391, 0.0
        %v1407 = vpack.c.bf16 %v1404, %v1403
        %v1408 = vpack.c.bf16 %v1406, %v1405
        %s1409 = scalar_lea.vmem [#allocation16], 4
        %v1410 = vld [vmem:[%s1409] sm:$0xf]
        %v1412 = vsel %vm541, %v1407, 0
        %v1415 = vsel %vm541, %v1408, 0
        %v1418 = vsel %vm548, %v1410, 0
        %1420 = vmatprep.subr.bf16.mxu0 0
        %1421 = vmatpush1.bf16.msra.mxu0 %v1418
        %1422 = vmatprep.subr.bf16.mxu0 0
        %1423 = vmatpush1.bf16.msra.mxu0 0
        %1424 = vmatprep.subr.bf16.mxu0 0
        %1425 = vmatpush1.bf16.msra.mxu0 0
        %1426 = vmatprep.subr.bf16.mxu0 0
        %1427 = vmatpush1.bf16.msra.mxu0 0
        %1428 = vmatprep.subr.bf16.mxu0 0
        %1429 = vmatpush1.bf16.msra.mxu0 0
        %1430 = vmatprep.subr.bf16.mxu0 0
        %1431 = vmatpush1.bf16.msra.mxu0 0
        %1432 = vmatprep.subr.bf16.mxu0 0
        %1433 = vmatpush1.bf16.msra.mxu0 0
        %1434 = vmatprep.subr.bf16.mxu0 0
        %1435 = vmatpush1.bf16.msra.mxu0 0
        %1436 = vmatprep.subr.bf16.mxu0 0
        %1437 = vmatpush1.bf16.msra.mxu0 0
        %1438 = vmatprep.subr.bf16.mxu0 0
        %1439 = vmatpush1.bf16.msra.mxu0 0
        %1440 = vmatprep.subr.bf16.mxu0 0
        %1441 = vmatpush1.bf16.msra.mxu0 0
        %1442 = vmatprep.subr.bf16.mxu0 0
        %1443 = vmatpush1.bf16.msra.mxu0 0
        %1444 = vmatprep.subr.bf16.mxu0 0
        %1445 = vmatpush1.bf16.msra.mxu0 0
        %1446 = vmatprep.subr.bf16.mxu0 0
        %1447 = vmatpush1.bf16.msra.mxu0 0
        %1448 = vmatprep.subr.bf16.mxu0 0
        %1449 = vmatpush1.bf16.msra.mxu0 0
        %1450 = vmatprep.subr.bf16.mxu0 0
        %1451 = vmatpush1.bf16.msra.mxu0 0
        %1452 = vmatprep.mubr.bf16.mxu0 0
        %1453 = vmatmul.mubr.bf16.gmra.mrb[0].mxu0 %v1412
        %v1454 = vpop.f32.mrb[0].mxu0
        %v1455 = vadd.f32 0.0, %v1454
        %v1456 = vpop.f32.mrb[0].mxu0
        %v1457 = vpop.f32.mrb[0].mxu0
        %v1458 = vadd.f32 0.0, %v1457
        %v1459 = vpop.f32.mrb[0].mxu0
        %1460 = vmatprep.mubr.bf16.mxu0 0
        %1461 = vmatmul.mubr.bf16.gmra.mrb[0].mxu0 %v1415
        %v1462 = vpop.f32.mrb[0].mxu0
        %v1463 = vadd.f32 0.0, %v1462
        %v1464 = vpop.f32.mrb[0].mxu0
        %v1465 = vpop.f32.mrb[0].mxu0
        %v1466 = vadd.f32 0.0, %v1465
        %v1467 = vpop.f32.mrb[0].mxu0
        %1468 = vdwg.mxu0
        %v1469 = vadd.f32 %v1368, %v1455
        %v1470 = vadd.f32 %v1371, %v1458
        %v1471 = vadd.f32 %v1376, %v1463
        %v1472 = vadd.f32 %v1379, %v1466
        %vm1473 = vcmp.ge.s32.totalorder %v523, 2
        %vm1474 = vcmp.ge.s32.totalorder %v524, 2
        %vm1475 = vcmp.ge.s32.totalorder %v525, 2
        %vm1476 = vcmp.ge.s32.totalorder %v526, 2
        %v1477 = vrot.slane %v1310, 6
        %v1478 = vrot.slane %v1311, 6
        %v1479 = vrot.slane %v1312, 6
        %v1480 = vrot.slane %v1313, 6
        %vm1481 = vcmp.lt.s32.totalorder %v471, 2
        %v1482 = vsel %vm1481, %v1479, %v1480
        %v1483 = vsel %vm1481, %v1478, %v1479
        %v1484 = vsel %vm1481, %v1477, %v1478
        %v1485 = vsel %vm1481, %v1480, %v1477
        %v1486 = vsel %vm1473, 1, 0
        %v1487 = vsel %vm1474, 1, 0
        %v1488 = vsel %vm1475, 1, 0
        %v1489 = vsel %vm1476, 1, 0
        %vm1490 = vcmp.eq.s32.totalorder %v1486, 1
        %vm1491 = vcmp.eq.s32.totalorder %v1487, 1
        %vm1492 = vcmp.eq.s32.totalorder %v1488, 1
        %vm1493 = vcmp.eq.s32.totalorder %v1489, 1
        %v1494 = vsel %vm1490, %v1485, 0.0
        %v1495 = vsel %vm1491, %v1484, 0.0
        %v1496 = vsel %vm1492, %v1483, 0.0
        %v1497 = vsel %vm1493, %v1482, 0.0
        %v1498 = vpack.c.bf16 %v1495, %v1494
        %v1499 = vpack.c.bf16 %v1497, %v1496
        %s1500 = scalar_lea.vmem [#allocation16], 8
        %v1501 = vld [vmem:[%s1500] sm:$0xf]
        %v1503 = vsel %vm541, %v1498, 0
        %v1506 = vsel %vm541, %v1499, 0
        %v1509 = vsel %vm548, %v1501, 0
        %1511 = vmatprep.subr.bf16.mxu0 0
        %1512 = vmatpush1.bf16.msra.mxu0 %v1509
        %1513 = vmatprep.subr.bf16.mxu0 0
        %1514 = vmatpush1.bf16.msra.mxu0 0
        %1515 = vmatprep.subr.bf16.mxu0 0
        %1516 = vmatpush1.bf16.msra.mxu0 0
        %1517 = vmatprep.subr.bf16.mxu0 0
        %1518 = vmatpush1.bf16.msra.mxu0 0
        %1519 = vmatprep.subr.bf16.mxu0 0
        %1520 = vmatpush1.bf16.msra.mxu0 0
        %1521 = vmatprep.subr.bf16.mxu0 0
        %1522 = vmatpush1.bf16.msra.mxu0 0
        %1523 = vmatprep.subr.bf16.mxu0 0
        %1524 = vmatpush1.bf16.msra.mxu0 0
        %1525 = vmatprep.subr.bf16.mxu0 0
        %1526 = vmatpush1.bf16.msra.mxu0 0
        %1527 = vmatprep.subr.bf16.mxu0 0
        %1528 = vmatpush1.bf16.msra.mxu0 0
        %1529 = vmatprep.subr.bf16.mxu0 0
        %1530 = vmatpush1.bf16.msra.mxu0 0
        %1531 = vmatprep.subr.bf16.mxu0 0
        %1532 = vmatpush1.bf16.msra.mxu0 0
        %1533 = vmatprep.subr.bf16.mxu0 0
        %1534 = vmatpush1.bf16.msra.mxu0 0
        %1535 = vmatprep.subr.bf16.mxu0 0
        %1536 = vmatpush1.bf16.msra.mxu0 0
        %1537 = vmatprep.subr.bf16.mxu0 0
        %1538 = vmatpush1.bf16.msra.mxu0 0
        %1539 = vmatprep.subr.bf16.mxu0 0
        %1540 = vmatpush1.bf16.msra.mxu0 0
        %1541 = vmatprep.subr.bf16.mxu0 0
        %1542 = vmatpush1.bf16.msra.mxu0 0
        %1543 = vmatprep.mubr.bf16.mxu0 0
        %1544 = vmatmul.mubr.bf16.gmra.mrb[0].mxu0 %v1503
        %v1545 = vpop.f32.mrb[0].mxu0
        %v1546 = vadd.f32 0.0, %v1545
        %v1547 = vpop.f32.mrb[0].mxu0
        %v1548 = vpop.f32.mrb[0].mxu0
        %v1549 = vadd.f32 0.0, %v1548
        %v1550 = vpop.f32.mrb[0].mxu0
        %1551 = vmatprep.mubr.bf16.mxu0 0
        %1552 = vmatmul.mubr.bf16.gmra.mrb[0].mxu0 %v1506
        %v1553 = vpop.f32.mrb[0].mxu0
        %v1554 = vadd.f32 0.0, %v1553
        %v1555 = vpop.f32.mrb[0].mxu0
        %v1556 = vpop.f32.mrb[0].mxu0
        %v1557 = vadd.f32 0.0, %v1556
        %v1558 = vpop.f32.mrb[0].mxu0
        %1559 = vdwg.mxu0
        %v1560 = vadd.f32 %v1469, %v1546
        %v1561 = vadd.f32 %v1470, %v1549
        %v1562 = vadd.f32 %v1471, %v1554
        %v1563 = vadd.f32 %v1472, %v1557
        %v1564 = vmax.f32 %v1560, 0.0
        %v1565 = vmax.f32 %v1561, 0.0
        %v1566 = vmax.f32 %v1562, 0.0
        %v1567 = vmax.f32 %v1563, 0.0
        %v1568 = vpack.c.bf16 %v1565, %v1564
        %v1569 = vpack.c.bf16 %v1567, %v1566
        %s1570 = scalar_lea.vmem [#allocation16], 12
        %v1571 = vld [vmem:[%s1570] sm:$0xf]
        %s1572 = scalar_lea.vmem [#allocation18], 1
        %v1573 = vld [vmem:[%s1572] sm:$0x1]
        %v1575 = vlaneseq
        %v1576 = vshrl.u32 %v1575, 7
        %v1577 = vsub.s32 0, %v1576
        %v1578 = vrot.slane %v1573, %v1577
        %v1581 = vsel %vm541, %v1568, 0
        %v1584 = vsel %vm541, %v1569, 0
        %v1587 = vsel %vm548, %v1571, 0
        %1589 = vmatprep.subr.bf16.mxu0 0
        %1590 = vmatpush1.bf16.msra.mxu0 %v1587
        %1591 = vmatprep.subr.bf16.mxu0 0
        %1592 = vmatpush1.bf16.msra.mxu0 0
        %1593 = vmatprep.subr.bf16.mxu0 0
        %1594 = vmatpush1.bf16.msra.mxu0 0
        %1595 = vmatprep.subr.bf16.mxu0 0
        %1596 = vmatpush1.bf16.msra.mxu0 0
        %1597 = vmatprep.subr.bf16.mxu0 0
        %1598 = vmatpush1.bf16.msra.mxu0 0
        %1599 = vmatprep.subr.bf16.mxu0 0
        %1600 = vmatpush1.bf16.msra.mxu0 0
        %1601 = vmatprep.subr.bf16.mxu0 0
        %1602 = vmatpush1.bf16.msra.mxu0 0
        %1603 = vmatprep.subr.bf16.mxu0 0
        %1604 = vmatpush1.bf16.msra.mxu0 0
        %1605 = vmatprep.subr.bf16.mxu0 0
        %1606 = vmatpush1.bf16.msra.mxu0 0
        %1607 = vmatprep.subr.bf16.mxu0 0
        %1608 = vmatpush1.bf16.msra.mxu0 0
        %1609 = vmatprep.subr.bf16.mxu0 0
        %1610 = vmatpush1.bf16.msra.mxu0 0
        %1611 = vmatprep.subr.bf16.mxu0 0
        %1612 = vmatpush1.bf16.msra.mxu0 0
        %1613 = vmatprep.subr.bf16.mxu0 0
        %1614 = vmatpush1.bf16.msra.mxu0 0
        %1615 = vmatprep.subr.bf16.mxu0 0
        %1616 = vmatpush1.bf16.msra.mxu0 0
        %1617 = vmatprep.subr.bf16.mxu0 0
        %1618 = vmatpush1.bf16.msra.mxu0 0
        %1619 = vmatprep.subr.bf16.mxu0 0
        %1620 = vmatpush1.bf16.msra.mxu0 0
        %1621 = vmatprep.mubr.bf16.mxu0 0
        %1622 = vmatmul.mubr.bf16.gmra.mrb[0].mxu0 %v1581
        %v1623 = vpop.f32.mrb[0].mxu0
        %v1624 = vadd.f32 %v1578, %v1623
        %v1625 = vpop.f32.mrb[0].mxu0
        %v1626 = vpop.f32.mrb[0].mxu0
        %v1627 = vadd.f32 %v1578, %v1626
        %v1628 = vpop.f32.mrb[0].mxu0
        %1629 = vmatprep.mubr.bf16.mxu0 0
        %1630 = vmatmul.mubr.bf16.gmra.mrb[0].mxu0 %v1584
        %v1631 = vpop.f32.mrb[0].mxu0
        %v1632 = vadd.f32 %v1578, %v1631
        %v1633 = vpop.f32.mrb[0].mxu0
        %v1634 = vpop.f32.mrb[0].mxu0
        %v1635 = vadd.f32 %v1578, %v1634
        %v1636 = vpop.f32.mrb[0].mxu0
        %1637 = vdwg.mxu0
        %v1638 = vrot.slane %v1564, 7
        %v1639 = vrot.slane %v1565, 7
        %v1640 = vrot.slane %v1566, 7
        %v1641 = vrot.slane %v1567, 7
        %v1642 = vsel %vm1390, %v1640, %v1641
        %v1643 = vsel %vm1390, %v1639, %v1640
        %v1644 = vsel %vm1390, %v1638, %v1639
        %v1645 = vsel %vm1390, %v1641, %v1638
        %v1646 = vsel %vm1399, %v1645, 0.0
        %v1647 = vsel %vm1400, %v1644, 0.0
        %v1648 = vsel %vm1401, %v1643, 0.0
        %v1649 = vsel %vm1402, %v1642, 0.0
        %v1650 = vpack.c.bf16 %v1647, %v1646
        %v1651 = vpack.c.bf16 %v1649, %v1648
        %s1652 = scalar_lea.vmem [#allocation16], 16
        %v1653 = vld [vmem:[%s1652] sm:$0xf]
        %v1655 = vsel %vm541, %v1650, 0
        %v1658 = vsel %vm541, %v1651, 0
        %v1661 = vsel %vm548, %v1653, 0
        %1663 = vmatprep.subr.bf16.mxu0 0
        %1664 = vmatpush1.bf16.msra.mxu0 %v1661
        %1665 = vmatprep.subr.bf16.mxu0 0
        %1666 = vmatpush1.bf16.msra.mxu0 0
        %1667 = vmatprep.subr.bf16.mxu0 0
        %1668 = vmatpush1.bf16.msra.mxu0 0
        %1669 = vmatprep.subr.bf16.mxu0 0
        %1670 = vmatpush1.bf16.msra.mxu0 0
        %1671 = vmatprep.subr.bf16.mxu0 0
        %1672 = vmatpush1.bf16.msra.mxu0 0
        %1673 = vmatprep.subr.bf16.mxu0 0
        %1674 = vmatpush1.bf16.msra.mxu0 0
        %1675 = vmatprep.subr.bf16.mxu0 0
        %1676 = vmatpush1.bf16.msra.mxu0 0
        %1677 = vmatprep.subr.bf16.mxu0 0
        %1678 = vmatpush1.bf16.msra.mxu0 0
        %1679 = vmatprep.subr.bf16.mxu0 0
        %1680 = vmatpush1.bf16.msra.mxu0 0
        %1681 = vmatprep.subr.bf16.mxu0 0
        %1682 = vmatpush1.bf16.msra.mxu0 0
        %1683 = vmatprep.subr.bf16.mxu0 0
        %1684 = vmatpush1.bf16.msra.mxu0 0
        %1685 = vmatprep.subr.bf16.mxu0 0
        %1686 = vmatpush1.bf16.msra.mxu0 0
        %1687 = vmatprep.subr.bf16.mxu0 0
        %1688 = vmatpush1.bf16.msra.mxu0 0
        %1689 = vmatprep.subr.bf16.mxu0 0
        %1690 = vmatpush1.bf16.msra.mxu0 0
        %1691 = vmatprep.subr.bf16.mxu0 0
        %1692 = vmatpush1.bf16.msra.mxu0 0
        %1693 = vmatprep.subr.bf16.mxu0 0
        %1694 = vmatpush1.bf16.msra.mxu0 0
        %1695 = vmatprep.mubr.bf16.mxu0 0
        %1696 = vmatmul.mubr.bf16.gmra.mrb[0].mxu0 %v1655
        %v1697 = vpop.f32.mrb[0].mxu0
        %v1698 = vadd.f32 0.0, %v1697
        %v1699 = vpop.f32.mrb[0].mxu0
        %v1700 = vpop.f32.mrb[0].mxu0
        %v1701 = vadd.f32 0.0, %v1700
        %v1702 = vpop.f32.mrb[0].mxu0
        %1703 = vmatprep.mubr.bf16.mxu0 0
        %1704 = vmatmul.mubr.bf16.gmra.mrb[0].mxu0 %v1658
        %v1705 = vpop.f32.mrb[0].mxu0
        %v1706 = vadd.f32 0.0, %v1705
        %v1707 = vpop.f32.mrb[0].mxu0
        %v1708 = vpop.f32.mrb[0].mxu0
        %v1709 = vadd.f32 0.0, %v1708
        %v1710 = vpop.f32.mrb[0].mxu0
        %1711 = vdwg.mxu0
        %v1712 = vadd.f32 %v1624, %v1698
        %v1713 = vadd.f32 %v1627, %v1701
        %v1714 = vadd.f32 %v1632, %v1706
        %v1715 = vadd.f32 %v1635, %v1709
        %v1716 = vrot.slane %v1564, 6
        %v1717 = vrot.slane %v1565, 6
        %v1718 = vrot.slane %v1566, 6
        %v1719 = vrot.slane %v1567, 6
        %v1720 = vsel %vm1481, %v1718, %v1719
        %v1721 = vsel %vm1481, %v1717, %v1718
        %v1722 = vsel %vm1481, %v1716, %v1717
        %v1723 = vsel %vm1481, %v1719, %v1716
        %v1724 = vsel %vm1490, %v1723, 0.0
        %v1725 = vsel %vm1491, %v1722, 0.0
        %v1726 = vsel %vm1492, %v1721, 0.0
        %v1727 = vsel %vm1493, %v1720, 0.0
        %v1728 = vpack.c.bf16 %v1725, %v1724
        %v1729 = vpack.c.bf16 %v1727, %v1726
        %s1730 = scalar_lea.vmem [#allocation16], 20
        %v1731 = vld [vmem:[%s1730] sm:$0xf]
        %v1733 = vsel %vm541, %v1728, 0
        %v1736 = vsel %vm541, %v1729, 0
        %v1739 = vsel %vm548, %v1731, 0
        %1741 = vmatprep.subr.bf16.mxu0 0
        %1742 = vmatpush1.bf16.msra.mxu0 %v1739
        %1743 = vmatprep.subr.bf16.mxu0 0
        %1744 = vmatpush1.bf16.msra.mxu0 0
        %1745 = vmatprep.subr.bf16.mxu0 0
        %1746 = vmatpush1.bf16.msra.mxu0 0
        %1747 = vmatprep.subr.bf16.mxu0 0
        %1748 = vmatpush1.bf16.msra.mxu0 0
        %1749 = vmatprep.subr.bf16.mxu0 0
        %1750 = vmatpush1.bf16.msra.mxu0 0
        %1751 = vmatprep.subr.bf16.mxu0 0
        %1752 = vmatpush1.bf16.msra.mxu0 0
        %1753 = vmatprep.subr.bf16.mxu0 0
        %1754 = vmatpush1.bf16.msra.mxu0 0
        %1755 = vmatprep.subr.bf16.mxu0 0
        %1756 = vmatpush1.bf16.msra.mxu0 0
        %1757 = vmatprep.subr.bf16.mxu0 0
        %1758 = vmatpush1.bf16.msra.mxu0 0
        %1759 = vmatprep.subr.bf16.mxu0 0
        %1760 = vmatpush1.bf16.msra.mxu0 0
        %1761 = vmatprep.subr.bf16.mxu0 0
        %1762 = vmatpush1.bf16.msra.mxu0 0
        %1763 = vmatprep.subr.bf16.mxu0 0
        %1764 = vmatpush1.bf16.msra.mxu0 0
        %1765 = vmatprep.subr.bf16.mxu0 0
        %1766 = vmatpush1.bf16.msra.mxu0 0
        %1767 = vmatprep.subr.bf16.mxu0 0
        %1768 = vmatpush1.bf16.msra.mxu0 0
        %1769 = vmatprep.subr.bf16.mxu0 0
        %1770 = vmatpush1.bf16.msra.mxu0 0
        %1771 = vmatprep.subr.bf16.mxu0 0
        %1772 = vmatpush1.bf16.msra.mxu0 0
        %1773 = vmatprep.mubr.bf16.mxu0 0
        %1774 = vmatmul.mubr.bf16.gmra.mrb[0].mxu0 %v1733
        %v1775 = vpop.f32.mrb[0].mxu0
        %v1776 = vadd.f32 0.0, %v1775
        %v1777 = vpop.f32.mrb[0].mxu0
        %v1778 = vpop.f32.mrb[0].mxu0
        %v1779 = vadd.f32 0.0, %v1778
        %v1780 = vpop.f32.mrb[0].mxu0
        %1781 = vmatprep.mubr.bf16.mxu0 0
        %1782 = vmatmul.mubr.bf16.gmra.mrb[0].mxu0 %v1736
        %v1783 = vpop.f32.mrb[0].mxu0
        %v1784 = vadd.f32 0.0, %v1783
        %v1785 = vpop.f32.mrb[0].mxu0
        %v1786 = vpop.f32.mrb[0].mxu0
        %v1787 = vadd.f32 0.0, %v1786
        %v1788 = vpop.f32.mrb[0].mxu0
        %1789 = vdwg.mxu0
        %v1790 = vadd.f32 %v1712, %v1776
        %v1791 = vadd.f32 %v1713, %v1779
        %v1792 = vadd.f32 %v1714, %v1784
        %v1793 = vadd.f32 %v1715, %v1787
        %v1794 = vmax.f32 %v1790, 0.0
        %v1795 = vmax.f32 %v1791, 0.0
        %v1796 = vmax.f32 %v1792, 0.0
        %v1797 = vmax.f32 %v1793, 0.0
        %v1798 = vld [vmem:[#allocation3] sm:$0xff]
        %v1799 = vld [vmem:[#allocation3 + $0x8] sm:$0xff]
        %v1800 = vld [vmem:[#allocation3 + $0x10] sm:$0xff]
        %v1801 = vld [vmem:[#allocation3 + $0x18] sm:$0xff]
        %v1802 = vadd.f32 %v1794, %v1798
        %v1803 = vadd.f32 %v1795, %v1799
        %v1804 = vadd.f32 %v1796, %v1800
        %v1805 = vadd.f32 %v1797, %v1801
        %v1806 = vmax.f32 %v1802, 0.0
        %v1807 = vmax.f32 %v1803, 0.0
        %v1808 = vmax.f32 %v1804, 0.0
        %v1809 = vmax.f32 %v1805, 0.0
        %v1810 = vpack.c.bf16 %v1807, %v1806
        %v1811 = vpack.c.bf16 %v1809, %v1808
        %s1812 = scalar_lea.vmem [#allocation7], 4
        %v1813 = vld [vmem:[%s1812] sm:$0xf]
        %s1814 = scalar_lea.vmem [#allocation9], 1
        %v1815 = vld [vmem:[%s1814] sm:$0x1]
        %v1817 = vlaneseq
        %v1818 = vshrl.u32 %v1817, 7
        %v1819 = vsub.s32 0, %v1818
        %v1820 = vrot.slane %v1815, %v1819
        %v1823 = vsel %vm541, %v1810, 0
        %v1826 = vsel %vm541, %v1811, 0
        %v1829 = vsel %vm548, %v1813, 0
        %1831 = vmatprep.subr.bf16.mxu0 0
        %1832 = vmatpush1.bf16.msra.mxu0 %v1829
        %1833 = vmatprep.subr.bf16.mxu0 0
        %1834 = vmatpush1.bf16.msra.mxu0 0
        %1835 = vmatprep.subr.bf16.mxu0 0
        %1836 = vmatpush1.bf16.msra.mxu0 0
        %1837 = vmatprep.subr.bf16.mxu0 0
        %1838 = vmatpush1.bf16.msra.mxu0 0
        %1839 = vmatprep.subr.bf16.mxu0 0
        %1840 = vmatpush1.bf16.msra.mxu0 0
        %1841 = vmatprep.subr.bf16.mxu0 0
        %1842 = vmatpush1.bf16.msra.mxu0 0
        %1843 = vmatprep.subr.bf16.mxu0 0
        %1844 = vmatpush1.bf16.msra.mxu0 0
        %1845 = vmatprep.subr.bf16.mxu0 0
        %1846 = vmatpush1.bf16.msra.mxu0 0
        %1847 = vmatprep.subr.bf16.mxu0 0
        %1848 = vmatpush1.bf16.msra.mxu0 0
        %1849 = vmatprep.subr.bf16.mxu0 0
        %1850 = vmatpush1.bf16.msra.mxu0 0
        %1851 = vmatprep.subr.bf16.mxu0 0
        %1852 = vmatpush1.bf16.msra.mxu0 0
        %1853 = vmatprep.subr.bf16.mxu0 0
        %1854 = vmatpush1.bf16.msra.mxu0 0
        %1855 = vmatprep.subr.bf16.mxu0 0
        %1856 = vmatpush1.bf16.msra.mxu0 0
        %1857 = vmatprep.subr.bf16.mxu0 0
        %1858 = vmatpush1.bf16.msra.mxu0 0
        %1859 = vmatprep.subr.bf16.mxu0 0
        %1860 = vmatpush1.bf16.msra.mxu0 0
        %1861 = vmatprep.subr.bf16.mxu0 0
        %1862 = vmatpush1.bf16.msra.mxu0 0
        %1863 = vmatprep.mubr.bf16.mxu0 0
        %1864 = vmatmul.mubr.bf16.gmra.mrb[0].mxu0 %v1823
        %v1865 = vpop.f32.mrb[0].mxu0
        %v1866 = vadd.f32 %v1820, %v1865
        %v1867 = vpop.f32.mrb[0].mxu0
        %v1868 = vpop.f32.mrb[0].mxu0
        %v1869 = vadd.f32 %v1820, %v1868
        %v1870 = vpop.f32.mrb[0].mxu0
        %1871 = vmatprep.mubr.bf16.mxu0 0
        %1872 = vmatmul.mubr.bf16.gmra.mrb[0].mxu0 %v1826
        %v1873 = vpop.f32.mrb[0].mxu0
        %v1874 = vadd.f32 %v1820, %v1873
        %v1875 = vpop.f32.mrb[0].mxu0
        %v1876 = vpop.f32.mrb[0].mxu0
        %v1877 = vadd.f32 %v1820, %v1876
        %v1878 = vpop.f32.mrb[0].mxu0
        %1879 = vdwg.mxu0
        %s1880 = scalar_lea.vmem [#allocation10], 4
        %v1881 = vld [vmem:[%s1880] sm:$0xf]
        %s1882 = scalar_lea.vmem [#allocation12], 1
        %v1883 = vld [vmem:[%s1882] sm:$0x1]
        %v1885 = vlaneseq
        %v1886 = vshrl.u32 %v1885, 7
        %v1887 = vsub.s32 0, %v1886
        %v1888 = vrot.slane %v1883, %v1887
        %v1891 = vsel %vm548, %v1881, 0
        %1893 = vmatprep.subr.bf16.mxu0 0
        %1894 = vmatpush1.bf16.msra.mxu0 %v1891
        %1895 = vmatprep.subr.bf16.mxu0 0
        %1896 = vmatpush1.bf16.msra.mxu0 0
        %1897 = vmatprep.subr.bf16.mxu0 0
        %1898 = vmatpush1.bf16.msra.mxu0 0
        %1899 = vmatprep.subr.bf16.mxu0 0
        %1900 = vmatpush1.bf16.msra.mxu0 0
        %1901 = vmatprep.subr.bf16.mxu0 0
        %1902 = vmatpush1.bf16.msra.mxu0 0
        %1903 = vmatprep.subr.bf16.mxu0 0
        %1904 = vmatpush1.bf16.msra.mxu0 0
        %1905 = vmatprep.subr.bf16.mxu0 0
        %1906 = vmatpush1.bf16.msra.mxu0 0
        %1907 = vmatprep.subr.bf16.mxu0 0
        %1908 = vmatpush1.bf16.msra.mxu0 0
        %1909 = vmatprep.subr.bf16.mxu0 0
        %1910 = vmatpush1.bf16.msra.mxu0 0
        %1911 = vmatprep.subr.bf16.mxu0 0
        %1912 = vmatpush1.bf16.msra.mxu0 0
        %1913 = vmatprep.subr.bf16.mxu0 0
        %1914 = vmatpush1.bf16.msra.mxu0 0
        %1915 = vmatprep.subr.bf16.mxu0 0
        %1916 = vmatpush1.bf16.msra.mxu0 0
        %1917 = vmatprep.subr.bf16.mxu0 0
        %1918 = vmatpush1.bf16.msra.mxu0 0
        %1919 = vmatprep.subr.bf16.mxu0 0
        %1920 = vmatpush1.bf16.msra.mxu0 0
        %1921 = vmatprep.subr.bf16.mxu0 0
        %1922 = vmatpush1.bf16.msra.mxu0 0
        %1923 = vmatprep.subr.bf16.mxu0 0
        %1924 = vmatpush1.bf16.msra.mxu0 0
        %1925 = vmatprep.mubr.bf16.mxu0 0
        %1926 = vmatmul.mubr.bf16.gmra.mrb[0].mxu0 %v1823
        %v1927 = vpop.f32.mrb[0].mxu0
        %v1928 = vadd.f32 %v1888, %v1927
        %v1929 = vpop.f32.mrb[0].mxu0
        %v1930 = vpop.f32.mrb[0].mxu0
        %v1931 = vadd.f32 %v1888, %v1930
        %v1932 = vpop.f32.mrb[0].mxu0
        %1933 = vmatprep.mubr.bf16.mxu0 0
        %1934 = vmatmul.mubr.bf16.gmra.mrb[0].mxu0 %v1826
        %v1935 = vpop.f32.mrb[0].mxu0
        %v1936 = vadd.f32 %v1888, %v1935
        %v1937 = vpop.f32.mrb[0].mxu0
        %v1938 = vpop.f32.mrb[0].mxu0
        %v1939 = vadd.f32 %v1888, %v1938
        %v1940 = vpop.f32.mrb[0].mxu0
        %1941 = vdwg.mxu0
        %s1942 = scalar_lea.vmem [#allocation13], 4
        %v1943 = vld [vmem:[%s1942] sm:$0xf]
        %s1944 = scalar_lea.vmem [#allocation15], 1
        %v1945 = vld [vmem:[%s1944] sm:$0x1]
        %v1947 = vlaneseq
        %v1948 = vshrl.u32 %v1947, 7
        %v1949 = vsub.s32 0, %v1948
        %v1950 = vrot.slane %v1945, %v1949
        %v1953 = vsel %vm548, %v1943, 0
        %1955 = vmatprep.subr.bf16.mxu0 0
        %1956 = vmatpush1.bf16.msra.mxu0 %v1953
        %1957 = vmatprep.subr.bf16.mxu0 0
        %1958 = vmatpush1.bf16.msra.mxu0 0
        %1959 = vmatprep.subr.bf16.mxu0 0
        %1960 = vmatpush1.bf16.msra.mxu0 0
        %1961 = vmatprep.subr.bf16.mxu0 0
        %1962 = vmatpush1.bf16.msra.mxu0 0
        %1963 = vmatprep.subr.bf16.mxu0 0
        %1964 = vmatpush1.bf16.msra.mxu0 0
        %1965 = vmatprep.subr.bf16.mxu0 0
        %1966 = vmatpush1.bf16.msra.mxu0 0
        %1967 = vmatprep.subr.bf16.mxu0 0
        %1968 = vmatpush1.bf16.msra.mxu0 0
        %1969 = vmatprep.subr.bf16.mxu0 0
        %1970 = vmatpush1.bf16.msra.mxu0 0
        %1971 = vmatprep.subr.bf16.mxu0 0
        %1972 = vmatpush1.bf16.msra.mxu0 0
        %1973 = vmatprep.subr.bf16.mxu0 0
        %1974 = vmatpush1.bf16.msra.mxu0 0
        %1975 = vmatprep.subr.bf16.mxu0 0
        %1976 = vmatpush1.bf16.msra.mxu0 0
        %1977 = vmatprep.subr.bf16.mxu0 0
        %1978 = vmatpush1.bf16.msra.mxu0 0
        %1979 = vmatprep.subr.bf16.mxu0 0
        %1980 = vmatpush1.bf16.msra.mxu0 0
        %1981 = vmatprep.subr.bf16.mxu0 0
        %1982 = vmatpush1.bf16.msra.mxu0 0
        %1983 = vmatprep.subr.bf16.mxu0 0
        %1984 = vmatpush1.bf16.msra.mxu0 0
        %1985 = vmatprep.subr.bf16.mxu0 0
        %1986 = vmatpush1.bf16.msra.mxu0 0
        %1987 = vmatprep.mubr.bf16.mxu0 0
        %1988 = vmatmul.mubr.bf16.gmra.mrb[0].mxu0 %v1823
        %v1989 = vpop.f32.mrb[0].mxu0
        %v1990 = vadd.f32 %v1950, %v1989
        %v1991 = vpop.f32.mrb[0].mxu0
        %v1992 = vpop.f32.mrb[0].mxu0
        %v1993 = vadd.f32 %v1950, %v1992
        %v1994 = vpop.f32.mrb[0].mxu0
        %1995 = vmatprep.mubr.bf16.mxu0 0
        %1996 = vmatmul.mubr.bf16.gmra.mrb[0].mxu0 %v1826
        %v1997 = vpop.f32.mrb[0].mxu0
        %v1998 = vadd.f32 %v1950, %v1997
        %v1999 = vpop.f32.mrb[0].mxu0
        %v2000 = vpop.f32.mrb[0].mxu0
        %v2001 = vadd.f32 %v1950, %v2000
        %v2002 = vpop.f32.mrb[0].mxu0
        %2003 = vdwg.mxu0
        %v2004 = vpack.c.bf16 %v1869, %v1866
        %v2005 = vpack.c.bf16 %v1877, %v1874
        %v2006 = vpack.c.bf16 %v1931, %v1928
        %v2007 = vpack.c.bf16 %v1939, %v1936
        %v2008 = vpack.c.bf16 %v1993, %v1990
        %v2009 = vpack.c.bf16 %v2001, %v1998
        %v2011 = vsel %vm727, %v2006, 0
        %v2014 = vsel %vm727, %v2004, 0
        %2016 = vmatprep.subr.bf16.mxu0 0
        %2017 = vmatpush1.bf16.xpose.msra.mxu0 %v2014
        %2018 = vmatprep.subr.bf16.mxu0 0
        %2019 = vmatpush1.bf16.xpose.msra.mxu0 0
        %2020 = vmatprep.subr.bf16.mxu0 0
        %2021 = vmatpush1.bf16.xpose.msra.mxu0 0
        %2022 = vmatprep.subr.bf16.mxu0 0
        %2023 = vmatpush1.bf16.xpose.msra.mxu0 0
        %2024 = vmatprep.subr.bf16.mxu0 0
        %2025 = vmatpush1.bf16.xpose.msra.mxu0 0
        %2026 = vmatprep.subr.bf16.mxu0 0
        %2027 = vmatpush1.bf16.xpose.msra.mxu0 0
        %2028 = vmatprep.subr.bf16.mxu0 0
        %2029 = vmatpush1.bf16.xpose.msra.mxu0 0
        %2030 = vmatprep.subr.bf16.mxu0 0
        %2031 = vmatpush1.bf16.xpose.msra.mxu0 0
        %2032 = vmatprep.subr.bf16.mxu0 0
        %2033 = vmatpush1.bf16.xpose.msra.mxu0 0
        %2034 = vmatprep.subr.bf16.mxu0 0
        %2035 = vmatpush1.bf16.xpose.msra.mxu0 0
        %2036 = vmatprep.subr.bf16.mxu0 0
        %2037 = vmatpush1.bf16.xpose.msra.mxu0 0
        %2038 = vmatprep.subr.bf16.mxu0 0
        %2039 = vmatpush1.bf16.xpose.msra.mxu0 0
        %2040 = vmatprep.subr.bf16.mxu0 0
        %2041 = vmatpush1.bf16.xpose.msra.mxu0 0
        %2042 = vmatprep.subr.bf16.mxu0 0
        %2043 = vmatpush1.bf16.xpose.msra.mxu0 0
        %2044 = vmatprep.subr.bf16.mxu0 0
        %2045 = vmatpush1.bf16.xpose.msra.mxu0 0
        %2046 = vmatprep.subr.bf16.mxu0 0
        %2047 = vmatpush1.bf16.xpose.msra.mxu0 0
        %2048 = vmatprep.mubr.bf16.mxu0 0
        %2049 = vmatmul.mubr.bf16.gmra.mrb[0].mxu0 %v2011
        %v2050 = vpop.f32.mrb[0].mxu0
        %v2051 = vadd.f32 0.0, %v2050
        %v2052 = vpop.f32.mrb[0].mxu0
        %v2053 = vpop.f32.mrb[0].mxu0
        %v2054 = vadd.f32 0.0, %v2053
        %v2055 = vpop.f32.mrb[0].mxu0
        %2056 = vdwg.mxu0
        %v2057 = vsel %vm475, -1e+30, %v2051
        %v2058 = vsel %vm476, -1e+30, %v2054
        %v2059 = vsel %vm777, %v2057, -inf
        %2060 = vmax.xlane.f32.xlu0 %v2059
        %v2061 = vpop.xlane.xlu0 %2060
        %v2062 = vsel %vm777, %v2058, -inf
        %2063 = vmax.xlane.f32.xlu0 %v2062
        %v2064 = vpop.xlane.xlu0 %2063
        %v2065 = vsub.f32 %v2057, %v2061
        %v2066 = vsub.f32 %v2058, %v2064
        %v2067 = vmul.f32 %v2065, 1.442695
        %v2068 = vpow.pop %v2067
        %v2069 = vmul.f32 %v2066, 1.442695
        %v2070 = vpow.pop %v2069
        %v2071 = vsel %vm777, %v2068, 0.0
        %2072 = vadd.xlane.f32.xlu0 %v2071
        %v2073 = vpop.xlane.xlu0 %2072
        %v2074 = vsel %vm777, %v2070, 0.0
        %2075 = vadd.xlane.f32.xlu0 %v2074
        %v2076 = vpop.xlane.xlu0 %2075
        %v2077 = vrcp.pop %v2073
        %v2078 = vrcp.pop %v2076
        %v2079 = vmul.f32 %v2068, %v2077
        %v2080 = vmul.f32 %v2070, %v2078
        %v2081 = vpack.c.bf16 %v2080, %v2079
        %2082 = vxpose.xlu0.c.b16.start [1/8] %v2081, 128
        %2083 = vxpose.xlu0.c.b16.cont [2/8] 0, 128
        %2084 = vxpose.xlu0.c.b16.cont [3/8] 0, 128
        %2085 = vxpose.xlu0.c.b16.cont [4/8] 0, 128
        %2086 = vxpose.xlu0.c.b16.cont [5/8] 0, 128
        %2087 = vxpose.xlu0.c.b16.cont [6/8] 0, 128
        %2088 = vxpose.xlu0.c.b16.cont [7/8] 0, 128
        %2089 = vxpose.xlu0.c.b16.end [8/8] 0, 128
        %v2090 = vpop.trf.xlu0
        %v2091 = vpop.trf.xlu0
        %v2092 = vpop.trf.xlu0
        %v2093 = vpop.trf.xlu0
        %v2094 = vpop.trf.xlu0
        %v2095 = vpop.trf.xlu0
        %v2096 = vpop.trf.xlu0
        %v2097 = vpop.trf.xlu0
        %v2099 = vsel %vm777, %v2090, 0
        %2101 = vmatprep.subr.bf16.mxu0 0
        %2102 = vmatpush1.bf16.msra.mxu0 %v2008
        %2103 = vmatprep.subr.bf16.mxu0 0
        %2104 = vmatpush1.bf16.msra.mxu0 0
        %2105 = vmatprep.subr.bf16.mxu0 0
        %2106 = vmatpush1.bf16.msra.mxu0 0
        %2107 = vmatprep.subr.bf16.mxu0 0
        %2108 = vmatpush1.bf16.msra.mxu0 0
        %2109 = vmatprep.subr.bf16.mxu0 0
        %2110 = vmatpush1.bf16.msra.mxu0 0
        %2111 = vmatprep.subr.bf16.mxu0 0
        %2112 = vmatpush1.bf16.msra.mxu0 0
        %2113 = vmatprep.subr.bf16.mxu0 0
        %2114 = vmatpush1.bf16.msra.mxu0 0
        %2115 = vmatprep.subr.bf16.mxu0 0
        %2116 = vmatpush1.bf16.msra.mxu0 0
        %2117 = vmatprep.subr.bf16.mxu0 0
        %2118 = vmatpush1.bf16.msra.mxu0 0
        %2119 = vmatprep.subr.bf16.mxu0 0
        %2120 = vmatpush1.bf16.msra.mxu0 0
        %2121 = vmatprep.subr.bf16.mxu0 0
        %2122 = vmatpush1.bf16.msra.mxu0 0
        %2123 = vmatprep.subr.bf16.mxu0 0
        %2124 = vmatpush1.bf16.msra.mxu0 0
        %2125 = vmatprep.subr.bf16.mxu0 0
        %2126 = vmatpush1.bf16.msra.mxu0 0
        %2127 = vmatprep.subr.bf16.mxu0 0
        %2128 = vmatpush1.bf16.msra.mxu0 0
        %2129 = vmatprep.subr.bf16.mxu0 0
        %2130 = vmatpush1.bf16.msra.mxu0 0
        %2131 = vmatprep.subr.bf16.mxu0 0
        %2132 = vmatpush1.bf16.msra.mxu0 0
        %2133 = vmatprep.mubr.bf16.mxu0 0
        %2134 = vmatmul.mubr.bf16.gmra.mrb[0].mxu0 %v2099
        %v2135 = vpop.f32.mrb[0].mxu0
        %v2136 = vadd.f32 0.0, %v2135
        %v2137 = vpop.f32.mrb[0].mxu0
        %v2138 = vpop.f32.mrb[0].mxu0
        %v2139 = vadd.f32 0.0, %v2138
        %v2140 = vpop.f32.mrb[0].mxu0
        %2141 = vdwg.mxu0
        %2142 = vxpose.xlu0.b32.start [1/16] %v2079, 128
        %2143 = vxpose.xlu0.b32.cont [2/16] %v2080, 128
        %2144 = vxpose.xlu0.b32.cont [3/16] 0.0, 128
        %2145 = vxpose.xlu0.b32.cont [4/16] 0.0, 128
        %2146 = vxpose.xlu0.b32.cont [5/16] 0.0, 128
        %2147 = vxpose.xlu0.b32.cont [6/16] 0.0, 128
        %2148 = vxpose.xlu0.b32.cont [7/16] 0.0, 128
        %2149 = vxpose.xlu0.b32.cont [8/16] 0.0, 128
        %2150 = vxpose.xlu0.b32.cont [9/16] 0.0, 128
        %2151 = vxpose.xlu0.b32.cont [10/16] 0.0, 128
        %2152 = vxpose.xlu0.b32.cont [11/16] 0.0, 128
        %2153 = vxpose.xlu0.b32.cont [12/16] 0.0, 128
        %2154 = vxpose.xlu0.b32.cont [13/16] 0.0, 128
        %2155 = vxpose.xlu0.b32.cont [14/16] 0.0, 128
        %2156 = vxpose.xlu0.b32.cont [15/16] 0.0, 128
        %2157 = vxpose.xlu0.b32.end [16/16] 0.0, 128
        %v2158 = vpop.trf.xlu0
        %v2159 = vpop.trf.xlu0
        %v2160 = vpop.trf.xlu0
        %v2161 = vpop.trf.xlu0
        %v2162 = vpop.trf.xlu0
        %v2163 = vpop.trf.xlu0
        %v2164 = vpop.trf.xlu0
        %v2165 = vpop.trf.xlu0
        %v2166 = vpop.trf.xlu0
        %v2167 = vpop.trf.xlu0
        %v2168 = vpop.trf.xlu0
        %v2169 = vpop.trf.xlu0
        %v2170 = vpop.trf.xlu0
        %v2171 = vpop.trf.xlu0
        %v2172 = vpop.trf.xlu0
        %v2173 = vpop.trf.xlu0
        %v2175 = vsel %vm777, %v2158, 0
        %v2178 = vsel %vm777, %v2159, 0
        %2180 = vmatprep.subr.mxu0 0.0
        %2181 = vmatpush1.msra.mxu0 1.0
        %2182 = vmatprep.subr.mxu0 0.0
        %2183 = vmatpush1.msra.mxu0 1.0
        %2184 = vmatprep.subr.mxu0 0.0
        %2185 = vmatpush1.msra.mxu0 0.0
        %2186 = vmatprep.subr.mxu0 0.0
        %2187 = vmatpush1.msra.mxu0 0.0
        %2188 = vmatprep.subr.mxu0 0.0
        %2189 = vmatpush1.msra.mxu0 0.0
        %2190 = vmatprep.subr.mxu0 0.0
        %2191 = vmatpush1.msra.mxu0 0.0
        %2192 = vmatprep.subr.mxu0 0.0
        %2193 = vmatpush1.msra.mxu0 0.0
        %2194 = vmatprep.subr.mxu0 0.0
        %2195 = vmatpush1.msra.mxu0 0.0
        %2196 = vmatprep.subr.mxu0 0.0
        %2197 = vmatpush1.msra.mxu0 0.0
        %2198 = vmatprep.subr.mxu0 0.0
        %2199 = vmatpush1.msra.mxu0 0.0
        %2200 = vmatprep.subr.mxu0 0.0
        %2201 = vmatpush1.msra.mxu0 0.0
        %2202 = vmatprep.subr.mxu0 0.0
        %2203 = vmatpush1.msra.mxu0 0.0
        %2204 = vmatprep.subr.mxu0 0.0
        %2205 = vmatpush1.msra.mxu0 0.0
        %2206 = vmatprep.subr.mxu0 0.0
        %2207 = vmatpush1.msra.mxu0 0.0
        %2208 = vmatprep.subr.mxu0 0.0
        %2209 = vmatpush1.msra.mxu0 0.0
        %2210 = vmatprep.subr.mxu0 0.0
        %2211 = vmatpush1.msra.mxu0 0.0
        %2212 = vmatprep.subr.mxu0 0.0
        %2213 = vmatpush1.msra.mxu0 0.0
        %2214 = vmatprep.subr.mxu0 0.0
        %2215 = vmatpush1.msra.mxu0 0.0
        %2216 = vmatprep.subr.mxu0 0.0
        %2217 = vmatpush1.msra.mxu0 0.0
        %2218 = vmatprep.subr.mxu0 0.0
        %2219 = vmatpush1.msra.mxu0 0.0
        %2220 = vmatprep.subr.mxu0 0.0
        %2221 = vmatpush1.msra.mxu0 0.0
        %2222 = vmatprep.subr.mxu0 0.0
        %2223 = vmatpush1.msra.mxu0 0.0
        %2224 = vmatprep.subr.mxu0 0.0
        %2225 = vmatpush1.msra.mxu0 0.0
        %2226 = vmatprep.subr.mxu0 0.0
        %2227 = vmatpush1.msra.mxu0 0.0
        %2228 = vmatprep.subr.mxu0 0.0
        %2229 = vmatpush1.msra.mxu0 0.0
        %2230 = vmatprep.subr.mxu0 0.0
        %2231 = vmatpush1.msra.mxu0 0.0
        %2232 = vmatprep.subr.mxu0 0.0
        %2233 = vmatpush1.msra.mxu0 0.0
        %2234 = vmatprep.subr.mxu0 0.0
        %2235 = vmatpush1.msra.mxu0 0.0
        %2236 = vmatprep.subr.mxu0 0.0
        %2237 = vmatpush1.msra.mxu0 0.0
        %2238 = vmatprep.subr.mxu0 0.0
        %2239 = vmatpush1.msra.mxu0 0.0
        %2240 = vmatprep.subr.mxu0 0.0
        %2241 = vmatpush1.msra.mxu0 0.0
        %2242 = vmatprep.subr.mxu0 0.0
        %2243 = vmatpush1.msra.mxu0 0.0
        %2244 = vmatprep.mubr.f32.mxu0 0.0
        %2245 = vmatmul.mubr.f32.gmra.mrb[0].mxu0 %v2175
        %v2246 = vpop.f32.mrb[0].mxu0
        %v2247 = vadd.f32 0.0, %v2246
        %v2248 = vpop.f32.mrb[0].mxu0
        %2249 = vmatprep.mubr.f32.mxu0 0.0
        %2250 = vmatmul.mubr.f32.gmra.mrb[0].mxu0 %v2178
        %v2251 = vpop.f32.mrb[0].mxu0
        %v2252 = vadd.f32 0.0, %v2251
        %v2253 = vpop.f32.mrb[0].mxu0
        %2254 = vdwg.mxu0
        %v2255 = vsel %vm974, %v2247, -inf
        %v2256 = vsel %vm974, %v2252, -inf
        %v2257 = vmax.f32 %v2255, %v2256
        %v2258 = vrot.slane %v2257, 4
        %v2259 = vmax.f32 %v2257, %v2258
        %v2260 = vrot.slane %v2259, 2
        %v2261 = vmax.f32 %v2259, %v2260
        %v2262 = vrot.slane %v2261, 1
        %v2263 = vmax.f32 %v2261, %v2262
        %v2264 = vsub.f32 %v2247, %v2263
        %v2265 = vsub.f32 %v2252, %v2263
        %v2266 = vmul.f32 %v2264, 1.442695
        %v2267 = vpow.pop %v2266
        %v2268 = vmul.f32 %v2265, 1.442695
        %v2269 = vpow.pop %v2268
        %v2270 = vsel %vm974, %v2267, 0.0
        %v2271 = vsel %vm974, %v2269, 0.0
        %v2272 = vadd.f32 %v2270, %v2271
        %v2273 = vrot.slane %v2272, 4
        %v2274 = vadd.f32 %v2272, %v2273
        %v2275 = vrot.slane %v2274, 2
        %v2276 = vadd.f32 %v2274, %v2275
        %v2277 = vrot.slane %v2276, 1
        %v2278 = vadd.f32 %v2276, %v2277
        %v2279 = vrcp.pop %v2278
        %v2280 = vmul.f32 %v2267, %v2279
        %v2281 = vmul.f32 %v2269, %v2279
        %2282 = vst.msk [vmem:[#allocation2] sm:$0xff] %vm541, %v2136
        %2283 = vst.msk [vmem:[#allocation2 + $0x8] sm:$0xff] %vm541, %v2139
        %2285 = vset.pattern.permute.xlu0 0
        %2286 = vperm.xlu0 %2285, %v2280
        %v2287 = vpop.permute.xlu0 %2286
        %2290 = vset.pattern.permute.xlu0 0
        %2291 = vperm.xlu0 %2290, %v2281
        %v2292 = vpop.permute.xlu0 %2291
        %v2294 = vmul.f32 %v2287, %v1806
        %v2295 = vmul.f32 %v2292, %v1807
        %v2296 = vadd.f32 %v1806, %v2294
        %v2297 = vadd.f32 %v1807, %v2295
        %2298 = vst.msk [vmem:[#allocation3] sm:$0xff] %vm541, %v2296
        %2299 = vst.msk [vmem:[#allocation3 + $0x8] sm:$0xff] %vm541, %v2297
        %v2301 = vsel %vm727, %v2007, 0
        %v2304 = vsel %vm727, %v2005, 0
        %2306 = vmatprep.subr.bf16.mxu0 0
        %2307 = vmatpush1.bf16.xpose.msra.mxu0 %v2304
        %2308 = vmatprep.subr.bf16.mxu0 0
        %2309 = vmatpush1.bf16.xpose.msra.mxu0 0
        %2310 = vmatprep.subr.bf16.mxu0 0
        %2311 = vmatpush1.bf16.xpose.msra.mxu0 0
        %2312 = vmatprep.subr.bf16.mxu0 0
        %2313 = vmatpush1.bf16.xpose.msra.mxu0 0
        %2314 = vmatprep.subr.bf16.mxu0 0
        %2315 = vmatpush1.bf16.xpose.msra.mxu0 0
        %2316 = vmatprep.subr.bf16.mxu0 0
        %2317 = vmatpush1.bf16.xpose.msra.mxu0 0
        %2318 = vmatprep.subr.bf16.mxu0 0
        %2319 = vmatpush1.bf16.xpose.msra.mxu0 0
        %2320 = vmatprep.subr.bf16.mxu0 0
        %2321 = vmatpush1.bf16.xpose.msra.mxu0 0
        %2322 = vmatprep.subr.bf16.mxu0 0
        %2323 = vmatpush1.bf16.xpose.msra.mxu0 0
        %2324 = vmatprep.subr.bf16.mxu0 0
        %2325 = vmatpush1.bf16.xpose.msra.mxu0 0
        %2326 = vmatprep.subr.bf16.mxu0 0
        %2327 = vmatpush1.bf16.xpose.msra.mxu0 0
        %2328 = vmatprep.subr.bf16.mxu0 0
        %2329 = vmatpush1.bf16.xpose.msra.mxu0 0
        %2330 = vmatprep.subr.bf16.mxu0 0
        %2331 = vmatpush1.bf16.xpose.msra.mxu0 0
        %2332 = vmatprep.subr.bf16.mxu0 0
        %2333 = vmatpush1.bf16.xpose.msra.mxu0 0
        %2334 = vmatprep.subr.bf16.mxu0 0
        %2335 = vmatpush1.bf16.xpose.msra.mxu0 0
        %2336 = vmatprep.subr.bf16.mxu0 0
        %2337 = vmatpush1.bf16.xpose.msra.mxu0 0
        %2338 = vmatprep.mubr.bf16.mxu0 0
        %2339 = vmatmul.mubr.bf16.gmra.mrb[0].mxu0 %v2301
        %v2340 = vpop.f32.mrb[0].mxu0
        %v2341 = vadd.f32 0.0, %v2340
        %v2342 = vpop.f32.mrb[0].mxu0
        %v2343 = vpop.f32.mrb[0].mxu0
        %v2344 = vadd.f32 0.0, %v2343
        %v2345 = vpop.f32.mrb[0].mxu0
        %2346 = vdwg.mxu0
        %v2347 = vsel %vm475, -1e+30, %v2341
        %v2348 = vsel %vm476, -1e+30, %v2344
        %v2349 = vsel %vm777, %v2347, -inf
        %2350 = vmax.xlane.f32.xlu0 %v2349
        %v2351 = vpop.xlane.xlu0 %2350
        %v2352 = vsel %vm777, %v2348, -inf
        %2353 = vmax.xlane.f32.xlu0 %v2352
        %v2354 = vpop.xlane.xlu0 %2353
        %v2355 = vsub.f32 %v2347, %v2351
        %v2356 = vsub.f32 %v2348, %v2354
        %v2357 = vmul.f32 %v2355, 1.442695
        %v2358 = vpow.pop %v2357
        %v2359 = vmul.f32 %v2356, 1.442695
        %v2360 = vpow.pop %v2359
        %v2361 = vsel %vm777, %v2358, 0.0
        %2362 = vadd.xlane.f32.xlu0 %v2361
        %v2363 = vpop.xlane.xlu0 %2362
        %v2364 = vsel %vm777, %v2360, 0.0
        %2365 = vadd.xlane.f32.xlu0 %v2364
        %v2366 = vpop.xlane.xlu0 %2365
        %v2367 = vrcp.pop %v2363
        %v2368 = vrcp.pop %v2366
        %v2369 = vmul.f32 %v2358, %v2367
        %v2370 = vmul.f32 %v2360, %v2368
        %v2371 = vpack.c.bf16 %v2370, %v2369
        %2372 = vxpose.xlu0.c.b16.start [1/8] %v2371, 128
        %2373 = vxpose.xlu0.c.b16.cont [2/8] 0, 128
        %2374 = vxpose.xlu0.c.b16.cont [3/8] 0, 128
        %2375 = vxpose.xlu0.c.b16.cont [4/8] 0, 128
        %2376 = vxpose.xlu0.c.b16.cont [5/8] 0, 128
        %2377 = vxpose.xlu0.c.b16.cont [6/8] 0, 128
        %2378 = vxpose.xlu0.c.b16.cont [7/8] 0, 128
        %2379 = vxpose.xlu0.c.b16.end [8/8] 0, 128
        %v2380 = vpop.trf.xlu0
        %v2381 = vpop.trf.xlu0
        %v2382 = vpop.trf.xlu0
        %v2383 = vpop.trf.xlu0
        %v2384 = vpop.trf.xlu0
        %v2385 = vpop.trf.xlu0
        %v2386 = vpop.trf.xlu0
        %v2387 = vpop.trf.xlu0
        %v2389 = vsel %vm777, %v2380, 0
        %2391 = vmatprep.subr.bf16.mxu0 0
        %2392 = vmatpush1.bf16.msra.mxu0 %v2009
        %2393 = vmatprep.subr.bf16.mxu0 0
        %2394 = vmatpush1.bf16.msra.mxu0 0
        %2395 = vmatprep.subr.bf16.mxu0 0
        %2396 = vmatpush1.bf16.msra.mxu0 0
        %2397 = vmatprep.subr.bf16.mxu0 0
        %2398 = vmatpush1.bf16.msra.mxu0 0
        %2399 = vmatprep.subr.bf16.mxu0 0
        %2400 = vmatpush1.bf16.msra.mxu0 0
        %2401 = vmatprep.subr.bf16.mxu0 0
        %2402 = vmatpush1.bf16.msra.mxu0 0
        %2403 = vmatprep.subr.bf16.mxu0 0
        %2404 = vmatpush1.bf16.msra.mxu0 0
        %2405 = vmatprep.subr.bf16.mxu0 0
        %2406 = vmatpush1.bf16.msra.mxu0 0
        %2407 = vmatprep.subr.bf16.mxu0 0
        %2408 = vmatpush1.bf16.msra.mxu0 0
        %2409 = vmatprep.subr.bf16.mxu0 0
        %2410 = vmatpush1.bf16.msra.mxu0 0
        %2411 = vmatprep.subr.bf16.mxu0 0
        %2412 = vmatpush1.bf16.msra.mxu0 0
        %2413 = vmatprep.subr.bf16.mxu0 0
        %2414 = vmatpush1.bf16.msra.mxu0 0
        %2415 = vmatprep.subr.bf16.mxu0 0
        %2416 = vmatpush1.bf16.msra.mxu0 0
        %2417 = vmatprep.subr.bf16.mxu0 0
        %2418 = vmatpush1.bf16.msra.mxu0 0
        %2419 = vmatprep.subr.bf16.mxu0 0
        %2420 = vmatpush1.bf16.msra.mxu0 0
        %2421 = vmatprep.subr.bf16.mxu0 0
        %2422 = vmatpush1.bf16.msra.mxu0 0
        %2423 = vmatprep.mubr.bf16.mxu0 0
        %2424 = vmatmul.mubr.bf16.gmra.mrb[0].mxu0 %v2389
        %v2425 = vpop.f32.mrb[0].mxu0
        %v2426 = vadd.f32 0.0, %v2425
        %v2427 = vpop.f32.mrb[0].mxu0
        %v2428 = vpop.f32.mrb[0].mxu0
        %v2429 = vadd.f32 0.0, %v2428
        %v2430 = vpop.f32.mrb[0].mxu0
        %2431 = vdwg.mxu0
        %2432 = vxpose.xlu0.b32.start [1/16] %v2369, 128
        %2433 = vxpose.xlu0.b32.cont [2/16] %v2370, 128
        %2434 = vxpose.xlu0.b32.cont [3/16] 0.0, 128
        %2435 = vxpose.xlu0.b32.cont [4/16] 0.0, 128
        %2436 = vxpose.xlu0.b32.cont [5/16] 0.0, 128
        %2437 = vxpose.xlu0.b32.cont [6/16] 0.0, 128
        %2438 = vxpose.xlu0.b32.cont [7/16] 0.0, 128
        %2439 = vxpose.xlu0.b32.cont [8/16] 0.0, 128
        %2440 = vxpose.xlu0.b32.cont [9/16] 0.0, 128
        %2441 = vxpose.xlu0.b32.cont [10/16] 0.0, 128
        %2442 = vxpose.xlu0.b32.cont [11/16] 0.0, 128
        %2443 = vxpose.xlu0.b32.cont [12/16] 0.0, 128
        %2444 = vxpose.xlu0.b32.cont [13/16] 0.0, 128
        %2445 = vxpose.xlu0.b32.cont [14/16] 0.0, 128
        %2446 = vxpose.xlu0.b32.cont [15/16] 0.0, 128
        %2447 = vxpose.xlu0.b32.end [16/16] 0.0, 128
        %v2448 = vpop.trf.xlu0
        %v2449 = vpop.trf.xlu0
        %v2450 = vpop.trf.xlu0
        %v2451 = vpop.trf.xlu0
        %v2452 = vpop.trf.xlu0
        %v2453 = vpop.trf.xlu0
        %v2454 = vpop.trf.xlu0
        %v2455 = vpop.trf.xlu0
        %v2456 = vpop.trf.xlu0
        %v2457 = vpop.trf.xlu0
        %v2458 = vpop.trf.xlu0
        %v2459 = vpop.trf.xlu0
        %v2460 = vpop.trf.xlu0
        %v2461 = vpop.trf.xlu0
        %v2462 = vpop.trf.xlu0
        %v2463 = vpop.trf.xlu0
        %v2465 = vsel %vm777, %v2448, 0
        %v2468 = vsel %vm777, %v2449, 0
        %2470 = vmatprep.subr.mxu0 0.0
        %2471 = vmatpush1.msra.mxu0 1.0
        %2472 = vmatprep.subr.mxu0 0.0
        %2473 = vmatpush1.msra.mxu0 1.0
        %2474 = vmatprep.subr.mxu0 0.0
        %2475 = vmatpush1.msra.mxu0 0.0
        %2476 = vmatprep.subr.mxu0 0.0
        %2477 = vmatpush1.msra.mxu0 0.0
        %2478 = vmatprep.subr.mxu0 0.0
        %2479 = vmatpush1.msra.mxu0 0.0
        %2480 = vmatprep.subr.mxu0 0.0
        %2481 = vmatpush1.msra.mxu0 0.0
        %2482 = vmatprep.subr.mxu0 0.0
        %2483 = vmatpush1.msra.mxu0 0.0
        %2484 = vmatprep.subr.mxu0 0.0
        %2485 = vmatpush1.msra.mxu0 0.0
        %2486 = vmatprep.subr.mxu0 0.0
        %2487 = vmatpush1.msra.mxu0 0.0
        %2488 = vmatprep.subr.mxu0 0.0
        %2489 = vmatpush1.msra.mxu0 0.0
        %2490 = vmatprep.subr.mxu0 0.0
        %2491 = vmatpush1.msra.mxu0 0.0
        %2492 = vmatprep.subr.mxu0 0.0
        %2493 = vmatpush1.msra.mxu0 0.0
        %2494 = vmatprep.subr.mxu0 0.0
        %2495 = vmatpush1.msra.mxu0 0.0
        %2496 = vmatprep.subr.mxu0 0.0
        %2497 = vmatpush1.msra.mxu0 0.0
        %2498 = vmatprep.subr.mxu0 0.0
        %2499 = vmatpush1.msra.mxu0 0.0
        %2500 = vmatprep.subr.mxu0 0.0
        %2501 = vmatpush1.msra.mxu0 0.0
        %2502 = vmatprep.subr.mxu0 0.0
        %2503 = vmatpush1.msra.mxu0 0.0
        %2504 = vmatprep.subr.mxu0 0.0
        %2505 = vmatpush1.msra.mxu0 0.0
        %2506 = vmatprep.subr.mxu0 0.0
        %2507 = vmatpush1.msra.mxu0 0.0
        %2508 = vmatprep.subr.mxu0 0.0
        %2509 = vmatpush1.msra.mxu0 0.0
        %2510 = vmatprep.subr.mxu0 0.0
        %2511 = vmatpush1.msra.mxu0 0.0
        %2512 = vmatprep.subr.mxu0 0.0
        %2513 = vmatpush1.msra.mxu0 0.0
        %2514 = vmatprep.subr.mxu0 0.0
        %2515 = vmatpush1.msra.mxu0 0.0
        %2516 = vmatprep.subr.mxu0 0.0
        %2517 = vmatpush1.msra.mxu0 0.0
        %2518 = vmatprep.subr.mxu0 0.0
        %2519 = vmatpush1.msra.mxu0 0.0
        %2520 = vmatprep.subr.mxu0 0.0
        %2521 = vmatpush1.msra.mxu0 0.0
        %2522 = vmatprep.subr.mxu0 0.0
        %2523 = vmatpush1.msra.mxu0 0.0
        %2524 = vmatprep.subr.mxu0 0.0
        %2525 = vmatpush1.msra.mxu0 0.0
        %2526 = vmatprep.subr.mxu0 0.0
        %2527 = vmatpush1.msra.mxu0 0.0
        %2528 = vmatprep.subr.mxu0 0.0
        %2529 = vmatpush1.msra.mxu0 0.0
        %2530 = vmatprep.subr.mxu0 0.0
        %2531 = vmatpush1.msra.mxu0 0.0
        %2532 = vmatprep.subr.mxu0 0.0
        %2533 = vmatpush1.msra.mxu0 0.0
        %2534 = vmatprep.mubr.f32.mxu0 0.0
        %2535 = vmatmul.mubr.f32.gmra.mrb[0].mxu0 %v2465
        %v2536 = vpop.f32.mrb[0].mxu0
        %v2537 = vadd.f32 0.0, %v2536
        %v2538 = vpop.f32.mrb[0].mxu0
        %2539 = vmatprep.mubr.f32.mxu0 0.0
        %2540 = vmatmul.mubr.f32.gmra.mrb[0].mxu0 %v2468
        %v2541 = vpop.f32.mrb[0].mxu0
        %v2542 = vadd.f32 0.0, %v2541
        %v2543 = vpop.f32.mrb[0].mxu0
        %2544 = vdwg.mxu0
        %v2545 = vsel %vm974, %v2537, -inf
        %v2546 = vsel %vm974, %v2542, -inf
        %v2547 = vmax.f32 %v2545, %v2546
        %v2548 = vrot.slane %v2547, 4
        %v2549 = vmax.f32 %v2547, %v2548
        %v2550 = vrot.slane %v2549, 2
        %v2551 = vmax.f32 %v2549, %v2550
        %v2552 = vrot.slane %v2551, 1
        %v2553 = vmax.f32 %v2551, %v2552
        %v2554 = vsub.f32 %v2537, %v2553
        %v2555 = vsub.f32 %v2542, %v2553
        %v2556 = vmul.f32 %v2554, 1.442695
        %v2557 = vpow.pop %v2556
        %v2558 = vmul.f32 %v2555, 1.442695
        %v2559 = vpow.pop %v2558
        %v2560 = vsel %vm974, %v2557, 0.0
        %v2561 = vsel %vm974, %v2559, 0.0
        %v2562 = vadd.f32 %v2560, %v2561
        %v2563 = vrot.slane %v2562, 4
        %v2564 = vadd.f32 %v2562, %v2563
        %v2565 = vrot.slane %v2564, 2
        %v2566 = vadd.f32 %v2564, %v2565
        %v2567 = vrot.slane %v2566, 1
        %v2568 = vadd.f32 %v2566, %v2567
        %v2569 = vrcp.pop %v2568
        %v2570 = vmul.f32 %v2557, %v2569
        %v2571 = vmul.f32 %v2559, %v2569
        %2572 = vst.msk [vmem:[#allocation2 + $0x10] sm:$0xff] %vm541, %v2426
        %2573 = vst.msk [vmem:[#allocation2 + $0x18] sm:$0xff] %vm541, %v2429
        %2575 = vset.pattern.permute.xlu0 0
        %2576 = vperm.xlu0 %2575, %v2570
        %v2577 = vpop.permute.xlu0 %2576
        %2580 = vset.pattern.permute.xlu0 0
        %2581 = vperm.xlu0 %2580, %v2571
        %v2582 = vpop.permute.xlu0 %2581
        %v2584 = vmul.f32 %v2577, %v1808
        %v2585 = vmul.f32 %v2582, %v1809
        %v2586 = vadd.f32 %v1808, %v2584
        %v2587 = vadd.f32 %v1809, %v2585
        %2588 = vst.msk [vmem:[#allocation3 + $0x10] sm:$0xff] %vm541, %v2586
        %2589 = vst.msk [vmem:[#allocation3 + $0x18] sm:$0xff] %vm541, %v2587
        %v2590 = vld [vmem:[#allocation2] sm:$0xff]
        %v2591 = vld [vmem:[#allocation2 + $0x8] sm:$0xff]
        %v2592 = vld [vmem:[#allocation2 + $0x10] sm:$0xff]
        %v2593 = vld [vmem:[#allocation2 + $0x18] sm:$0xff]
        %v2594 = vpack.c.bf16 %v2591, %v2590
        %v2595 = vpack.c.bf16 %v2593, %v2592
        %s2596 = scalar_lea.vmem [#allocation16], 24
        %v2597 = vld [vmem:[%s2596] sm:$0xf]
        %s2598 = scalar_lea.vmem [#allocation18], 2
        %v2599 = vld [vmem:[%s2598] sm:$0x1]
        %v2601 = vlaneseq
        %v2602 = vshrl.u32 %v2601, 7
        %v2603 = vsub.s32 0, %v2602
        %v2604 = vrot.slane %v2599, %v2603
        %v2607 = vsel %vm541, %v2594, 0
        %v2610 = vsel %vm541, %v2595, 0
        %v2613 = vsel %vm548, %v2597, 0
        %2615 = vmatprep.subr.bf16.mxu0 0
        %2616 = vmatpush1.bf16.msra.mxu0 %v2613
        %2617 = vmatprep.subr.bf16.mxu0 0
        %2618 = vmatpush1.bf16.msra.mxu0 0
        %2619 = vmatprep.subr.bf16.mxu0 0
        %2620 = vmatpush1.bf16.msra.mxu0 0
        %2621 = vmatprep.subr.bf16.mxu0 0
        %2622 = vmatpush1.bf16.msra.mxu0 0
        %2623 = vmatprep.subr.bf16.mxu0 0
        %2624 = vmatpush1.bf16.msra.mxu0 0
        %2625 = vmatprep.subr.bf16.mxu0 0
        %2626 = vmatpush1.bf16.msra.mxu0 0
        %2627 = vmatprep.subr.bf16.mxu0 0
        %2628 = vmatpush1.bf16.msra.mxu0 0
        %2629 = vmatprep.subr.bf16.mxu0 0
        %2630 = vmatpush1.bf16.msra.mxu0 0
        %2631 = vmatprep.subr.bf16.mxu0 0
        %2632 = vmatpush1.bf16.msra.mxu0 0
        %2633 = vmatprep.subr.bf16.mxu0 0
        %2634 = vmatpush1.bf16.msra.mxu0 0
        %2635 = vmatprep.subr.bf16.mxu0 0
        %2636 = vmatpush1.bf16.msra.mxu0 0
        %2637 = vmatprep.subr.bf16.mxu0 0
        %2638 = vmatpush1.bf16.msra.mxu0 0
        %2639 = vmatprep.subr.bf16.mxu0 0
        %2640 = vmatpush1.bf16.msra.mxu0 0
        %2641 = vmatprep.subr.bf16.mxu0 0
        %2642 = vmatpush1.bf16.msra.mxu0 0
        %2643 = vmatprep.subr.bf16.mxu0 0
        %2644 = vmatpush1.bf16.msra.mxu0 0
        %2645 = vmatprep.subr.bf16.mxu0 0
        %2646 = vmatpush1.bf16.msra.mxu0 0
        %2647 = vmatprep.mubr.bf16.mxu0 0
        %2648 = vmatmul.mubr.bf16.gmra.mrb[0].mxu0 %v2607
        %v2649 = vpop.f32.mrb[0].mxu0
        %v2650 = vadd.f32 %v2604, %v2649
        %v2651 = vpop.f32.mrb[0].mxu0
        %v2652 = vpop.f32.mrb[0].mxu0
        %v2653 = vadd.f32 %v2604, %v2652
        %v2654 = vpop.f32.mrb[0].mxu0
        %2655 = vmatprep.mubr.bf16.mxu0 0
        %2656 = vmatmul.mubr.bf16.gmra.mrb[0].mxu0 %v2610
        %v2657 = vpop.f32.mrb[0].mxu0
        %v2658 = vadd.f32 %v2604, %v2657
        %v2659 = vpop.f32.mrb[0].mxu0
        %v2660 = vpop.f32.mrb[0].mxu0
        %v2661 = vadd.f32 %v2604, %v2660
        %v2662 = vpop.f32.mrb[0].mxu0
        %2663 = vdwg.mxu0
        %v2664 = vrot.slane %v2590, 6
        %v2665 = vrot.slane %v2591, 6
        %v2666 = vrot.slane %v2592, 6
        %v2667 = vrot.slane %v2593, 6
        %v2668 = vsel %vm1481, %v2666, %v2667
        %v2669 = vsel %vm1481, %v2665, %v2666
        %v2670 = vsel %vm1481, %v2664, %v2665
        %v2671 = vsel %vm1481, %v2667, %v2664
        %v2672 = vsel %vm1490, %v2671, 0.0
        %v2673 = vsel %vm1491, %v2670, 0.0
        %v2674 = vsel %vm1492, %v2669, 0.0
        %v2675 = vsel %vm1493, %v2668, 0.0
        %v2676 = vpack.c.bf16 %v2673, %v2672
        %v2677 = vpack.c.bf16 %v2675, %v2674
        %s2678 = scalar_lea.vmem [#allocation16], 28
        %v2679 = vld [vmem:[%s2678] sm:$0xf]
        %v2681 = vsel %vm541, %v2676, 0
        %v2684 = vsel %vm541, %v2677, 0
        %v2687 = vsel %vm548, %v2679, 0
        %2689 = vmatprep.subr.bf16.mxu0 0
        %2690 = vmatpush1.bf16.msra.mxu0 %v2687
        %2691 = vmatprep.subr.bf16.mxu0 0
        %2692 = vmatpush1.bf16.msra.mxu0 0
        %2693 = vmatprep.subr.bf16.mxu0 0
        %2694 = vmatpush1.bf16.msra.mxu0 0
        %2695 = vmatprep.subr.bf16.mxu0 0
        %2696 = vmatpush1.bf16.msra.mxu0 0
        %2697 = vmatprep.subr.bf16.mxu0 0
        %2698 = vmatpush1.bf16.msra.mxu0 0
        %2699 = vmatprep.subr.bf16.mxu0 0
        %2700 = vmatpush1.bf16.msra.mxu0 0
        %2701 = vmatprep.subr.bf16.mxu0 0
        %2702 = vmatpush1.bf16.msra.mxu0 0
        %2703 = vmatprep.subr.bf16.mxu0 0
        %2704 = vmatpush1.bf16.msra.mxu0 0
        %2705 = vmatprep.subr.bf16.mxu0 0
        %2706 = vmatpush1.bf16.msra.mxu0 0
        %2707 = vmatprep.subr.bf16.mxu0 0
        %2708 = vmatpush1.bf16.msra.mxu0 0
        %2709 = vmatprep.subr.bf16.mxu0 0
        %2710 = vmatpush1.bf16.msra.mxu0 0
        %2711 = vmatprep.subr.bf16.mxu0 0
        %2712 = vmatpush1.bf16.msra.mxu0 0
        %2713 = vmatprep.subr.bf16.mxu0 0
        %2714 = vmatpush1.bf16.msra.mxu0 0
        %2715 = vmatprep.subr.bf16.mxu0 0
        %2716 = vmatpush1.bf16.msra.mxu0 0
        %2717 = vmatprep.subr.bf16.mxu0 0
        %2718 = vmatpush1.bf16.msra.mxu0 0
        %2719 = vmatprep.subr.bf16.mxu0 0
        %2720 = vmatpush1.bf16.msra.mxu0 0
        %2721 = vmatprep.mubr.bf16.mxu0 0
        %2722 = vmatmul.mubr.bf16.gmra.mrb[0].mxu0 %v2681
        %v2723 = vpop.f32.mrb[0].mxu0
        %v2724 = vadd.f32 0.0, %v2723
        %v2725 = vpop.f32.mrb[0].mxu0
        %v2726 = vpop.f32.mrb[0].mxu0
        %v2727 = vadd.f32 0.0, %v2726
        %v2728 = vpop.f32.mrb[0].mxu0
        %2729 = vmatprep.mubr.bf16.mxu0 0
        %2730 = vmatmul.mubr.bf16.gmra.mrb[0].mxu0 %v2684
        %v2731 = vpop.f32.mrb[0].mxu0
        %v2732 = vadd.f32 0.0, %v2731
        %v2733 = vpop.f32.mrb[0].mxu0
        %v2734 = vpop.f32.mrb[0].mxu0
        %v2735 = vadd.f32 0.0, %v2734
        %v2736 = vpop.f32.mrb[0].mxu0
        %2737 = vdwg.mxu0
        %v2738 = vadd.f32 %v2650, %v2724
        %v2739 = vadd.f32 %v2653, %v2727
        %v2740 = vadd.f32 %v2658, %v2732
        %v2741 = vadd.f32 %v2661, %v2735
        %vm2742 = vcmp.ge.s32.totalorder %v523, 4
        %vm2743 = vcmp.ge.s32.totalorder %v524, 4
        %vm2744 = vcmp.ge.s32.totalorder %v525, 4
        %vm2745 = vcmp.ge.s32.totalorder %v526, 4
        %v2746 = vrot.slane %v2590, 4
        %v2747 = vrot.slane %v2591, 4
        %v2748 = vrot.slane %v2592, 4
        %v2749 = vrot.slane %v2593, 4
        %vm2750 = vcmp.lt.s32.totalorder %v471, 4
        %v2751 = vsel %vm2750, %v2748, %v2749
        %v2752 = vsel %vm2750, %v2747, %v2748
        %v2753 = vsel %vm2750, %v2746, %v2747
        %v2754 = vsel %vm2750, %v2749, %v2746
        %v2755 = vsel %vm2742, 1, 0
        %v2756 = vsel %vm2743, 1, 0
        %v2757 = vsel %vm2744, 1, 0
        %v2758 = vsel %vm2745, 1, 0
        %vm2759 = vcmp.eq.s32.totalorder %v2755, 1
        %vm2760 = vcmp.eq.s32.totalorder %v2756, 1
        %vm2761 = vcmp.eq.s32.totalorder %v2757, 1
        %vm2762 = vcmp.eq.s32.totalorder %v2758, 1
        %v2763 = vsel %vm2759, %v2754, 0.0
        %v2764 = vsel %vm2760, %v2753, 0.0
        %v2765 = vsel %vm2761, %v2752, 0.0
        %v2766 = vsel %vm2762, %v2751, 0.0
        %v2767 = vpack.c.bf16 %v2764, %v2763
        %v2768 = vpack.c.bf16 %v2766, %v2765
        %s2769 = scalar_lea.vmem [#allocation16], 32
        %v2770 = vld [vmem:[%s2769] sm:$0xf]
        %v2772 = vsel %vm541, %v2767, 0
        %v2775 = vsel %vm541, %v2768, 0
        %v2778 = vsel %vm548, %v2770, 0
        %2780 = vmatprep.subr.bf16.mxu0 0
        %2781 = vmatpush1.bf16.msra.mxu0 %v2778
        %2782 = vmatprep.subr.bf16.mxu0 0
        %2783 = vmatpush1.bf16.msra.mxu0 0
        %2784 = vmatprep.subr.bf16.mxu0 0
        %2785 = vmatpush1.bf16.msra.mxu0 0
        %2786 = vmatprep.subr.bf16.mxu0 0
        %2787 = vmatpush1.bf16.msra.mxu0 0
        %2788 = vmatprep.subr.bf16.mxu0 0
        %2789 = vmatpush1.bf16.msra.mxu0 0
        %2790 = vmatprep.subr.bf16.mxu0 0
        %2791 = vmatpush1.bf16.msra.mxu0 0
        %2792 = vmatprep.subr.bf16.mxu0 0
        %2793 = vmatpush1.bf16.msra.mxu0 0
        %2794 = vmatprep.subr.bf16.mxu0 0
        %2795 = vmatpush1.bf16.msra.mxu0 0
        %2796 = vmatprep.subr.bf16.mxu0 0
        %2797 = vmatpush1.bf16.msra.mxu0 0
        %2798 = vmatprep.subr.bf16.mxu0 0
        %2799 = vmatpush1.bf16.msra.mxu0 0
        %2800 = vmatprep.subr.bf16.mxu0 0
        %2801 = vmatpush1.bf16.msra.mxu0 0
        %2802 = vmatprep.subr.bf16.mxu0 0
        %2803 = vmatpush1.bf16.msra.mxu0 0
        %2804 = vmatprep.subr.bf16.mxu0 0
        %2805 = vmatpush1.bf16.msra.mxu0 0
        %2806 = vmatprep.subr.bf16.mxu0 0
        %2807 = vmatpush1.bf16.msra.mxu0 0
        %2808 = vmatprep.subr.bf16.mxu0 0
        %2809 = vmatpush1.bf16.msra.mxu0 0
        %2810 = vmatprep.subr.bf16.mxu0 0
        %2811 = vmatpush1.bf16.msra.mxu0 0
        %2812 = vmatprep.mubr.bf16.mxu0 0
        %2813 = vmatmul.mubr.bf16.gmra.mrb[0].mxu0 %v2772
        %v2814 = vpop.f32.mrb[0].mxu0
        %v2815 = vadd.f32 0.0, %v2814
        %v2816 = vpop.f32.mrb[0].mxu0
        %v2817 = vpop.f32.mrb[0].mxu0
        %v2818 = vadd.f32 0.0, %v2817
        %v2819 = vpop.f32.mrb[0].mxu0
        %2820 = vmatprep.mubr.bf16.mxu0 0
        %2821 = vmatmul.mubr.bf16.gmra.mrb[0].mxu0 %v2775
        %v2822 = vpop.f32.mrb[0].mxu0
        %v2823 = vadd.f32 0.0, %v2822
        %v2824 = vpop.f32.mrb[0].mxu0
        %v2825 = vpop.f32.mrb[0].mxu0
        %v2826 = vadd.f32 0.0, %v2825
        %v2827 = vpop.f32.mrb[0].mxu0
        %2828 = vdwg.mxu0
        %v2829 = vadd.f32 %v2738, %v2815
        %v2830 = vadd.f32 %v2739, %v2818
        %v2831 = vadd.f32 %v2740, %v2823
        %v2832 = vadd.f32 %v2741, %v2826
        %v2833 = vmax.f32 %v2829, 0.0
        %v2834 = vmax.f32 %v2830, 0.0
        %v2835 = vmax.f32 %v2831, 0.0
        %v2836 = vmax.f32 %v2832, 0.0
        %v2837 = vpack.c.bf16 %v2834, %v2833
        %v2838 = vpack.c.bf16 %v2836, %v2835
        %s2839 = scalar_lea.vmem [#allocation16], 36
        %v2840 = vld [vmem:[%s2839] sm:$0xf]
        %s2841 = scalar_lea.vmem [#allocation18], 3
        %v2842 = vld [vmem:[%s2841] sm:$0x1]
        %v2844 = vlaneseq
        %v2845 = vshrl.u32 %v2844, 7
        %v2846 = vsub.s32 0, %v2845
        %v2847 = vrot.slane %v2842, %v2846
        %v2850 = vsel %vm541, %v2837, 0
        %v2853 = vsel %vm541, %v2838, 0
        %v2856 = vsel %vm548, %v2840, 0
        %2858 = vmatprep.subr.bf16.mxu0 0
        %2859 = vmatpush1.bf16.msra.mxu0 %v2856
        %2860 = vmatprep.subr.bf16.mxu0 0
        %2861 = vmatpush1.bf16.msra.mxu0 0
        %2862 = vmatprep.subr.bf16.mxu0 0
        %2863 = vmatpush1.bf16.msra.mxu0 0
        %2864 = vmatprep.subr.bf16.mxu0 0
        %2865 = vmatpush1.bf16.msra.mxu0 0
        %2866 = vmatprep.subr.bf16.mxu0 0
        %2867 = vmatpush1.bf16.msra.mxu0 0
        %2868 = vmatprep.subr.bf16.mxu0 0
        %2869 = vmatpush1.bf16.msra.mxu0 0
        %2870 = vmatprep.subr.bf16.mxu0 0
        %2871 = vmatpush1.bf16.msra.mxu0 0
        %2872 = vmatprep.subr.bf16.mxu0 0
        %2873 = vmatpush1.bf16.msra.mxu0 0
        %2874 = vmatprep.subr.bf16.mxu0 0
        %2875 = vmatpush1.bf16.msra.mxu0 0
        %2876 = vmatprep.subr.bf16.mxu0 0
        %2877 = vmatpush1.bf16.msra.mxu0 0
        %2878 = vmatprep.subr.bf16.mxu0 0
        %2879 = vmatpush1.bf16.msra.mxu0 0
        %2880 = vmatprep.subr.bf16.mxu0 0
        %2881 = vmatpush1.bf16.msra.mxu0 0
        %2882 = vmatprep.subr.bf16.mxu0 0
        %2883 = vmatpush1.bf16.msra.mxu0 0
        %2884 = vmatprep.subr.bf16.mxu0 0
        %2885 = vmatpush1.bf16.msra.mxu0 0
        %2886 = vmatprep.subr.bf16.mxu0 0
        %2887 = vmatpush1.bf16.msra.mxu0 0
        %2888 = vmatprep.subr.bf16.mxu0 0
        %2889 = vmatpush1.bf16.msra.mxu0 0
        %2890 = vmatprep.mubr.bf16.mxu0 0
        %2891 = vmatmul.mubr.bf16.gmra.mrb[0].mxu0 %v2850
        %v2892 = vpop.f32.mrb[0].mxu0
        %v2893 = vadd.f32 %v2847, %v2892
        %v2894 = vpop.f32.mrb[0].mxu0
        %v2895 = vpop.f32.mrb[0].mxu0
        %v2896 = vadd.f32 %v2847, %v2895
        %v2897 = vpop.f32.mrb[0].mxu0
        %2898 = vmatprep.mubr.bf16.mxu0 0
        %2899 = vmatmul.mubr.bf16.gmra.mrb[0].mxu0 %v2853
        %v2900 = vpop.f32.mrb[0].mxu0
        %v2901 = vadd.f32 %v2847, %v2900
        %v2902 = vpop.f32.mrb[0].mxu0
        %v2903 = vpop.f32.mrb[0].mxu0
        %v2904 = vadd.f32 %v2847, %v2903
        %v2905 = vpop.f32.mrb[0].mxu0
        %2906 = vdwg.mxu0
        %v2907 = vrot.slane %v2833, 6
        %v2908 = vrot.slane %v2834, 6
        %v2909 = vrot.slane %v2835, 6
        %v2910 = vrot.slane %v2836, 6
        %v2911 = vsel %vm1481, %v2909, %v2910
        %v2912 = vsel %vm1481, %v2908, %v2909
        %v2913 = vsel %vm1481, %v2907, %v2908
        %v2914 = vsel %vm1481, %v2910, %v2907
        %v2915 = vsel %vm1490, %v2914, 0.0
        %v2916 = vsel %vm1491, %v2913, 0.0
        %v2917 = vsel %vm1492, %v2912, 0.0
        %v2918 = vsel %vm1493, %v2911, 0.0
        %v2919 = vpack.c.bf16 %v2916, %v2915
        %v2920 = vpack.c.bf16 %v2918, %v2917
        %s2921 = scalar_lea.vmem [#allocation16], 40
        %v2922 = vld [vmem:[%s2921] sm:$0xf]
        %v2924 = vsel %vm541, %v2919, 0
        %v2927 = vsel %vm541, %v2920, 0
        %v2930 = vsel %vm548, %v2922, 0
        %2932 = vmatprep.subr.bf16.mxu0 0
        %2933 = vmatpush1.bf16.msra.mxu0 %v2930
        %2934 = vmatprep.subr.bf16.mxu0 0
        %2935 = vmatpush1.bf16.msra.mxu0 0
        %2936 = vmatprep.subr.bf16.mxu0 0
        %2937 = vmatpush1.bf16.msra.mxu0 0
        %2938 = vmatprep.subr.bf16.mxu0 0
        %2939 = vmatpush1.bf16.msra.mxu0 0
        %2940 = vmatprep.subr.bf16.mxu0 0
        %2941 = vmatpush1.bf16.msra.mxu0 0
        %2942 = vmatprep.subr.bf16.mxu0 0
        %2943 = vmatpush1.bf16.msra.mxu0 0
        %2944 = vmatprep.subr.bf16.mxu0 0
        %2945 = vmatpush1.bf16.msra.mxu0 0
        %2946 = vmatprep.subr.bf16.mxu0 0
        %2947 = vmatpush1.bf16.msra.mxu0 0
        %2948 = vmatprep.subr.bf16.mxu0 0
        %2949 = vmatpush1.bf16.msra.mxu0 0
        %2950 = vmatprep.subr.bf16.mxu0 0
        %2951 = vmatpush1.bf16.msra.mxu0 0
        %2952 = vmatprep.subr.bf16.mxu0 0
        %2953 = vmatpush1.bf16.msra.mxu0 0
        %2954 = vmatprep.subr.bf16.mxu0 0
        %2955 = vmatpush1.bf16.msra.mxu0 0
        %2956 = vmatprep.subr.bf16.mxu0 0
        %2957 = vmatpush1.bf16.msra.mxu0 0
        %2958 = vmatprep.subr.bf16.mxu0 0
        %2959 = vmatpush1.bf16.msra.mxu0 0
        %2960 = vmatprep.subr.bf16.mxu0 0
        %2961 = vmatpush1.bf16.msra.mxu0 0
        %2962 = vmatprep.subr.bf16.mxu0 0
        %2963 = vmatpush1.bf16.msra.mxu0 0
        %2964 = vmatprep.mubr.bf16.mxu0 0
        %2965 = vmatmul.mubr.bf16.gmra.mrb[0].mxu0 %v2924
        %v2966 = vpop.f32.mrb[0].mxu0
        %v2967 = vadd.f32 0.0, %v2966
        %v2968 = vpop.f32.mrb[0].mxu0
        %v2969 = vpop.f32.mrb[0].mxu0
        %v2970 = vadd.f32 0.0, %v2969
        %v2971 = vpop.f32.mrb[0].mxu0
        %2972 = vmatprep.mubr.bf16.mxu0 0
        %2973 = vmatmul.mubr.bf16.gmra.mrb[0].mxu0 %v2927
        %v2974 = vpop.f32.mrb[0].mxu0
        %v2975 = vadd.f32 0.0, %v2974
        %v2976 = vpop.f32.mrb[0].mxu0
        %v2977 = vpop.f32.mrb[0].mxu0
        %v2978 = vadd.f32 0.0, %v2977
        %v2979 = vpop.f32.mrb[0].mxu0
        %2980 = vdwg.mxu0
        %v2981 = vadd.f32 %v2893, %v2967
        %v2982 = vadd.f32 %v2896, %v2970
        %v2983 = vadd.f32 %v2901, %v2975
        %v2984 = vadd.f32 %v2904, %v2978
        %v2985 = vrot.slane %v2833, 4
        %v2986 = vrot.slane %v2834, 4
        %v2987 = vrot.slane %v2835, 4
        %v2988 = vrot.slane %v2836, 4
        %v2989 = vsel %vm2750, %v2987, %v2988
        %v2990 = vsel %vm2750, %v2986, %v2987
        %v2991 = vsel %vm2750, %v2985, %v2986
        %v2992 = vsel %vm2750, %v2988, %v2985
        %v2993 = vsel %vm2759, %v2992, 0.0
        %v2994 = vsel %vm2760, %v2991, 0.0
        %v2995 = vsel %vm2761, %v2990, 0.0
        %v2996 = vsel %vm2762, %v2989, 0.0
        %v2997 = vpack.c.bf16 %v2994, %v2993
        %v2998 = vpack.c.bf16 %v2996, %v2995
        %s2999 = scalar_lea.vmem [#allocation16], 44
        %v3000 = vld [vmem:[%s2999] sm:$0xf]
        %v3002 = vsel %vm541, %v2997, 0
        %v3005 = vsel %vm541, %v2998, 0
        %v3008 = vsel %vm548, %v3000, 0
        %3010 = vmatprep.subr.bf16.mxu0 0
        %3011 = vmatpush1.bf16.msra.mxu0 %v3008
        %3012 = vmatprep.subr.bf16.mxu0 0
        %3013 = vmatpush1.bf16.msra.mxu0 0
        %3014 = vmatprep.subr.bf16.mxu0 0
        %3015 = vmatpush1.bf16.msra.mxu0 0
        %3016 = vmatprep.subr.bf16.mxu0 0
        %3017 = vmatpush1.bf16.msra.mxu0 0
        %3018 = vmatprep.subr.bf16.mxu0 0
        %3019 = vmatpush1.bf16.msra.mxu0 0
        %3020 = vmatprep.subr.bf16.mxu0 0
        %3021 = vmatpush1.bf16.msra.mxu0 0
        %3022 = vmatprep.subr.bf16.mxu0 0
        %3023 = vmatpush1.bf16.msra.mxu0 0
        %3024 = vmatprep.subr.bf16.mxu0 0
        %3025 = vmatpush1.bf16.msra.mxu0 0
        %3026 = vmatprep.subr.bf16.mxu0 0
        %3027 = vmatpush1.bf16.msra.mxu0 0
        %3028 = vmatprep.subr.bf16.mxu0 0
        %3029 = vmatpush1.bf16.msra.mxu0 0
        %3030 = vmatprep.subr.bf16.mxu0 0
        %3031 = vmatpush1.bf16.msra.mxu0 0
        %3032 = vmatprep.subr.bf16.mxu0 0
        %3033 = vmatpush1.bf16.msra.mxu0 0
        %3034 = vmatprep.subr.bf16.mxu0 0
        %3035 = vmatpush1.bf16.msra.mxu0 0
        %3036 = vmatprep.subr.bf16.mxu0 0
        %3037 = vmatpush1.bf16.msra.mxu0 0
        %3038 = vmatprep.subr.bf16.mxu0 0
        %3039 = vmatpush1.bf16.msra.mxu0 0
        %3040 = vmatprep.subr.bf16.mxu0 0
        %3041 = vmatpush1.bf16.msra.mxu0 0
        %3042 = vmatprep.mubr.bf16.mxu0 0
        %3043 = vmatmul.mubr.bf16.gmra.mrb[0].mxu0 %v3002
        %v3044 = vpop.f32.mrb[0].mxu0
        %v3045 = vadd.f32 0.0, %v3044
        %v3046 = vpop.f32.mrb[0].mxu0
        %v3047 = vpop.f32.mrb[0].mxu0
        %v3048 = vadd.f32 0.0, %v3047
        %v3049 = vpop.f32.mrb[0].mxu0
        %3050 = vmatprep.mubr.bf16.mxu0 0
        %3051 = vmatmul.mubr.bf16.gmra.mrb[0].mxu0 %v3005
        %v3052 = vpop.f32.mrb[0].mxu0
        %v3053 = vadd.f32 0.0, %v3052
        %v3054 = vpop.f32.mrb[0].mxu0
        %v3055 = vpop.f32.mrb[0].mxu0
        %v3056 = vadd.f32 0.0, %v3055
        %v3057 = vpop.f32.mrb[0].mxu0
        %3058 = vdwg.mxu0
        %v3059 = vadd.f32 %v2981, %v3045
        %v3060 = vadd.f32 %v2982, %v3048
        %v3061 = vadd.f32 %v2983, %v3053
        %v3062 = vadd.f32 %v2984, %v3056
        %v3063 = vmax.f32 %v3059, 0.0
        %v3064 = vmax.f32 %v3060, 0.0
        %v3065 = vmax.f32 %v3061, 0.0
        %v3066 = vmax.f32 %v3062, 0.0
        %v3067 = vld [vmem:[#allocation3] sm:$0xff]
        %v3068 = vld [vmem:[#allocation3 + $0x8] sm:$0xff]
        %v3069 = vld [vmem:[#allocation3 + $0x10] sm:$0xff]
        %v3070 = vld [vmem:[#allocation3 + $0x18] sm:$0xff]
        %v3071 = vadd.f32 %v3063, %v3067
        %v3072 = vadd.f32 %v3064, %v3068
        %v3073 = vadd.f32 %v3065, %v3069
        %v3074 = vadd.f32 %v3066, %v3070
        %v3075 = vmax.f32 %v3071, 0.0
        %v3076 = vmax.f32 %v3072, 0.0
        %v3077 = vmax.f32 %v3073, 0.0
        %v3078 = vmax.f32 %v3074, 0.0
        %3079 = vst.msk [vmem:[%s466] sm:$0xff] %vm541, %v3075
        %3080 = vst.msk [vmem:[%s466 + $0x8] sm:$0xff] %vm541, %v3076
        %3081 = vst.msk [vmem:[%s466 + $0x10] sm:$0xff] %vm541, %v3077
        %3082 = vst.msk [vmem:[%s466 + $0x18] sm:$0xff] %vm541, %v3078
        %s3083 = sand.u32 %s232, 1
        %s3084 = scalar_lea.sflag [#allocation6], %s3083
        %s3085 = sand.u32 %s232, 1
        %s3086 = smul.addr %s3085, 32
        %s3087 = scalar_lea.vmem [#allocation19], %s3086
        // Predicated region
        $region93: #{tpu_custom_call.1} parent=55 // pred_check
          %p3088 = pneg %p242
        $region94: #{tpu_custom_call.1} parent=55 // pred_check_branch
          %3090 = sbr.rel (%p3088) target = $region96
        $region95: #{tpu_custom_call.1} parent=55 // pred_region
          %s3091 = smul.u32 4, %s30
          %s3093 = ssub.s32 512, 512
          %3094 = vsyncadd %s3084, %s3093
          %s3095 = smul.addr %s3091, 128
          %s3096 = scalar_lea.hbm %s9, %s3095
          %s3097 = sshll.u32 %s3087, 4
          %s3098 = int_to_ptr.vmem [resolvable:$true] %s3097
          %3103 = dma.vmem_to_hbm [thread:$0]  %s3098, 512, %s3096, %s3084, 128, 128, 8
        $region96: #{tpu_custom_call.1} parent=55 // pred_fallthru
          _
      $region56: #{tpu_custom_call.1} parent=5 // pred_fallthru
        _
      %p3104 = scmp.le.s32.totalorder 2, %s25
      // Predicated region
      $region97: #{tpu_custom_call.1} parent=5 // pred_check
        %p3105 = pneg %p3104
      $region98: #{tpu_custom_call.1} parent=5 // pred_check_branch
        %3107 = sbr.rel (%p3105) target = $region100
      $region99: #{tpu_custom_call.1} parent=5 // pred_region
        %s3108 = ssub.s32 %s25, 2
        // Predicated region
        $region101: #{tpu_custom_call.1} parent=99 // pred_check
          %p3109 = pneg %p248
        $region102: #{tpu_custom_call.1} parent=99 // pred_check_branch
          %3111 = sbr.rel (%p3109) target = $region104
        $region103: #{tpu_custom_call.1} parent=99 // pred_region
          %s3112 = sand.u32 %s233, 1
          %s3113 = scalar_lea.sflag [#allocation6], %s3112
          %s3114 = sand.u32 %s233, 1
          %s3115 = smul.addr %s3114, 32
          %s3116 = scalar_lea.vmem [#allocation19], %s3115
          %3117 = dma.done %s3113, 512
        $region104: #{tpu_custom_call.1} parent=99 // pred_fallthru
          _
      $region100: #{tpu_custom_call.1} parent=5 // pred_fallthru
        _
    $region6: #{tpu_custom_call.1} parent=1 // loop_footer
      %s29 = sadd.s32 1, %s25
    $region7: #{tpu_custom_call.1} parent=1 // loop_footer_branch
      %24 = sbr.rel target = $region3
    $region8: #{tpu_custom_call.1} parent=1 // loop_exit
      _
    %3118 = vsyncpa [#allocation5], 1
    %s3119 = scalar_lea.sflag [#allocation5], 1
    %3120 = vsyncpa %s3119, 1
    %3121 = vsyncpa [#allocation8], 1
    %3122 = vsyncpa [#allocation11], 1
    %3123 = vsyncpa [#allocation14], 1
    %3124 = vsyncpa [#allocation17], 1
    %3125 = vsyncpa [#allocation6], 1
    %s3126 = scalar_lea.sflag [#allocation6], 1
    %3127 = vsyncpa %s3126, 1

</llo_original>
